<compile_context>
chip_gen: v5e
topology: v5e:2x2
jax: 0.10.0
libtpu: 0.0.40
codegen_flags: <defaults>
</compile_context>

<pallas_src>
import functools
import math

import jax
import jax.numpy as jnp
from jax import lax
from jax.experimental import pallas as pl
from jax.experimental.pallas import tpu as pltpu

# ---- model dims (small, consistent with the module) ----
BATCH = 2
SEQ = 16
EMBED = 128
NUM_HEADS = 4
HEAD_DIM = EMBED // NUM_HEADS
INTER = 4 * EMBED
LN_EPS = 1e-5


def _layer_norm(v, gamma, beta):
    mu = jnp.mean(v, axis=-1, keepdims=True)
    var = jnp.mean((v - mu) ** 2, axis=-1, keepdims=True)
    return (v - mu) * lax.rsqrt(var + LN_EPS) * gamma + beta


def _gelu_exact(v):
    # exact (erf) GELU, matching torch's ACT2FN['gelu']
    return 0.5 * v * (1.0 + lax.erf(v * (1.0 / math.sqrt(2.0))))


def transformer_block_kernel(
    seq_len,
    x_ref,
    wqkv_ref, bqkv_ref,
    wo_ref, bo_ref,
    g_ref, be_ref,
    w1_ref, b1_ref,
    w2_ref, b2_ref,
    o_ref,
):
    M, E = x_ref.shape                     # M = (#batch elems this step) * T
    T = seq_len
    bb = M // T
    scale = 1.0 / math.sqrt(HEAD_DIM)

    # Residual / LN / softmax path stays f32; matmul operands go through bf16.
    x = x_ref[...].astype(jnp.float32)     # (M, E)

    # ---- fused QKV projection: one (M, E) @ (E, 3E) MXU matmul ----
    qkv = jnp.dot(x.astype(jnp.bfloat16), wqkv_ref[...],
                  preferred_element_type=jnp.float32) + bqkv_ref[...]
    qkv_b16 = qkv.astype(jnp.bfloat16)     # (M, 3E)

    # ---- per-(batch, head) SDPA with per-head out-projection accumulation ----
    attn_rows = []
    for b in range(bb):                    # static unroll (bb <= 2)
        r0, r1 = b * T, (b + 1) * T
        q_b = qkv_b16[r0:r1, 0:E]
        k_b = qkv_b16[r0:r1, E:2 * E]
        v_b = qkv_b16[r0:r1, 2 * E:3 * E]
        acc_b = jnp.zeros((T, E), jnp.float32)
        for h in range(NUM_HEADS):         # static unroll
            c0, c1 = h * HEAD_DIM, (h + 1) * HEAD_DIM
            qh = q_b[:, c0:c1]             # (T, Dh) bf16
            kh = k_b[:, c0:c1]
            vh = v_b[:, c0:c1]
            # contract the last dims directly: no explicit kh.T / XLU transpose
            s = lax.dot_general(
                qh, kh, (((1,), (1,)), ((), ())),
                preferred_element_type=jnp.float32) * scale      # (T, T)
            s = s - jnp.max(s, axis=-1, keepdims=True)
            p = jnp.exp(s)
            p = p * pl.reciprocal(jnp.sum(p, axis=-1, keepdims=True),
                                  approx=True)
            hv = jnp.dot(p.astype(jnp.bfloat16), vh,
                         preferred_element_type=jnp.float32)     # (T, Dh)
            # accumulate this head through its 32-row slice of W_o
            # (replaces concatenate(heads) + one big matmul)
            acc_b = acc_b + jnp.dot(hv.astype(jnp.bfloat16),
                                    wo_ref[c0:c1, :],
                                    preferred_element_type=jnp.float32)
        attn_rows.append(acc_b)
    attn = attn_rows[0] if bb == 1 else jnp.concatenate(attn_rows, axis=0)
    attn = attn + bo_ref[...]              # (M, E) f32

    gamma = g_ref[...]
    beta = be_ref[...]

    # ---- residual + first layer norm ----
    x1 = _layer_norm(attn + x, gamma, beta)

    # ---- feed forward: Linear(E,4E) -> exact GELU -> Linear(4E,E) ----
    h1 = jnp.dot(x1.astype(jnp.bfloat16), w1_ref[...],
                 preferred_element_type=jnp.float32) + b1_ref[...]
    h1 = _gelu_exact(h1)
    h2 = jnp.dot(h1.astype(jnp.bfloat16), w2_ref[...],
                 preferred_element_type=jnp.float32) + b2_ref[...]

    # ---- residual + second layer norm (same LN params, as in the module) ----
    out = _layer_norm(x1 + h2, gamma, beta)
    o_ref[...] = out.astype(o_ref.dtype)


def _num_batches_per_step(batch):
    """v7x has 2 TensorCores/chip -> keep one batch element per grid step so
    dimension_semantics=('parallel',) spreads B over the cores.  v5e/v6e have a
    single TC, so a grid over B is just a serial loop: fold the whole batch into
    one step (bigger MXU M-occupancy, weights/per-step overhead paid once)."""
    try:
        kind = jax.devices()[0].device_kind.lower()
    except Exception:
        kind = ""
    two_cores = ("v7" in kind) or ("tpu7" in kind)
    return 1 if (two_cores and batch > 1) else batch


def transformer_block(x, params):
    """x: (B, T, E) float32.  params: dict of pre-transposed f32 weights."""
    B, T, E = x.shape
    assert E == EMBED

    # Fuse Q/K/V into a single (E, 3E) projection; pre-cast matmul weights to
    # bf16 (biases / LN params stay f32 -- they are added post-accumulation).
    wqkv = jnp.concatenate(
        [params["wq"], params["wk"], params["wv"]], axis=1).astype(jnp.bfloat16)
    bqkv = jnp.concatenate([params["bq"], params["bk"], params["bv"]], axis=1)
    wo = params["wo"].astype(jnp.bfloat16)
    w1 = params["w1"].astype(jnp.bfloat16)
    w2 = params["w2"].astype(jnp.bfloat16)

    bb = _num_batches_per_step(B)
    grid = (B // bb,)
    rows = bb * T                           # rows handled per grid step

    # Flatten (B, T, E) -> (B*T, E): every kernel matmul is plain 2-D with E=128
    # on the lane axis (lane-dense output, no in-kernel reshapes needed).
    x2 = x.reshape(B * T, E)

    def const_spec(shape):
        # Constant index_map -> Pallas keeps the same VMEM block resident across
        # grid steps (weights DMA'd once, no double-buffer churn).
        return pl.BlockSpec(shape, lambda i: tuple(0 for _ in shape))

    in_specs = [
        pl.BlockSpec((rows, E), lambda i: (i, 0)),          # x
        const_spec((E, 3 * E)), const_spec((1, 3 * E)),     # fused qkv proj
        const_spec((E, E)), const_spec((1, E)),             # out_proj
        const_spec((1, E)), const_spec((1, E)),             # layer_norm gamma/beta
        const_spec((E, INTER)), const_spec((1, INTER)),     # intermediate_dense
        const_spec((INTER, E)), const_spec((1, E)),         # output_dense
    ]

    out = pl.pallas_call(
        functools.partial(transformer_block_kernel, T),
        out_shape=jax.ShapeDtypeStruct((B * T, E), x.dtype),
        grid_spec=pltpu.PrefetchScalarGridSpec(
            num_scalar_prefetch=0,
            grid=grid,
            in_specs=in_specs,
            out_specs=pl.BlockSpec((rows, E), lambda i: (i, 0)),
        ),
        compiler_params=pltpu.CompilerParams(
            dimension_semantics=("parallel",),
        ),
    )(
        x2,
        wqkv, bqkv,
        wo, params["bo"],
        params["ln_g"], params["ln_b"],
        w1, params["b1"],
        w2, params["b2"],
    )
    return out.reshape(B, T, E)


def init_params(key):
    """Deterministic synthetic weights. Linear weights stored (in, out), f32."""
    ks = jax.random.split(key, 6)
    s = 0.02

    def lin(k, fan_in, fan_out):
        kw, kb = jax.random.split(k)
        w = jax.random.normal(kw, (fan_in, fan_out), jnp.float32) * s
        b = jax.random.normal(kb, (1, fan_out), jnp.float32) * s
        return w, b

    wq, bq = lin(ks[0], EMBED, EMBED)
    wk, bk = lin(ks[1], EMBED, EMBED)
    wv, bv = lin(ks[2], EMBED, EMBED)
    wo, bo = lin(ks[3], EMBED, EMBED)
    w1, b1 = lin(ks[4], EMBED, INTER)
    w2, b2 = lin(ks[5], INTER, EMBED)
    ln_g = jnp.ones((1, EMBED), jnp.float32)
    ln_b = jnp.zeros((1, EMBED), jnp.float32)
    return dict(
        wq=wq, bq=bq, wk=wk, bk=bk, wv=wv, bv=bv, wo=wo, bo=bo,
        ln_g=ln_g, ln_b=ln_b, w1=w1, b1=b1, w2=w2, b2=b2,
    )


def reference_block(x, p):
    """Pure-JAX f32 reference (matches the PyTorch module in eval mode)."""
    B, T, E = x.shape
    q = x @ p["wq"] + p["bq"]
    k = x @ p["wk"] + p["bk"]
    v = x @ p["wv"] + p["bv"]

    def heads(t):
        return t.reshape(B, T, NUM_HEADS, HEAD_DIM).transpose(0, 2, 1, 3)

    qh, kh, vh = heads(q), heads(k), heads(v)
    s = jnp.einsum("bhtd,bhsd->bhts", qh, kh) / math.sqrt(HEAD_DIM)
    pmat = jax.nn.softmax(s, axis=-1)
    a = jnp.einsum("bhts,bhsd->bhtd", pmat, vh)
    a = a.transpose(0, 2, 1, 3).reshape(B, T, E)
    a = a @ p["wo"] + p["bo"]

    def ln(v_):
        mu = v_.mean(-1, keepdims=True)
        var = ((v_ - mu) ** 2).mean(-1, keepdims=True)
        return (v_ - mu) / jnp.sqrt(var + LN_EPS) * p["ln_g"] + p["ln_b"]

    x1 = ln(a + x)
    h = x1 @ p["w1"] + p["b1"]
    h = 0.5 * h * (1.0 + lax.erf(h / jnp.sqrt(2.0)))
    h = h @ p["w2"] + p["b2"]
    return ln(x1 + h)


if __name__ == "__main__":
    key = jax.random.PRNGKey(0)
    kx, kp = jax.random.split(key)
    x = jax.random.normal(kx, (BATCH, SEQ, EMBED), jnp.float32)
    params = init_params(kp)

    out = transformer_block(x, params)
    out = jax.block_until_ready(out)

    ref = reference_block(x, params)
    assert out.shape == (BATCH, SEQ, EMBED)
    # bf16 matmul operands relax the match vs. the pure-f32 reference;
    # structural bugs would produce errors orders of magnitude larger.
    err = jnp.max(jnp.abs(out - ref))
    assert jnp.allclose(out, ref, atol=3e-2, rtol=3e-2), f"max abs err {err}"
    print("KERNEL_OK")
</pallas_src>

<mosaic_0001>
module attributes {stable_mosaic.version = 11 : i64} {
  func.func @transformer_block_kernel(%arg0: i32, %arg1: memref<32x128xf32, #tpu.memory_space<vmem>>, %arg2: memref<128x384xbf16, #tpu.memory_space<vmem>>, %arg3: memref<1x384xf32, #tpu.memory_space<vmem>>, %arg4: memref<128x128xbf16, #tpu.memory_space<vmem>>, %arg5: memref<1x128xf32, #tpu.memory_space<vmem>>, %arg6: memref<1x128xf32, #tpu.memory_space<vmem>>, %arg7: memref<1x128xf32, #tpu.memory_space<vmem>>, %arg8: memref<128x512xbf16, #tpu.memory_space<vmem>>, %arg9: memref<1x512xf32, #tpu.memory_space<vmem>>, %arg10: memref<512x128xbf16, #tpu.memory_space<vmem>>, %arg11: memref<1x128xf32, #tpu.memory_space<vmem>>, %arg12: memref<32x128xf32, #tpu.memory_space<vmem>>) attributes {dimension_semantics = [#tpu.dimension_semantics<parallel>], iteration_bounds = array<i64: 1>, scalar_prefetch = 0 : i64, scratch_operands = 0 : i64, tpu.core_type = #tpu.core_type<tc>, window_params = [{transform_indices = @transform_0, window_bounds = array<i64: 32, 128>}, {pipeline_mode = #tpu.pipeline_mode<synchronous>, transform_indices = @transform_1, window_bounds = array<i64: 128, 384>}, {pipeline_mode = #tpu.pipeline_mode<synchronous>, transform_indices = @transform_2, window_bounds = array<i64: 1, 384>}, {pipeline_mode = #tpu.pipeline_mode<synchronous>, transform_indices = @transform_3, window_bounds = array<i64: 128, 128>}, {pipeline_mode = #tpu.pipeline_mode<synchronous>, transform_indices = @transform_4, window_bounds = array<i64: 1, 128>}, {pipeline_mode = #tpu.pipeline_mode<synchronous>, transform_indices = @transform_5, window_bounds = array<i64: 1, 128>}, {pipeline_mode = #tpu.pipeline_mode<synchronous>, transform_indices = @transform_6, window_bounds = array<i64: 1, 128>}, {pipeline_mode = #tpu.pipeline_mode<synchronous>, transform_indices = @transform_7, window_bounds = array<i64: 128, 512>}, {pipeline_mode = #tpu.pipeline_mode<synchronous>, transform_indices = @transform_8, window_bounds = array<i64: 1, 512>}, {pipeline_mode = #tpu.pipeline_mode<synchronous>, transform_indices = @transform_9, window_bounds = array<i64: 512, 128>}, {pipeline_mode = #tpu.pipeline_mode<synchronous>, transform_indices = @transform_10, window_bounds = array<i64: 1, 128>}, {transform_indices = @transform_11, window_bounds = array<i64: 32, 128>}]} {
    %c0 = arith.constant 0 : index
    %c0_0 = arith.constant 0 : index
    %0 = vector.load %arg1[%c0, %c0_0] : memref<32x128xf32, #tpu.memory_space<vmem>>, vector<32x128xf32>
    %1 = arith.truncf %0 : vector<32x128xf32> to vector<32x128xbf16>
    %c0_1 = arith.constant 0 : index
    %c0_2 = arith.constant 0 : index
    %2 = vector.load %arg2[%c0_1, %c0_2] : memref<128x384xbf16, #tpu.memory_space<vmem>>, vector<128x384xbf16>
    %cst = arith.constant dense<0.000000e+00> : vector<32x384xf32>
    %3 = tpu.matmul %1, %2, %cst {dimension_numbers = #tpu.dot_dimension_numbers<[1], [0], [0], [1], [0, 0, 1, 1], [], []>} : vector<32x128xbf16>, vector<128x384xbf16>, vector<32x384xf32> -> vector<32x384xf32>
    %c0_3 = arith.constant 0 : index
    %c0_4 = arith.constant 0 : index
    %4 = vector.load %arg3[%c0_3, %c0_4] : memref<1x384xf32, #tpu.memory_space<vmem>>, vector<1x384xf32>
    %5 = vector.broadcast %4 : vector<1x384xf32> to vector<32x384xf32>
    %6 = arith.addf %3, %5 : vector<32x384xf32>
    %7 = arith.truncf %6 : vector<32x384xf32> to vector<32x384xbf16>
    %8 = vector.extract_strided_slice %7 {offsets = [0, 0], sizes = [16, 128], strides = [1, 1]} : vector<32x384xbf16> to vector<16x128xbf16>
    %9 = vector.extract_strided_slice %7 {offsets = [0, 128], sizes = [16, 128], strides = [1, 1]} : vector<32x384xbf16> to vector<16x128xbf16>
    %10 = vector.extract_strided_slice %7 {offsets = [0, 256], sizes = [16, 128], strides = [1, 1]} : vector<32x384xbf16> to vector<16x128xbf16>
    %cst_5 = arith.constant 0.000000e+00 : f32
    %11 = vector.broadcast %cst_5 : f32 to vector<16x128xf32>
    %12 = vector.extract_strided_slice %8 {offsets = [0, 0], sizes = [16, 32], strides = [1, 1]} : vector<16x128xbf16> to vector<16x32xbf16>
    %13 = vector.extract_strided_slice %9 {offsets = [0, 0], sizes = [16, 32], strides = [1, 1]} : vector<16x128xbf16> to vector<16x32xbf16>
    %14 = vector.extract_strided_slice %10 {offsets = [0, 0], sizes = [16, 32], strides = [1, 1]} : vector<16x128xbf16> to vector<16x32xbf16>
    %cst_6 = arith.constant dense<0.000000e+00> : vector<16x16xf32>
    %15 = tpu.matmul %12, %13, %cst_6 {dimension_numbers = #tpu.dot_dimension_numbers<[1], [1], [0], [0], [0, 0, 1, 0], [], []>} : vector<16x32xbf16>, vector<16x32xbf16>, vector<16x16xf32> -> vector<16x16xf32>
    %cst_7 = arith.constant 0.176776692 : f32
    %16 = vector.broadcast %cst_7 : f32 to vector<16x16xf32>
    %17 = arith.mulf %15, %16 : vector<16x16xf32>
    %cst_8 = arith.constant dense<0xFF800000> : vector<16xf32>
    %18 = vector.multi_reduction <maximumf>, %17, %cst_8 [1] : vector<16x16xf32> to vector<16xf32>
    %19 = vector.shape_cast %18 : vector<16xf32> to vector<16x1xf32>
    %20 = vector.broadcast %19 : vector<16x1xf32> to vector<16x16xf32>
    %21 = arith.subf %17, %20 : vector<16x16xf32>
    %22 = math.exp %21 : vector<16x16xf32>
    %cst_9 = arith.constant dense<0.000000e+00> : vector<16xf32>
    %23 = vector.multi_reduction <add>, %22, %cst_9 [1] : vector<16x16xf32> to vector<16xf32>
    %24 = vector.shape_cast %23 : vector<16xf32> to vector<16x1xf32>
    %25 = tpu.reciprocal %24 {approx = true} : vector<16x1xf32> -> vector<16x1xf32>
    %26 = vector.broadcast %25 : vector<16x1xf32> to vector<16x16xf32>
    %27 = arith.mulf %22, %26 : vector<16x16xf32>
    %28 = arith.truncf %27 : vector<16x16xf32> to vector<16x16xbf16>
    %cst_10 = arith.constant dense<0.000000e+00> : vector<16x32xf32>
    %29 = tpu.matmul %28, %14, %cst_10 {dimension_numbers = #tpu.dot_dimension_numbers<[1], [0], [0], [1], [0, 0, 1, 1], [], []>} : vector<16x16xbf16>, vector<16x32xbf16>, vector<16x32xf32> -> vector<16x32xf32>
    %30 = arith.truncf %29 : vector<16x32xf32> to vector<16x32xbf16>
    %c0_11 = arith.constant 0 : index
    %c0_12 = arith.constant 0 : index
    %31 = vector.load %arg4[%c0_11, %c0_12] : memref<128x128xbf16, #tpu.memory_space<vmem>>, vector<32x128xbf16>
    %cst_13 = arith.constant dense<0.000000e+00> : vector<16x128xf32>
    %32 = tpu.matmul %30, %31, %cst_13 {dimension_numbers = #tpu.dot_dimension_numbers<[1], [0], [0], [1], [0, 0, 1, 1], [], []>} : vector<16x32xbf16>, vector<32x128xbf16>, vector<16x128xf32> -> vector<16x128xf32>
    %33 = arith.addf %11, %32 : vector<16x128xf32>
    %34 = vector.extract_strided_slice %8 {offsets = [0, 32], sizes = [16, 32], strides = [1, 1]} : vector<16x128xbf16> to vector<16x32xbf16>
    %35 = vector.extract_strided_slice %9 {offsets = [0, 32], sizes = [16, 32], strides = [1, 1]} : vector<16x128xbf16> to vector<16x32xbf16>
    %36 = vector.extract_strided_slice %10 {offsets = [0, 32], sizes = [16, 32], strides = [1, 1]} : vector<16x128xbf16> to vector<16x32xbf16>
    %cst_14 = arith.constant dense<0.000000e+00> : vector<16x16xf32>
    %37 = tpu.matmul %34, %35, %cst_14 {dimension_numbers = #tpu.dot_dimension_numbers<[1], [1], [0], [0], [0, 0, 1, 0], [], []>} : vector<16x32xbf16>, vector<16x32xbf16>, vector<16x16xf32> -> vector<16x16xf32>
    %cst_15 = arith.constant 0.176776692 : f32
    %38 = vector.broadcast %cst_15 : f32 to vector<16x16xf32>
    %39 = arith.mulf %37, %38 : vector<16x16xf32>
    %cst_16 = arith.constant dense<0xFF800000> : vector<16xf32>
    %40 = vector.multi_reduction <maximumf>, %39, %cst_16 [1] : vector<16x16xf32> to vector<16xf32>
    %41 = vector.shape_cast %40 : vector<16xf32> to vector<16x1xf32>
    %42 = vector.broadcast %41 : vector<16x1xf32> to vector<16x16xf32>
    %43 = arith.subf %39, %42 : vector<16x16xf32>
    %44 = math.exp %43 : vector<16x16xf32>
    %cst_17 = arith.constant dense<0.000000e+00> : vector<16xf32>
    %45 = vector.multi_reduction <add>, %44, %cst_17 [1] : vector<16x16xf32> to vector<16xf32>
    %46 = vector.shape_cast %45 : vector<16xf32> to vector<16x1xf32>
    %47 = tpu.reciprocal %46 {approx = true} : vector<16x1xf32> -> vector<16x1xf32>
    %48 = vector.broadcast %47 : vector<16x1xf32> to vector<16x16xf32>
    %49 = arith.mulf %44, %48 : vector<16x16xf32>
    %50 = arith.truncf %49 : vector<16x16xf32> to vector<16x16xbf16>
    %cst_18 = arith.constant dense<0.000000e+00> : vector<16x32xf32>
    %51 = tpu.matmul %50, %36, %cst_18 {dimension_numbers = #tpu.dot_dimension_numbers<[1], [0], [0], [1], [0, 0, 1, 1], [], []>} : vector<16x16xbf16>, vector<16x32xbf16>, vector<16x32xf32> -> vector<16x32xf32>
    %52 = arith.truncf %51 : vector<16x32xf32> to vector<16x32xbf16>
    %c32 = arith.constant 32 : index
    %c0_19 = arith.constant 0 : index
    %53 = vector.load %arg4[%c32, %c0_19] : memref<128x128xbf16, #tpu.memory_space<vmem>>, vector<32x128xbf16>
    %cst_20 = arith.constant dense<0.000000e+00> : vector<16x128xf32>
    %54 = tpu.matmul %52, %53, %cst_20 {dimension_numbers = #tpu.dot_dimension_numbers<[1], [0], [0], [1], [0, 0, 1, 1], [], []>} : vector<16x32xbf16>, vector<32x128xbf16>, vector<16x128xf32> -> vector<16x128xf32>
    %55 = arith.addf %33, %54 : vector<16x128xf32>
    %56 = vector.extract_strided_slice %8 {offsets = [0, 64], sizes = [16, 32], strides = [1, 1]} : vector<16x128xbf16> to vector<16x32xbf16>
    %57 = vector.extract_strided_slice %9 {offsets = [0, 64], sizes = [16, 32], strides = [1, 1]} : vector<16x128xbf16> to vector<16x32xbf16>
    %58 = vector.extract_strided_slice %10 {offsets = [0, 64], sizes = [16, 32], strides = [1, 1]} : vector<16x128xbf16> to vector<16x32xbf16>
    %cst_21 = arith.constant dense<0.000000e+00> : vector<16x16xf32>
    %59 = tpu.matmul %56, %57, %cst_21 {dimension_numbers = #tpu.dot_dimension_numbers<[1], [1], [0], [0], [0, 0, 1, 0], [], []>} : vector<16x32xbf16>, vector<16x32xbf16>, vector<16x16xf32> -> vector<16x16xf32>
    %cst_22 = arith.constant 0.176776692 : f32
    %60 = vector.broadcast %cst_22 : f32 to vector<16x16xf32>
    %61 = arith.mulf %59, %60 : vector<16x16xf32>
    %cst_23 = arith.constant dense<0xFF800000> : vector<16xf32>
    %62 = vector.multi_reduction <maximumf>, %61, %cst_23 [1] : vector<16x16xf32> to vector<16xf32>
    %63 = vector.shape_cast %62 : vector<16xf32> to vector<16x1xf32>
    %64 = vector.broadcast %63 : vector<16x1xf32> to vector<16x16xf32>
    %65 = arith.subf %61, %64 : vector<16x16xf32>
    %66 = math.exp %65 : vector<16x16xf32>
    %cst_24 = arith.constant dense<0.000000e+00> : vector<16xf32>
    %67 = vector.multi_reduction <add>, %66, %cst_24 [1] : vector<16x16xf32> to vector<16xf32>
    %68 = vector.shape_cast %67 : vector<16xf32> to vector<16x1xf32>
    %69 = tpu.reciprocal %68 {approx = true} : vector<16x1xf32> -> vector<16x1xf32>
    %70 = vector.broadcast %69 : vector<16x1xf32> to vector<16x16xf32>
    %71 = arith.mulf %66, %70 : vector<16x16xf32>
    %72 = arith.truncf %71 : vector<16x16xf32> to vector<16x16xbf16>
    %cst_25 = arith.constant dense<0.000000e+00> : vector<16x32xf32>
    %73 = tpu.matmul %72, %58, %cst_25 {dimension_numbers = #tpu.dot_dimension_numbers<[1], [0], [0], [1], [0, 0, 1, 1], [], []>} : vector<16x16xbf16>, vector<16x32xbf16>, vector<16x32xf32> -> vector<16x32xf32>
    %74 = arith.truncf %73 : vector<16x32xf32> to vector<16x32xbf16>
    %c64 = arith.constant 64 : index
    %c0_26 = arith.constant 0 : index
    %75 = vector.load %arg4[%c64, %c0_26] : memref<128x128xbf16, #tpu.memory_space<vmem>>, vector<32x128xbf16>
    %cst_27 = arith.constant dense<0.000000e+00> : vector<16x128xf32>
    %76 = tpu.matmul %74, %75, %cst_27 {dimension_numbers = #tpu.dot_dimension_numbers<[1], [0], [0], [1], [0, 0, 1, 1], [], []>} : vector<16x32xbf16>, vector<32x128xbf16>, vector<16x128xf32> -> vector<16x128xf32>
    %77 = arith.addf %55, %76 : vector<16x128xf32>
    %78 = vector.extract_strided_slice %8 {offsets = [0, 96], sizes = [16, 32], strides = [1, 1]} : vector<16x128xbf16> to vector<16x32xbf16>
    %79 = vector.extract_strided_slice %9 {offsets = [0, 96], sizes = [16, 32], strides = [1, 1]} : vector<16x128xbf16> to vector<16x32xbf16>
    %80 = vector.extract_strided_slice %10 {offsets = [0, 96], sizes = [16, 32], strides = [1, 1]} : vector<16x128xbf16> to vector<16x32xbf16>
    %cst_28 = arith.constant dense<0.000000e+00> : vector<16x16xf32>
    %81 = tpu.matmul %78, %79, %cst_28 {dimension_numbers = #tpu.dot_dimension_numbers<[1], [1], [0], [0], [0, 0, 1, 0], [], []>} : vector<16x32xbf16>, vector<16x32xbf16>, vector<16x16xf32> -> vector<16x16xf32>
    %cst_29 = arith.constant 0.176776692 : f32
    %82 = vector.broadcast %cst_29 : f32 to vector<16x16xf32>
    %83 = arith.mulf %81, %82 : vector<16x16xf32>
    %cst_30 = arith.constant dense<0xFF800000> : vector<16xf32>
    %84 = vector.multi_reduction <maximumf>, %83, %cst_30 [1] : vector<16x16xf32> to vector<16xf32>
    %85 = vector.shape_cast %84 : vector<16xf32> to vector<16x1xf32>
    %86 = vector.broadcast %85 : vector<16x1xf32> to vector<16x16xf32>
    %87 = arith.subf %83, %86 : vector<16x16xf32>
    %88 = math.exp %87 : vector<16x16xf32>
    %cst_31 = arith.constant dense<0.000000e+00> : vector<16xf32>
    %89 = vector.multi_reduction <add>, %88, %cst_31 [1] : vector<16x16xf32> to vector<16xf32>
    %90 = vector.shape_cast %89 : vector<16xf32> to vector<16x1xf32>
    %91 = tpu.reciprocal %90 {approx = true} : vector<16x1xf32> -> vector<16x1xf32>
    %92 = vector.broadcast %91 : vector<16x1xf32> to vector<16x16xf32>
    %93 = arith.mulf %88, %92 : vector<16x16xf32>
    %94 = arith.truncf %93 : vector<16x16xf32> to vector<16x16xbf16>
    %cst_32 = arith.constant dense<0.000000e+00> : vector<16x32xf32>
    %95 = tpu.matmul %94, %80, %cst_32 {dimension_numbers = #tpu.dot_dimension_numbers<[1], [0], [0], [1], [0, 0, 1, 1], [], []>} : vector<16x16xbf16>, vector<16x32xbf16>, vector<16x32xf32> -> vector<16x32xf32>
    %96 = arith.truncf %95 : vector<16x32xf32> to vector<16x32xbf16>
    %c96 = arith.constant 96 : index
    %c0_33 = arith.constant 0 : index
    %97 = vector.load %arg4[%c96, %c0_33] : memref<128x128xbf16, #tpu.memory_space<vmem>>, vector<32x128xbf16>
    %cst_34 = arith.constant dense<0.000000e+00> : vector<16x128xf32>
    %98 = tpu.matmul %96, %97, %cst_34 {dimension_numbers = #tpu.dot_dimension_numbers<[1], [0], [0], [1], [0, 0, 1, 1], [], []>} : vector<16x32xbf16>, vector<32x128xbf16>, vector<16x128xf32> -> vector<16x128xf32>
    %99 = arith.addf %77, %98 : vector<16x128xf32>
    %100 = vector.extract_strided_slice %7 {offsets = [16, 0], sizes = [16, 128], strides = [1, 1]} : vector<32x384xbf16> to vector<16x128xbf16>
    %101 = vector.extract_strided_slice %7 {offsets = [16, 128], sizes = [16, 128], strides = [1, 1]} : vector<32x384xbf16> to vector<16x128xbf16>
    %102 = vector.extract_strided_slice %7 {offsets = [16, 256], sizes = [16, 128], strides = [1, 1]} : vector<32x384xbf16> to vector<16x128xbf16>
    %cst_35 = arith.constant 0.000000e+00 : f32
    %103 = vector.broadcast %cst_35 : f32 to vector<16x128xf32>
    %104 = vector.extract_strided_slice %100 {offsets = [0, 0], sizes = [16, 32], strides = [1, 1]} : vector<16x128xbf16> to vector<16x32xbf16>
    %105 = vector.extract_strided_slice %101 {offsets = [0, 0], sizes = [16, 32], strides = [1, 1]} : vector<16x128xbf16> to vector<16x32xbf16>
    %106 = vector.extract_strided_slice %102 {offsets = [0, 0], sizes = [16, 32], strides = [1, 1]} : vector<16x128xbf16> to vector<16x32xbf16>
    %cst_36 = arith.constant dense<0.000000e+00> : vector<16x16xf32>
    %107 = tpu.matmul %104, %105, %cst_36 {dimension_numbers = #tpu.dot_dimension_numbers<[1], [1], [0], [0], [0, 0, 1, 0], [], []>} : vector<16x32xbf16>, vector<16x32xbf16>, vector<16x16xf32> -> vector<16x16xf32>
    %cst_37 = arith.constant 0.176776692 : f32
    %108 = vector.broadcast %cst_37 : f32 to vector<16x16xf32>
    %109 = arith.mulf %107, %108 : vector<16x16xf32>
    %cst_38 = arith.constant dense<0xFF800000> : vector<16xf32>
    %110 = vector.multi_reduction <maximumf>, %109, %cst_38 [1] : vector<16x16xf32> to vector<16xf32>
    %111 = vector.shape_cast %110 : vector<16xf32> to vector<16x1xf32>
    %112 = vector.broadcast %111 : vector<16x1xf32> to vector<16x16xf32>
    %113 = arith.subf %109, %112 : vector<16x16xf32>
    %114 = math.exp %113 : vector<16x16xf32>
    %cst_39 = arith.constant dense<0.000000e+00> : vector<16xf32>
    %115 = vector.multi_reduction <add>, %114, %cst_39 [1] : vector<16x16xf32> to vector<16xf32>
    %116 = vector.shape_cast %115 : vector<16xf32> to vector<16x1xf32>
    %117 = tpu.reciprocal %116 {approx = true} : vector<16x1xf32> -> vector<16x1xf32>
    %118 = vector.broadcast %117 : vector<16x1xf32> to vector<16x16xf32>
    %119 = arith.mulf %114, %118 : vector<16x16xf32>
    %120 = arith.truncf %119 : vector<16x16xf32> to vector<16x16xbf16>
    %cst_40 = arith.constant dense<0.000000e+00> : vector<16x32xf32>
    %121 = tpu.matmul %120, %106, %cst_40 {dimension_numbers = #tpu.dot_dimension_numbers<[1], [0], [0], [1], [0, 0, 1, 1], [], []>} : vector<16x16xbf16>, vector<16x32xbf16>, vector<16x32xf32> -> vector<16x32xf32>
    %122 = arith.truncf %121 : vector<16x32xf32> to vector<16x32xbf16>
    %c0_41 = arith.constant 0 : index
    %c0_42 = arith.constant 0 : index
    %123 = vector.load %arg4[%c0_41, %c0_42] : memref<128x128xbf16, #tpu.memory_space<vmem>>, vector<32x128xbf16>
    %cst_43 = arith.constant dense<0.000000e+00> : vector<16x128xf32>
    %124 = tpu.matmul %122, %123, %cst_43 {dimension_numbers = #tpu.dot_dimension_numbers<[1], [0], [0], [1], [0, 0, 1, 1], [], []>} : vector<16x32xbf16>, vector<32x128xbf16>, vector<16x128xf32> -> vector<16x128xf32>
    %125 = arith.addf %103, %124 : vector<16x128xf32>
    %126 = vector.extract_strided_slice %100 {offsets = [0, 32], sizes = [16, 32], strides = [1, 1]} : vector<16x128xbf16> to vector<16x32xbf16>
    %127 = vector.extract_strided_slice %101 {offsets = [0, 32], sizes = [16, 32], strides = [1, 1]} : vector<16x128xbf16> to vector<16x32xbf16>
    %128 = vector.extract_strided_slice %102 {offsets = [0, 32], sizes = [16, 32], strides = [1, 1]} : vector<16x128xbf16> to vector<16x32xbf16>
    %cst_44 = arith.constant dense<0.000000e+00> : vector<16x16xf32>
    %129 = tpu.matmul %126, %127, %cst_44 {dimension_numbers = #tpu.dot_dimension_numbers<[1], [1], [0], [0], [0, 0, 1, 0], [], []>} : vector<16x32xbf16>, vector<16x32xbf16>, vector<16x16xf32> -> vector<16x16xf32>
    %cst_45 = arith.constant 0.176776692 : f32
    %130 = vector.broadcast %cst_45 : f32 to vector<16x16xf32>
    %131 = arith.mulf %129, %130 : vector<16x16xf32>
    %cst_46 = arith.constant dense<0xFF800000> : vector<16xf32>
    %132 = vector.multi_reduction <maximumf>, %131, %cst_46 [1] : vector<16x16xf32> to vector<16xf32>
    %133 = vector.shape_cast %132 : vector<16xf32> to vector<16x1xf32>
    %134 = vector.broadcast %133 : vector<16x1xf32> to vector<16x16xf32>
    %135 = arith.subf %131, %134 : vector<16x16xf32>
    %136 = math.exp %135 : vector<16x16xf32>
    %cst_47 = arith.constant dense<0.000000e+00> : vector<16xf32>
    %137 = vector.multi_reduction <add>, %136, %cst_47 [1] : vector<16x16xf32> to vector<16xf32>
    %138 = vector.shape_cast %137 : vector<16xf32> to vector<16x1xf32>
    %139 = tpu.reciprocal %138 {approx = true} : vector<16x1xf32> -> vector<16x1xf32>
    %140 = vector.broadcast %139 : vector<16x1xf32> to vector<16x16xf32>
    %141 = arith.mulf %136, %140 : vector<16x16xf32>
    %142 = arith.truncf %141 : vector<16x16xf32> to vector<16x16xbf16>
    %cst_48 = arith.constant dense<0.000000e+00> : vector<16x32xf32>
    %143 = tpu.matmul %142, %128, %cst_48 {dimension_numbers = #tpu.dot_dimension_numbers<[1], [0], [0], [1], [0, 0, 1, 1], [], []>} : vector<16x16xbf16>, vector<16x32xbf16>, vector<16x32xf32> -> vector<16x32xf32>
    %144 = arith.truncf %143 : vector<16x32xf32> to vector<16x32xbf16>
    %c32_49 = arith.constant 32 : index
    %c0_50 = arith.constant 0 : index
    %145 = vector.load %arg4[%c32_49, %c0_50] : memref<128x128xbf16, #tpu.memory_space<vmem>>, vector<32x128xbf16>
    %cst_51 = arith.constant dense<0.000000e+00> : vector<16x128xf32>
    %146 = tpu.matmul %144, %145, %cst_51 {dimension_numbers = #tpu.dot_dimension_numbers<[1], [0], [0], [1], [0, 0, 1, 1], [], []>} : vector<16x32xbf16>, vector<32x128xbf16>, vector<16x128xf32> -> vector<16x128xf32>
    %147 = arith.addf %125, %146 : vector<16x128xf32>
    %148 = vector.extract_strided_slice %100 {offsets = [0, 64], sizes = [16, 32], strides = [1, 1]} : vector<16x128xbf16> to vector<16x32xbf16>
    %149 = vector.extract_strided_slice %101 {offsets = [0, 64], sizes = [16, 32], strides = [1, 1]} : vector<16x128xbf16> to vector<16x32xbf16>
    %150 = vector.extract_strided_slice %102 {offsets = [0, 64], sizes = [16, 32], strides = [1, 1]} : vector<16x128xbf16> to vector<16x32xbf16>
    %cst_52 = arith.constant dense<0.000000e+00> : vector<16x16xf32>
    %151 = tpu.matmul %148, %149, %cst_52 {dimension_numbers = #tpu.dot_dimension_numbers<[1], [1], [0], [0], [0, 0, 1, 0], [], []>} : vector<16x32xbf16>, vector<16x32xbf16>, vector<16x16xf32> -> vector<16x16xf32>
    %cst_53 = arith.constant 0.176776692 : f32
    %152 = vector.broadcast %cst_53 : f32 to vector<16x16xf32>
    %153 = arith.mulf %151, %152 : vector<16x16xf32>
    %cst_54 = arith.constant dense<0xFF800000> : vector<16xf32>
    %154 = vector.multi_reduction <maximumf>, %153, %cst_54 [1] : vector<16x16xf32> to vector<16xf32>
    %155 = vector.shape_cast %154 : vector<16xf32> to vector<16x1xf32>
    %156 = vector.broadcast %155 : vector<16x1xf32> to vector<16x16xf32>
    %157 = arith.subf %153, %156 : vector<16x16xf32>
    %158 = math.exp %157 : vector<16x16xf32>
    %cst_55 = arith.constant dense<0.000000e+00> : vector<16xf32>
    %159 = vector.multi_reduction <add>, %158, %cst_55 [1] : vector<16x16xf32> to vector<16xf32>
    %160 = vector.shape_cast %159 : vector<16xf32> to vector<16x1xf32>
    %161 = tpu.reciprocal %160 {approx = true} : vector<16x1xf32> -> vector<16x1xf32>
    %162 = vector.broadcast %161 : vector<16x1xf32> to vector<16x16xf32>
    %163 = arith.mulf %158, %162 : vector<16x16xf32>
    %164 = arith.truncf %163 : vector<16x16xf32> to vector<16x16xbf16>
    %cst_56 = arith.constant dense<0.000000e+00> : vector<16x32xf32>
    %165 = tpu.matmul %164, %150, %cst_56 {dimension_numbers = #tpu.dot_dimension_numbers<[1], [0], [0], [1], [0, 0, 1, 1], [], []>} : vector<16x16xbf16>, vector<16x32xbf16>, vector<16x32xf32> -> vector<16x32xf32>
    %166 = arith.truncf %165 : vector<16x32xf32> to vector<16x32xbf16>
    %c64_57 = arith.constant 64 : index
    %c0_58 = arith.constant 0 : index
    %167 = vector.load %arg4[%c64_57, %c0_58] : memref<128x128xbf16, #tpu.memory_space<vmem>>, vector<32x128xbf16>
    %cst_59 = arith.constant dense<0.000000e+00> : vector<16x128xf32>
    %168 = tpu.matmul %166, %167, %cst_59 {dimension_numbers = #tpu.dot_dimension_numbers<[1], [0], [0], [1], [0, 0, 1, 1], [], []>} : vector<16x32xbf16>, vector<32x128xbf16>, vector<16x128xf32> -> vector<16x128xf32>
    %169 = arith.addf %147, %168 : vector<16x128xf32>
    %170 = vector.extract_strided_slice %100 {offsets = [0, 96], sizes = [16, 32], strides = [1, 1]} : vector<16x128xbf16> to vector<16x32xbf16>
    %171 = vector.extract_strided_slice %101 {offsets = [0, 96], sizes = [16, 32], strides = [1, 1]} : vector<16x128xbf16> to vector<16x32xbf16>
    %172 = vector.extract_strided_slice %102 {offsets = [0, 96], sizes = [16, 32], strides = [1, 1]} : vector<16x128xbf16> to vector<16x32xbf16>
    %cst_60 = arith.constant dense<0.000000e+00> : vector<16x16xf32>
    %173 = tpu.matmul %170, %171, %cst_60 {dimension_numbers = #tpu.dot_dimension_numbers<[1], [1], [0], [0], [0, 0, 1, 0], [], []>} : vector<16x32xbf16>, vector<16x32xbf16>, vector<16x16xf32> -> vector<16x16xf32>
    %cst_61 = arith.constant 0.176776692 : f32
    %174 = vector.broadcast %cst_61 : f32 to vector<16x16xf32>
    %175 = arith.mulf %173, %174 : vector<16x16xf32>
    %cst_62 = arith.constant dense<0xFF800000> : vector<16xf32>
    %176 = vector.multi_reduction <maximumf>, %175, %cst_62 [1] : vector<16x16xf32> to vector<16xf32>
    %177 = vector.shape_cast %176 : vector<16xf32> to vector<16x1xf32>
    %178 = vector.broadcast %177 : vector<16x1xf32> to vector<16x16xf32>
    %179 = arith.subf %175, %178 : vector<16x16xf32>
    %180 = math.exp %179 : vector<16x16xf32>
    %cst_63 = arith.constant dense<0.000000e+00> : vector<16xf32>
    %181 = vector.multi_reduction <add>, %180, %cst_63 [1] : vector<16x16xf32> to vector<16xf32>
    %182 = vector.shape_cast %181 : vector<16xf32> to vector<16x1xf32>
    %183 = tpu.reciprocal %182 {approx = true} : vector<16x1xf32> -> vector<16x1xf32>
    %184 = vector.broadcast %183 : vector<16x1xf32> to vector<16x16xf32>
    %185 = arith.mulf %180, %184 : vector<16x16xf32>
    %186 = arith.truncf %185 : vector<16x16xf32> to vector<16x16xbf16>
    %cst_64 = arith.constant dense<0.000000e+00> : vector<16x32xf32>
    %187 = tpu.matmul %186, %172, %cst_64 {dimension_numbers = #tpu.dot_dimension_numbers<[1], [0], [0], [1], [0, 0, 1, 1], [], []>} : vector<16x16xbf16>, vector<16x32xbf16>, vector<16x32xf32> -> vector<16x32xf32>
    %188 = arith.truncf %187 : vector<16x32xf32> to vector<16x32xbf16>
    %c96_65 = arith.constant 96 : index
    %c0_66 = arith.constant 0 : index
    %189 = vector.load %arg4[%c96_65, %c0_66] : memref<128x128xbf16, #tpu.memory_space<vmem>>, vector<32x128xbf16>
    %cst_67 = arith.constant dense<0.000000e+00> : vector<16x128xf32>
    %190 = tpu.matmul %188, %189, %cst_67 {dimension_numbers = #tpu.dot_dimension_numbers<[1], [0], [0], [1], [0, 0, 1, 1], [], []>} : vector<16x32xbf16>, vector<32x128xbf16>, vector<16x128xf32> -> vector<16x128xf32>
    %191 = arith.addf %169, %190 : vector<16x128xf32>
    %192 = tpu.concatenate %99, %191 in 0 : vector<16x128xf32>, vector<16x128xf32> -> vector<32x128xf32>
    %c0_68 = arith.constant 0 : index
    %c0_69 = arith.constant 0 : index
    %193 = vector.load %arg5[%c0_68, %c0_69] : memref<1x128xf32, #tpu.memory_space<vmem>>, vector<1x128xf32>
    %194 = vector.broadcast %193 : vector<1x128xf32> to vector<32x128xf32>
    %195 = arith.addf %192, %194 : vector<32x128xf32>
    %c0_70 = arith.constant 0 : index
    %c0_71 = arith.constant 0 : index
    %196 = vector.load %arg6[%c0_70, %c0_71] : memref<1x128xf32, #tpu.memory_space<vmem>>, vector<1x128xf32>
    %c0_72 = arith.constant 0 : index
    %c0_73 = arith.constant 0 : index
    %197 = vector.load %arg7[%c0_72, %c0_73] : memref<1x128xf32, #tpu.memory_space<vmem>>, vector<1x128xf32>
    %198 = arith.addf %195, %0 : vector<32x128xf32>
    %cst_74 = arith.constant dense<0.000000e+00> : vector<32xf32>
    %199 = vector.multi_reduction <add>, %198, %cst_74 [1] : vector<32x128xf32> to vector<32xf32>
    %200 = vector.shape_cast %199 : vector<32xf32> to vector<32x1xf32>
    %cst_75 = arith.constant 1.280000e+02 : f32
    %201 = vector.broadcast %cst_75 : f32 to vector<32x1xf32>
    %202 = arith.divf %200, %201 : vector<32x1xf32>
    %203 = vector.broadcast %202 : vector<32x1xf32> to vector<32x128xf32>
    %204 = arith.subf %198, %203 : vector<32x128xf32>
    %205 = arith.mulf %204, %204 : vector<32x128xf32>
    %cst_76 = arith.constant dense<0.000000e+00> : vector<32xf32>
    %206 = vector.multi_reduction <add>, %205, %cst_76 [1] : vector<32x128xf32> to vector<32xf32>
    %207 = vector.shape_cast %206 : vector<32xf32> to vector<32x1xf32>
    %cst_77 = arith.constant 1.280000e+02 : f32
    %208 = vector.broadcast %cst_77 : f32 to vector<32x1xf32>
    %209 = arith.divf %207, %208 : vector<32x1xf32>
    %210 = vector.broadcast %202 : vector<32x1xf32> to vector<32x128xf32>
    %211 = arith.subf %198, %210 : vector<32x128xf32>
    %cst_78 = arith.constant 9.99999974E-6 : f32
    %212 = vector.broadcast %cst_78 : f32 to vector<32x1xf32>
    %213 = arith.addf %209, %212 : vector<32x1xf32>
    %214 = math.rsqrt %213 : vector<32x1xf32>
    %215 = vector.broadcast %214 : vector<32x1xf32> to vector<32x128xf32>
    %216 = arith.mulf %211, %215 : vector<32x128xf32>
    %217 = vector.broadcast %196 : vector<1x128xf32> to vector<32x128xf32>
    %218 = arith.mulf %216, %217 : vector<32x128xf32>
    %219 = vector.broadcast %197 : vector<1x128xf32> to vector<32x128xf32>
    %220 = arith.addf %218, %219 : vector<32x128xf32>
    %221 = arith.truncf %220 : vector<32x128xf32> to vector<32x128xbf16>
    %c0_79 = arith.constant 0 : index
    %c0_80 = arith.constant 0 : index
    %222 = vector.load %arg8[%c0_79, %c0_80] : memref<128x512xbf16, #tpu.memory_space<vmem>>, vector<128x512xbf16>
    %cst_81 = arith.constant dense<0.000000e+00> : vector<32x512xf32>
    %223 = tpu.matmul %221, %222, %cst_81 {dimension_numbers = #tpu.dot_dimension_numbers<[1], [0], [0], [1], [0, 0, 1, 1], [], []>} : vector<32x128xbf16>, vector<128x512xbf16>, vector<32x512xf32> -> vector<32x512xf32>
    %c0_82 = arith.constant 0 : index
    %c0_83 = arith.constant 0 : index
    %224 = vector.load %arg9[%c0_82, %c0_83] : memref<1x512xf32, #tpu.memory_space<vmem>>, vector<1x512xf32>
    %225 = vector.broadcast %224 : vector<1x512xf32> to vector<32x512xf32>
    %226 = arith.addf %223, %225 : vector<32x512xf32>
    %cst_84 = arith.constant 5.000000e-01 : f32
    %227 = vector.broadcast %cst_84 : f32 to vector<32x512xf32>
    %228 = arith.mulf %227, %226 : vector<32x512xf32>
    %cst_85 = arith.constant 0.707106769 : f32
    %229 = vector.broadcast %cst_85 : f32 to vector<32x512xf32>
    %230 = arith.mulf %226, %229 : vector<32x512xf32>
    %231 = math.erf %230 : vector<32x512xf32>
    %cst_86 = arith.constant 1.000000e+00 : f32
    %232 = vector.broadcast %cst_86 : f32 to vector<32x512xf32>
    %233 = arith.addf %232, %231 : vector<32x512xf32>
    %234 = arith.mulf %228, %233 : vector<32x512xf32>
    %235 = arith.truncf %234 : vector<32x512xf32> to vector<32x512xbf16>
    %c0_87 = arith.constant 0 : index
    %c0_88 = arith.constant 0 : index
    %236 = vector.load %arg10[%c0_87, %c0_88] : memref<512x128xbf16, #tpu.memory_space<vmem>>, vector<512x128xbf16>
    %cst_89 = arith.constant dense<0.000000e+00> : vector<32x128xf32>
    %237 = tpu.matmul %235, %236, %cst_89 {dimension_numbers = #tpu.dot_dimension_numbers<[1], [0], [0], [1], [0, 0, 1, 1], [], []>} : vector<32x512xbf16>, vector<512x128xbf16>, vector<32x128xf32> -> vector<32x128xf32>
    %c0_90 = arith.constant 0 : index
    %c0_91 = arith.constant 0 : index
    %238 = vector.load %arg11[%c0_90, %c0_91] : memref<1x128xf32, #tpu.memory_space<vmem>>, vector<1x128xf32>
    %239 = vector.broadcast %238 : vector<1x128xf32> to vector<32x128xf32>
    %240 = arith.addf %237, %239 : vector<32x128xf32>
    %241 = arith.addf %220, %240 : vector<32x128xf32>
    %cst_92 = arith.constant dense<0.000000e+00> : vector<32xf32>
    %242 = vector.multi_reduction <add>, %241, %cst_92 [1] : vector<32x128xf32> to vector<32xf32>
    %243 = vector.shape_cast %242 : vector<32xf32> to vector<32x1xf32>
    %cst_93 = arith.constant 1.280000e+02 : f32
    %244 = vector.broadcast %cst_93 : f32 to vector<32x1xf32>
    %245 = arith.divf %243, %244 : vector<32x1xf32>
    %246 = vector.broadcast %245 : vector<32x1xf32> to vector<32x128xf32>
    %247 = arith.subf %241, %246 : vector<32x128xf32>
    %248 = arith.mulf %247, %247 : vector<32x128xf32>
    %cst_94 = arith.constant dense<0.000000e+00> : vector<32xf32>
    %249 = vector.multi_reduction <add>, %248, %cst_94 [1] : vector<32x128xf32> to vector<32xf32>
    %250 = vector.shape_cast %249 : vector<32xf32> to vector<32x1xf32>
    %cst_95 = arith.constant 1.280000e+02 : f32
    %251 = vector.broadcast %cst_95 : f32 to vector<32x1xf32>
    %252 = arith.divf %250, %251 : vector<32x1xf32>
    %253 = vector.broadcast %245 : vector<32x1xf32> to vector<32x128xf32>
    %254 = arith.subf %241, %253 : vector<32x128xf32>
    %cst_96 = arith.constant 9.99999974E-6 : f32
    %255 = vector.broadcast %cst_96 : f32 to vector<32x1xf32>
    %256 = arith.addf %252, %255 : vector<32x1xf32>
    %257 = math.rsqrt %256 : vector<32x1xf32>
    %258 = vector.broadcast %257 : vector<32x1xf32> to vector<32x128xf32>
    %259 = arith.mulf %254, %258 : vector<32x128xf32>
    %260 = vector.broadcast %196 : vector<1x128xf32> to vector<32x128xf32>
    %261 = arith.mulf %259, %260 : vector<32x128xf32>
    %262 = vector.broadcast %197 : vector<1x128xf32> to vector<32x128xf32>
    %263 = arith.addf %261, %262 : vector<32x128xf32>
    %c0_97 = arith.constant 0 : index
    %c0_98 = arith.constant 0 : index
    %264 = vector.load %arg12[%c0_97, %c0_98] : memref<32x128xf32, #tpu.memory_space<vmem>>, vector<32x128xf32>
    tpu.vector_store %arg12[%c0_97, %c0_98], %263 {strides = array<i32>} : memref<32x128xf32, #tpu.memory_space<vmem>>, vector<32x128xf32>,
    return
  }
  func.func @transform_0(%arg0: i32) -> (i32, i32) {
    %c0_i32 = arith.constant 0 : i32
    %c0_i32_0 = arith.constant 0 : i32
    return %arg0, %c0_i32 : i32, i32
  }
  func.func @transform_1(%arg0: i32) -> (i32, i32) {
    %c0_i32 = arith.constant 0 : i32
    %c0_i32_0 = arith.constant 0 : i32
    %c0_i32_1 = arith.constant 0 : i32
    return %c0_i32, %c0_i32_0 : i32, i32
  }
  func.func @transform_2(%arg0: i32) -> (i32, i32) {
    %c0_i32 = arith.constant 0 : i32
    %c0_i32_0 = arith.constant 0 : i32
    %c0_i32_1 = arith.constant 0 : i32
    return %c0_i32, %c0_i32_0 : i32, i32
  }
  func.func @transform_3(%arg0: i32) -> (i32, i32) {
    %c0_i32 = arith.constant 0 : i32
    %c0_i32_0 = arith.constant 0 : i32
    %c0_i32_1 = arith.constant 0 : i32
    return %c0_i32, %c0_i32_0 : i32, i32
  }
  func.func @transform_4(%arg0: i32) -> (i32, i32) {
    %c0_i32 = arith.constant 0 : i32
    %c0_i32_0 = arith.constant 0 : i32
    %c0_i32_1 = arith.constant 0 : i32
    return %c0_i32, %c0_i32_0 : i32, i32
  }
  func.func @transform_5(%arg0: i32) -> (i32, i32) {
    %c0_i32 = arith.constant 0 : i32
    %c0_i32_0 = arith.constant 0 : i32
    %c0_i32_1 = arith.constant 0 : i32
    return %c0_i32, %c0_i32_0 : i32, i32
  }
  func.func @transform_6(%arg0: i32) -> (i32, i32) {
    %c0_i32 = arith.constant 0 : i32
    %c0_i32_0 = arith.constant 0 : i32
    %c0_i32_1 = arith.constant 0 : i32
    return %c0_i32, %c0_i32_0 : i32, i32
  }
  func.func @transform_7(%arg0: i32) -> (i32, i32) {
    %c0_i32 = arith.constant 0 : i32
    %c0_i32_0 = arith.constant 0 : i32
    %c0_i32_1 = arith.constant 0 : i32
    return %c0_i32, %c0_i32_0 : i32, i32
  }
  func.func @transform_8(%arg0: i32) -> (i32, i32) {
    %c0_i32 = arith.constant 0 : i32
    %c0_i32_0 = arith.constant 0 : i32
    %c0_i32_1 = arith.constant 0 : i32
    return %c0_i32, %c0_i32_0 : i32, i32
  }
  func.func @transform_9(%arg0: i32) -> (i32, i32) {
    %c0_i32 = arith.constant 0 : i32
    %c0_i32_0 = arith.constant 0 : i32
    %c0_i32_1 = arith.constant 0 : i32
    return %c0_i32, %c0_i32_0 : i32, i32
  }
  func.func @transform_10(%arg0: i32) -> (i32, i32) {
    %c0_i32 = arith.constant 0 : i32
    %c0_i32_0 = arith.constant 0 : i32
    %c0_i32_1 = arith.constant 0 : i32
    return %c0_i32, %c0_i32_0 : i32, i32
  }
  func.func @transform_11(%arg0: i32) -> (i32, i32) {
    %c0_i32 = arith.constant 0 : i32
    %c0_i32_0 = arith.constant 0 : i32
    return %arg0, %c0_i32 : i32, i32
  }
}

</mosaic_0001>

<llo_original>
// kernel: tpu_custom_call.1
$region0: #{tpu_custom_call.1}
  #allocation0 [shape = 'u32[]', space=smem, size = 0x4, offset = 0x4, fixed_abs, tag = 'smem constant byte address 0x4 - core index']
  #allocation1 [shape = 'u32[72,128]{1,0:T(1,128)}', space=vmem, size = 0x9000, scoped, tag = 'internal scratch']
  %s0 = inlined_call_operand.hbm [shape: f32[32,128], index: 0, kind: input, shape index: {}]
  %s1 = inlined_call_operand.hbm [shape: bf16[128,384], index: 1, kind: input, shape index: {}]
  %s2 = inlined_call_operand.hbm [shape: f32[1,384], index: 2, kind: input, shape index: {}]
  %s3 = inlined_call_operand.hbm [shape: bf16[128,128], index: 3, kind: input, shape index: {}]
  %s4 = inlined_call_operand.vmem [shape: f32[1,128], index: 4, kind: input, shape index: {}]
  %s5 = inlined_call_operand.vmem [shape: f32[1,128], index: 5, kind: input, shape index: {}]
  %s6 = inlined_call_operand.vmem [shape: f32[1,128], index: 6, kind: input, shape index: {}]
  %s7 = inlined_call_operand.hbm [shape: bf16[128,512], index: 7, kind: input, shape index: {}]
  %s8 = inlined_call_operand.vmem [shape: f32[1,512], index: 8, kind: input, shape index: {}]
  %s9 = inlined_call_operand.hbm [shape: bf16[512,128], index: 9, kind: input, shape index: {}]
  %s10 = inlined_call_operand.vmem [shape: f32[1,128], index: 10, kind: input, shape index: {}]
  %s11 = inlined_call_operand.hbm [shape: f32[32,128], index: 11, kind: output, shape index: {}]
  %s12 = sld [smem:[#allocation0]]
  $region78: #{tpu_custom_call.1} parent=0
    _
  %s14 = ssub.s32 1, %s12
  %s15 = scalar_select 0, %s14, %s12
  $region1: #{tpu_custom_call.1} parent=0
    #allocation2 [shape = 'u8[16384]{0}', space=vmem, size = 0x4000, scoped, tag = 'input window, operand 0, single buffered']
    #allocation3 [shape = 's32[1]{0}', space=sflag, size = 0x4, scoped, tag = 'scoped memory for tpu_custom_call.1']
    #allocation4 [shape = 's32[1]{0}', space=sflag, size = 0x4, scoped, tag = 'scoped memory for tpu_custom_call.1']
    #allocation5 [shape = 'u8[98304]{0}', space=vmem, size = 0x18000, scoped, tag = 'input window, operand 1, single buffered']
    #allocation6 [shape = 's32[1]{0}', space=sflag, size = 0x4, scoped, tag = 'scoped memory for tpu_custom_call.1']
    #allocation7 [shape = 'u8[1536]{0}', space=vmem, size = 0x800, scoped, tag = 'input window, operand 2, single buffered']
    #allocation8 [shape = 'u8[32768]{0}', space=vmem, size = 0x8000, scoped, tag = 'input window, operand 3, single buffered']
    #allocation9 [shape = 's32[1]{0}', space=sflag, size = 0x4, scoped, tag = 'scoped memory for tpu_custom_call.1']
    #allocation10 [shape = 'u8[131072]{0}', space=vmem, size = 0x20000, scoped, tag = 'input window, operand 7, single buffered']
    #allocation11 [shape = 'u8[131072]{0}', space=vmem, size = 0x20000, scoped, tag = 'input window, operand 9, single buffered']
    #allocation12 [shape = 's32[1]{0}', space=sflag, size = 0x4, scoped, tag = 'scoped memory for tpu_custom_call.1']
    #allocation13 [shape = 'u8[16384]{0}', space=vmem, size = 0x4000, scoped, tag = 'output window, operand 0, single buffered']
    %16 = vsyncpa [#allocation3], 0
    %17 = vsyncpa [#allocation6], 0
    %18 = vsyncpa [#allocation9], 0
    %19 = vsyncpa [#allocation12], 0
    %20 = vsyncpa [#allocation4], 0
    // Predicated region
    $region2: #{tpu_custom_call.1} parent=1 // pred_check
      _
    $region3: #{tpu_custom_call.1} parent=1 // pred_check_branch
      %22 = sbr.rel (0) target = $region5
    $region4: #{tpu_custom_call.1} parent=1 // pred_region
      %24 = vsyncadd [#allocation3], 0
      %s25 = sshll.u32 %s0, 4
      %s26 = int_to_ptr.hbm [resolvable:$true] %s25
      %s27 = sshll.u32 [#allocation2], 4
      %s28 = int_to_ptr.vmem [resolvable:$true] %s27
      %33 = dma.hbm_to_vmem [thread:$0]  %s26, 512, %s28, [#allocation3], 128, 128, 8
    $region5: #{tpu_custom_call.1} parent=1 // pred_fallthru
      _
    // Predicated region
    $region6: #{tpu_custom_call.1} parent=1 // pred_check
      _
    $region7: #{tpu_custom_call.1} parent=1 // pred_check_branch
      %35 = sbr.rel (0) target = $region9
    $region8: #{tpu_custom_call.1} parent=1 // pred_region
      %37 = vsyncadd [#allocation6], 0
      %s38 = sshll.u32 %s1, 4
      %s39 = int_to_ptr.hbm [resolvable:$true] %s38
      %s40 = sshll.u32 [#allocation5], 4
      %s41 = int_to_ptr.vmem [resolvable:$true] %s40
      %46 = dma.hbm_to_vmem [thread:$0]  %s39, 3072, %s41, [#allocation6], 192, 192, 12
    $region9: #{tpu_custom_call.1} parent=1 // pred_fallthru
      _
    // Predicated region
    $region10: #{tpu_custom_call.1} parent=1 // pred_check
      _
    $region11: #{tpu_custom_call.1} parent=1 // pred_check_branch
      %48 = sbr.rel (0) target = $region13
    $region12: #{tpu_custom_call.1} parent=1 // pred_region
      %50 = vsyncadd [#allocation6], 0
      %s52 = sshll.u32 %s2, 4
      %s53 = int_to_ptr.hbm [resolvable:$true] %s52
      %s54 = sshll.u32 [#allocation7], 4
      %s55 = int_to_ptr.vmem [resolvable:$true] %s54
      %57 = dma.hbm_to_vmem [thread:$0]  %s53, 48, %s55, [#allocation6]
    $region13: #{tpu_custom_call.1} parent=1 // pred_fallthru
      _
    // Predicated region
    $region14: #{tpu_custom_call.1} parent=1 // pred_check
      _
    $region15: #{tpu_custom_call.1} parent=1 // pred_check_branch
      %59 = sbr.rel (0) target = $region17
    $region16: #{tpu_custom_call.1} parent=1 // pred_region
      %61 = vsyncadd [#allocation9], 0
      %s62 = sshll.u32 %s3, 4
      %s63 = int_to_ptr.hbm [resolvable:$true] %s62
      %s64 = sshll.u32 [#allocation8], 4
      %s65 = int_to_ptr.vmem [resolvable:$true] %s64
      %70 = dma.hbm_to_vmem [thread:$0]  %s63, 1024, %s65, [#allocation9], 64, 64, 4
    $region17: #{tpu_custom_call.1} parent=1 // pred_fallthru
      _
    // Predicated region
    $region18: #{tpu_custom_call.1} parent=1 // pred_check
      _
    $region19: #{tpu_custom_call.1} parent=1 // pred_check_branch
      %72 = sbr.rel (0) target = $region21
    $region20: #{tpu_custom_call.1} parent=1 // pred_region
      _
    $region21: #{tpu_custom_call.1} parent=1 // pred_fallthru
      _
    // Predicated region
    $region22: #{tpu_custom_call.1} parent=1 // pred_check
      _
    $region23: #{tpu_custom_call.1} parent=1 // pred_check_branch
      %74 = sbr.rel (0) target = $region25
    $region24: #{tpu_custom_call.1} parent=1 // pred_region
      _
    $region25: #{tpu_custom_call.1} parent=1 // pred_fallthru
      _
    // Predicated region
    $region26: #{tpu_custom_call.1} parent=1 // pred_check
      _
    $region27: #{tpu_custom_call.1} parent=1 // pred_check_branch
      %76 = sbr.rel (0) target = $region29
    $region28: #{tpu_custom_call.1} parent=1 // pred_region
      _
    $region29: #{tpu_custom_call.1} parent=1 // pred_fallthru
      _
    // Predicated region
    $region30: #{tpu_custom_call.1} parent=1 // pred_check
      _
    $region31: #{tpu_custom_call.1} parent=1 // pred_check_branch
      %78 = sbr.rel (0) target = $region33
    $region32: #{tpu_custom_call.1} parent=1 // pred_region
      %80 = vsyncadd [#allocation9], 0
      %s81 = sshll.u32 %s7, 4
      %s82 = int_to_ptr.hbm [resolvable:$true] %s81
      %s83 = sshll.u32 [#allocation10], 4
      %s84 = int_to_ptr.vmem [resolvable:$true] %s83
      %89 = dma.hbm_to_vmem [thread:$0]  %s82, 4096, %s84, [#allocation9], 256, 256, 16
    $region33: #{tpu_custom_call.1} parent=1 // pred_fallthru
      _
    // Predicated region
    $region34: #{tpu_custom_call.1} parent=1 // pred_check
      _
    $region35: #{tpu_custom_call.1} parent=1 // pred_check_branch
      %91 = sbr.rel (0) target = $region37
    $region36: #{tpu_custom_call.1} parent=1 // pred_region
      _
    $region37: #{tpu_custom_call.1} parent=1 // pred_fallthru
      _
    // Predicated region
    $region38: #{tpu_custom_call.1} parent=1 // pred_check
      _
    $region39: #{tpu_custom_call.1} parent=1 // pred_check_branch
      %93 = sbr.rel (0) target = $region41
    $region40: #{tpu_custom_call.1} parent=1 // pred_region
      %95 = vsyncadd [#allocation12], 0
      %s96 = sshll.u32 %s9, 4
      %s97 = int_to_ptr.hbm [resolvable:$true] %s96
      %s98 = sshll.u32 [#allocation11], 4
      %s99 = int_to_ptr.vmem [resolvable:$true] %s98
      %104 = dma.hbm_to_vmem [thread:$0]  %s97, 4096, %s99, [#allocation12], 64, 64, 4
    $region41: #{tpu_custom_call.1} parent=1 // pred_fallthru
      _
    // Predicated region
    $region42: #{tpu_custom_call.1} parent=1 // pred_check
      _
    $region43: #{tpu_custom_call.1} parent=1 // pred_check_branch
      %106 = sbr.rel (0) target = $region45
    $region44: #{tpu_custom_call.1} parent=1 // pred_region
      _
    $region45: #{tpu_custom_call.1} parent=1 // pred_fallthru
      _
    // Predicated region
    $region46: #{tpu_custom_call.1} parent=1 // pred_check
      _
    $region47: #{tpu_custom_call.1} parent=1 // pred_check_branch
      %108 = sbr.rel (0) target = $region49
    $region48: #{tpu_custom_call.1} parent=1 // pred_region
      %110 = dma.done [#allocation3], 512
    $region49: #{tpu_custom_call.1} parent=1 // pred_fallthru
      _
    // Predicated region
    $region50: #{tpu_custom_call.1} parent=1 // pred_check
      _
    $region51: #{tpu_custom_call.1} parent=1 // pred_check_branch
      %112 = sbr.rel (0) target = $region53
    $region52: #{tpu_custom_call.1} parent=1 // pred_region
      %114 = dma.done [#allocation6], 3072
    $region53: #{tpu_custom_call.1} parent=1 // pred_fallthru
      _
    // Predicated region
    $region54: #{tpu_custom_call.1} parent=1 // pred_check
      _
    $region55: #{tpu_custom_call.1} parent=1 // pred_check_branch
      %116 = sbr.rel (0) target = $region57
    $region56: #{tpu_custom_call.1} parent=1 // pred_region
      %118 = dma.done [#allocation6], 48
    $region57: #{tpu_custom_call.1} parent=1 // pred_fallthru
      _
    // Predicated region
    $region58: #{tpu_custom_call.1} parent=1 // pred_check
      _
    $region59: #{tpu_custom_call.1} parent=1 // pred_check_branch
      %120 = sbr.rel (0) target = $region61
    $region60: #{tpu_custom_call.1} parent=1 // pred_region
      %122 = dma.done [#allocation9], 1024
    $region61: #{tpu_custom_call.1} parent=1 // pred_fallthru
      _
    // Predicated region
    $region62: #{tpu_custom_call.1} parent=1 // pred_check
      _
    $region63: #{tpu_custom_call.1} parent=1 // pred_check_branch
      %124 = sbr.rel (0) target = $region65
    $region64: #{tpu_custom_call.1} parent=1 // pred_region
      %126 = dma.done [#allocation9], 4096
    $region65: #{tpu_custom_call.1} parent=1 // pred_fallthru
      _
    // Predicated region
    $region66: #{tpu_custom_call.1} parent=1 // pred_check
      _
    $region67: #{tpu_custom_call.1} parent=1 // pred_check_branch
      %128 = sbr.rel (0) target = $region69
    $region68: #{tpu_custom_call.1} parent=1 // pred_region
      %130 = dma.done [#allocation12], 4096
    $region69: #{tpu_custom_call.1} parent=1 // pred_fallthru
      _
    %v132 = vld [vmem:[#allocation2] sm:$0xff]
    %v133 = vld [vmem:[#allocation2 + $0x8] sm:$0xff]
    %v134 = vld [vmem:[#allocation2 + $0x10] sm:$0xff]
    %v135 = vld [vmem:[#allocation2 + $0x18] sm:$0xff]
    %v136 = vpack.c.bf16 %v133, %v132
    %v137 = vpack.c.bf16 %v135, %v134
    %v138 = vld [vmem:[#allocation5] sm:$0xff]
    %v139 = vld [vmem:[#allocation5 + $0x8] sm:$0xf]
    %v140 = vld [vmem:[#allocation5 + $0xc] sm:$0xff]
    %v141 = vld [vmem:[#allocation5 + $0x14] sm:$0xf]
    %v142 = vld [vmem:[#allocation5 + $0x18] sm:$0xff]
    %v143 = vld [vmem:[#allocation5 + $0x20] sm:$0xf]
    %v144 = vld [vmem:[#allocation5 + $0x24] sm:$0xff]
    %v145 = vld [vmem:[#allocation5 + $0x2c] sm:$0xf]
    %v146 = vld [vmem:[#allocation5 + $0x30] sm:$0xff]
    %v147 = vld [vmem:[#allocation5 + $0x38] sm:$0xf]
    %v148 = vld [vmem:[#allocation5 + $0x3c] sm:$0xff]
    %v149 = vld [vmem:[#allocation5 + $0x44] sm:$0xf]
    %v150 = vld [vmem:[#allocation5 + $0x48] sm:$0xff]
    %v151 = vld [vmem:[#allocation5 + $0x50] sm:$0xf]
    %v152 = vld [vmem:[#allocation5 + $0x54] sm:$0xff]
    %v153 = vld [vmem:[#allocation5 + $0x5c] sm:$0xf]
    %v154 = vld [vmem:[#allocation5 + $0x60] sm:$0xff]
    %v155 = vld [vmem:[#allocation5 + $0x68] sm:$0xf]
    %v156 = vld [vmem:[#allocation5 + $0x6c] sm:$0xff]
    %v157 = vld [vmem:[#allocation5 + $0x74] sm:$0xf]
    %v158 = vld [vmem:[#allocation5 + $0x78] sm:$0xff]
    %v159 = vld [vmem:[#allocation5 + $0x80] sm:$0xf]
    %v160 = vld [vmem:[#allocation5 + $0x84] sm:$0xff]
    %v161 = vld [vmem:[#allocation5 + $0x8c] sm:$0xf]
    %v162 = vld [vmem:[#allocation5 + $0x90] sm:$0xff]
    %v163 = vld [vmem:[#allocation5 + $0x98] sm:$0xf]
    %v164 = vld [vmem:[#allocation5 + $0x9c] sm:$0xff]
    %v165 = vld [vmem:[#allocation5 + $0xa4] sm:$0xf]
    %v166 = vld [vmem:[#allocation5 + $0xa8] sm:$0xff]
    %v167 = vld [vmem:[#allocation5 + $0xb0] sm:$0xf]
    %v168 = vld [vmem:[#allocation5 + $0xb4] sm:$0xff]
    %v169 = vld [vmem:[#allocation5 + $0xbc] sm:$0xf]
    %v170 = vld [vmem:[#allocation7] sm:$0x7]
    %v172 = vperm.slane %v170, 0
    %v173 = vperm.slane %v170, 1
    %v174 = vperm.slane %v170, 2
    %v210 = vunpack.c.l.b16 %v138
    %v211 = vunpack.c.h.b16 %v138
    %v212 = vunpack.c.l.b16 %v139
    %v213 = vunpack.c.l.b16 %v140
    %v214 = vunpack.c.h.b16 %v140
    %v215 = vunpack.c.l.b16 %v141
    %v216 = vunpack.c.l.b16 %v142
    %v217 = vunpack.c.h.b16 %v142
    %v218 = vunpack.c.l.b16 %v143
    %v219 = vunpack.c.l.b16 %v144
    %v220 = vunpack.c.h.b16 %v144
    %v221 = vunpack.c.l.b16 %v145
    %v222 = vunpack.c.l.b16 %v146
    %v223 = vunpack.c.h.b16 %v146
    %v224 = vunpack.c.l.b16 %v147
    %v225 = vunpack.c.l.b16 %v148
    %v226 = vunpack.c.h.b16 %v148
    %v227 = vunpack.c.l.b16 %v149
    %v228 = vunpack.c.l.b16 %v150
    %v229 = vunpack.c.h.b16 %v150
    %v230 = vunpack.c.l.b16 %v151
    %v231 = vunpack.c.l.b16 %v152
    %v232 = vunpack.c.h.b16 %v152
    %v233 = vunpack.c.l.b16 %v153
    %v234 = vunpack.c.l.b16 %v154
    %v235 = vunpack.c.h.b16 %v154
    %v236 = vunpack.c.l.b16 %v155
    %v237 = vunpack.c.l.b16 %v156
    %v238 = vunpack.c.h.b16 %v156
    %v239 = vunpack.c.l.b16 %v157
    %v240 = vunpack.c.l.b16 %v158
    %v241 = vunpack.c.h.b16 %v158
    %v242 = vunpack.c.l.b16 %v159
    %v243 = vunpack.c.l.b16 %v160
    %v244 = vunpack.c.h.b16 %v160
    %v245 = vunpack.c.l.b16 %v161
    %v246 = vunpack.c.l.b16 %v162
    %v247 = vunpack.c.h.b16 %v162
    %v248 = vunpack.c.l.b16 %v163
    %v249 = vunpack.c.l.b16 %v164
    %v250 = vunpack.c.h.b16 %v164
    %v251 = vunpack.c.l.b16 %v165
    %v252 = vunpack.c.l.b16 %v166
    %v253 = vunpack.c.h.b16 %v166
    %v254 = vunpack.c.l.b16 %v167
    %v255 = vunpack.c.l.b16 %v168
    %v256 = vunpack.c.h.b16 %v168
    %v257 = vunpack.c.l.b16 %v169
    %v258 = vpack.c.b16 %v213, %v210
    %v259 = vpack.c.b16 %v214, %v211
    %v260 = vpack.c.b16 %v215, %v212
    %v261 = vpack.c.b16 %v219, %v216
    %v262 = vpack.c.b16 %v220, %v217
    %v263 = vpack.c.b16 %v221, %v218
    %v264 = vpack.c.b16 %v225, %v222
    %v265 = vpack.c.b16 %v226, %v223
    %v266 = vpack.c.b16 %v227, %v224
    %v267 = vpack.c.b16 %v231, %v228
    %v268 = vpack.c.b16 %v232, %v229
    %v269 = vpack.c.b16 %v233, %v230
    %v270 = vpack.c.b16 %v237, %v234
    %v271 = vpack.c.b16 %v238, %v235
    %v272 = vpack.c.b16 %v239, %v236
    %v273 = vpack.c.b16 %v243, %v240
    %v274 = vpack.c.b16 %v244, %v241
    %v275 = vpack.c.b16 %v245, %v242
    %v276 = vpack.c.b16 %v249, %v246
    %v277 = vpack.c.b16 %v250, %v247
    %v278 = vpack.c.b16 %v251, %v248
    %v279 = vpack.c.b16 %v255, %v252
    %v280 = vpack.c.b16 %v256, %v253
    %v281 = vpack.c.b16 %v257, %v254
    %306 = vmatpush.bf16.msra.mxu0 %v279
    %307 = vmatpush.bf16.msra.mxu0 %v276
    %308 = vmatpush.bf16.msra.mxu0 %v273
    %309 = vmatpush.bf16.msra.mxu0 %v270
    %310 = vmatpush.bf16.msra.mxu0 %v267
    %311 = vmatpush.bf16.msra.mxu0 %v264
    %312 = vmatpush.bf16.msra.mxu0 %v261
    %313 = vmatpush.bf16.msra.mxu0 %v258
    %314 = vmatmul.bf16.gmra.mxu0 %v136
    %v315 = vpop.f32.mrf.mxu0
    %v316 = vadd.f32 %v172, %v315
    %v317 = vpop.f32.mrf.mxu0
    %v318 = vadd.f32 %v172, %v317
    %319 = vmatmul.bf16.gmra.mxu0 %v137
    %v320 = vpop.f32.mrf.mxu0
    %v321 = vadd.f32 %v172, %v320
    %v322 = vpop.f32.mrf.mxu0
    %v323 = vadd.f32 %v172, %v322
    %324 = vdwg.mxu0
    %325 = vmatpush.bf16.msra.mxu0 %v280
    %326 = vmatpush.bf16.msra.mxu0 %v277
    %327 = vmatpush.bf16.msra.mxu0 %v274
    %328 = vmatpush.bf16.msra.mxu0 %v271
    %329 = vmatpush.bf16.msra.mxu0 %v268
    %330 = vmatpush.bf16.msra.mxu0 %v265
    %331 = vmatpush.bf16.msra.mxu0 %v262
    %332 = vmatpush.bf16.msra.mxu0 %v259
    %333 = vmatmul.bf16.gmra.mxu0 %v136
    %v334 = vpop.f32.mrf.mxu0
    %v335 = vadd.f32 %v173, %v334
    %v336 = vpop.f32.mrf.mxu0
    %v337 = vadd.f32 %v173, %v336
    %338 = vmatmul.bf16.gmra.mxu0 %v137
    %v339 = vpop.f32.mrf.mxu0
    %v340 = vadd.f32 %v173, %v339
    %v341 = vpop.f32.mrf.mxu0
    %v342 = vadd.f32 %v173, %v341
    %343 = vdwg.mxu0
    %344 = vmatpush.bf16.msra.mxu0 %v281
    %345 = vmatpush.bf16.msra.mxu0 %v278
    %346 = vmatpush.bf16.msra.mxu0 %v275
    %347 = vmatpush.bf16.msra.mxu0 %v272
    %348 = vmatpush.bf16.msra.mxu0 %v269
    %349 = vmatpush.bf16.msra.mxu0 %v266
    %350 = vmatpush.bf16.msra.mxu0 %v263
    %351 = vmatpush.bf16.msra.mxu0 %v260
    %352 = vmatmul.bf16.gmra.mxu0 %v136
    %v353 = vpop.f32.mrf.mxu0
    %v354 = vadd.f32 %v174, %v353
    %v355 = vpop.f32.mrf.mxu0
    %v356 = vadd.f32 %v174, %v355
    %357 = vmatmul.bf16.gmra.mxu0 %v137
    %v358 = vpop.f32.mrf.mxu0
    %v359 = vadd.f32 %v174, %v358
    %v360 = vpop.f32.mrf.mxu0
    %v361 = vadd.f32 %v174, %v360
    %362 = vdwg.mxu0
    %v363 = vpack.c.bf16 %v335, %v316
    %v364 = vpack.c.bf16 %v354, %v354
    %v365 = vpack.c.bf16 %v337, %v318
    %v366 = vpack.c.bf16 %v356, %v356
    %v367 = vpack.c.bf16 %v340, %v321
    %v368 = vpack.c.bf16 %v359, %v359
    %v369 = vpack.c.bf16 %v342, %v323
    %v370 = vpack.c.bf16 %v361, %v361
    %v373 = vunpack.c.l.b16 %v363
    %v374 = vunpack.c.l.b16 %v365
    %v375 = vpack.c.b16 %v374, %v373
    %v376 = vunpack.c.h.b16 %v363
    %v377 = vunpack.c.h.b16 %v365
    %v378 = vpack.c.b16 %v377, %v376
    %vm379 = vcmask 261120
    %v381 = vsel %vm379, %v375, 0
    %v384 = vsel %vm379, %v378, 0
    %386 = vmatpush.bf16.xpose.msra.mxu0 0
    %387 = vmatpush.bf16.xpose.msra.mxu0 0
    %388 = vmatpush.bf16.xpose.msra.mxu0 0
    %389 = vmatpush.bf16.xpose.msra.mxu0 0
    %390 = vmatpush.bf16.xpose.msra.mxu0 0
    %391 = vmatpush.bf16.xpose.msra.mxu0 0
    %392 = vmatpush.bf16.xpose.msra.mxu0 0
    %393 = vmatpush.bf16.xpose.msra.mxu0 %v384
    %394 = vmatmul.bf16.gmra.mxu0 %v381
    %v395 = vpop.f32.mrf.mxu0
    %v396 = vadd.f32 0.0, %v395
    %v397 = vpop.f32.mrf.mxu0
    %v398 = vadd.f32 0.0, %v397
    %399 = vdwg.mxu0
    %v400 = vmul.f32 %v396, 0.17677669
    %v401 = vmul.f32 %v398, 0.17677669
    %vm402 = vcmask 130048
    %v403 = vsel %vm402, %v400, -inf
    %404 = vmax.xlane.f32.xlu0 %v403
    %v405 = vpop.xlane.xlu0 %404
    %v406 = vsel %vm402, %v401, -inf
    %407 = vmax.xlane.f32.xlu0 %v406
    %v408 = vpop.xlane.xlu0 %407
    %v409 = vsub.f32 %v400, %v405
    %v410 = vsub.f32 %v401, %v408
    %v411 = vmul.f32 %v409, 1.442695
    %v412 = vpow.pop %v411
    %v413 = vmul.f32 %v410, 1.442695
    %v414 = vpow.pop %v413
    %v415 = vsel %vm402, %v412, 0.0
    %416 = vadd.xlane.f32.xlu0 %v415
    %v417 = vpop.xlane.xlu0 %416
    %v418 = vsel %vm402, %v414, 0.0
    %419 = vadd.xlane.f32.xlu0 %v418
    %v420 = vpop.xlane.xlu0 %419
    %v421 = vrcp.pop %v417
    %v422 = vrcp.pop %v420
    %v423 = vmul.f32 %v412, %v421
    %v424 = vmul.f32 %v414, %v422
    %v425 = vpack.c.bf16 %v424, %v423
    %v428 = vunpack.c.l.b16 %v364
    %v429 = vunpack.c.l.b16 %v366
    %v430 = vpack.c.b16 %v429, %v428
    %v433 = vsel %vm402, %v425, 0
    %435 = vmatpush.bf16.msra.mxu0 0
    %436 = vmatpush.bf16.msra.mxu0 0
    %437 = vmatpush.bf16.msra.mxu0 0
    %438 = vmatpush.bf16.msra.mxu0 0
    %439 = vmatpush.bf16.msra.mxu0 0
    %440 = vmatpush.bf16.msra.mxu0 0
    %441 = vmatpush.bf16.msra.mxu0 0
    %442 = vmatpush.bf16.msra.mxu0 %v430
    %443 = vmatmul.bf16.gmra.mxu0 %v433
    %v444 = vpop.f32.mrf.mxu0
    %v445 = vadd.f32 0.0, %v444
    %v446 = vpop.f32.mrf.mxu0
    %v447 = vadd.f32 0.0, %v446
    %448 = vdwg.mxu0
    %v449 = vpack.c.bf16 %v447, %v445
    %v450 = vld [vmem:[#allocation8] sm:$0xf]
    %v451 = vld [vmem:[#allocation8 + $0x4] sm:$0xf]
    %v452 = vld [vmem:[#allocation8 + $0x8] sm:$0xf]
    %v453 = vld [vmem:[#allocation8 + $0xc] sm:$0xf]
    %454 = vrot.lane.b32.xlu0 %v375, 96
    %v455 = vpop.permute.xlu0 %454
    %456 = vrot.lane.b32.xlu0 %v378, 96
    %v457 = vpop.permute.xlu0 %456
    %v459 = vsel %vm379, %v455, 0
    %v462 = vsel %vm379, %v457, 0
    %464 = vmatpush.bf16.xpose.msra.mxu0 0
    %465 = vmatpush.bf16.xpose.msra.mxu0 0
    %466 = vmatpush.bf16.xpose.msra.mxu0 0
    %467 = vmatpush.bf16.xpose.msra.mxu0 0
    %468 = vmatpush.bf16.xpose.msra.mxu0 0
    %469 = vmatpush.bf16.xpose.msra.mxu0 0
    %470 = vmatpush.bf16.xpose.msra.mxu0 0
    %471 = vmatpush.bf16.xpose.msra.mxu0 %v462
    %472 = vmatmul.bf16.gmra.mxu0 %v459
    %v473 = vpop.f32.mrf.mxu0
    %v474 = vadd.f32 0.0, %v473
    %v475 = vpop.f32.mrf.mxu0
    %v476 = vadd.f32 0.0, %v475
    %477 = vdwg.mxu0
    %v478 = vmul.f32 %v474, 0.17677669
    %v479 = vmul.f32 %v476, 0.17677669
    %v480 = vsel %vm402, %v478, -inf
    %481 = vmax.xlane.f32.xlu0 %v480
    %v482 = vpop.xlane.xlu0 %481
    %v483 = vsel %vm402, %v479, -inf
    %484 = vmax.xlane.f32.xlu0 %v483
    %v485 = vpop.xlane.xlu0 %484
    %v486 = vsub.f32 %v478, %v482
    %v487 = vsub.f32 %v479, %v485
    %v488 = vmul.f32 %v486, 1.442695
    %v489 = vpow.pop %v488
    %v490 = vmul.f32 %v487, 1.442695
    %v491 = vpow.pop %v490
    %v492 = vsel %vm402, %v489, 0.0
    %493 = vadd.xlane.f32.xlu0 %v492
    %v494 = vpop.xlane.xlu0 %493
    %v495 = vsel %vm402, %v491, 0.0
    %496 = vadd.xlane.f32.xlu0 %v495
    %v497 = vpop.xlane.xlu0 %496
    %v498 = vrcp.pop %v494
    %v499 = vrcp.pop %v497
    %v500 = vmul.f32 %v489, %v498
    %v501 = vmul.f32 %v491, %v499
    %v502 = vpack.c.bf16 %v501, %v500
    %503 = vrot.lane.b32.xlu0 %v430, 96
    %v504 = vpop.permute.xlu0 %503
    %v507 = vsel %vm402, %v502, 0
    %509 = vmatpush.bf16.msra.mxu0 0
    %510 = vmatpush.bf16.msra.mxu0 0
    %511 = vmatpush.bf16.msra.mxu0 0
    %512 = vmatpush.bf16.msra.mxu0 0
    %513 = vmatpush.bf16.msra.mxu0 0
    %514 = vmatpush.bf16.msra.mxu0 0
    %515 = vmatpush.bf16.msra.mxu0 0
    %516 = vmatpush.bf16.msra.mxu0 %v504
    %517 = vmatmul.bf16.gmra.mxu0 %v507
    %v518 = vpop.f32.mrf.mxu0
    %v519 = vadd.f32 0.0, %v518
    %v520 = vpop.f32.mrf.mxu0
    %v521 = vadd.f32 0.0, %v520
    %522 = vdwg.mxu0
    %v523 = vpack.c.bf16 %v521, %v519
    %v524 = vld [vmem:[#allocation8 + $0x10] sm:$0xf]
    %v525 = vld [vmem:[#allocation8 + $0x14] sm:$0xf]
    %v526 = vld [vmem:[#allocation8 + $0x18] sm:$0xf]
    %v527 = vld [vmem:[#allocation8 + $0x1c] sm:$0xf]
    %v532 = vunpack.c.l.b16 %v524
    %v533 = vunpack.c.l.b16 %v525
    %v534 = vunpack.c.l.b16 %v526
    %v535 = vunpack.c.l.b16 %v527
    %v536 = vpack.c.b16 %v533, %v532
    %v537 = vpack.c.b16 %v535, %v534
    %v541 = vsel %vm379, %v523, 0
    %543 = vmatpush.bf16.msra.mxu0 0
    %544 = vmatpush.bf16.msra.mxu0 0
    %545 = vmatpush.bf16.msra.mxu0 0
    %546 = vmatpush.bf16.msra.mxu0 0
    %547 = vmatpush.bf16.msra.mxu0 0
    %548 = vmatpush.bf16.msra.mxu0 0
    %549 = vmatpush.bf16.msra.mxu0 %v537
    %550 = vmatpush.bf16.msra.mxu0 %v536
    %551 = vmatmul.bf16.gmra.mxu0 %v541
    %v552 = vpop.f32.mrf.mxu0
    %v553 = vadd.f32 0.0, %v552
    %v554 = vpop.f32.mrf.mxu0
    %v555 = vadd.f32 0.0, %v554
    %556 = vdwg.mxu0
    %v561 = vunpack.c.l.b16 %v450
    %v562 = vunpack.c.l.b16 %v451
    %v563 = vunpack.c.l.b16 %v452
    %v564 = vunpack.c.l.b16 %v453
    %v565 = vpack.c.b16 %v562, %v561
    %v566 = vpack.c.b16 %v564, %v563
    %v570 = vsel %vm379, %v449, 0
    %572 = vmatpush.bf16.msra.mxu0 0
    %573 = vmatpush.bf16.msra.mxu0 0
    %574 = vmatpush.bf16.msra.mxu0 0
    %575 = vmatpush.bf16.msra.mxu0 0
    %576 = vmatpush.bf16.msra.mxu0 0
    %577 = vmatpush.bf16.msra.mxu0 0
    %578 = vmatpush.bf16.msra.mxu0 %v566
    %579 = vmatpush.bf16.msra.mxu0 %v565
    %580 = vmatmul.bf16.gmra.mxu0 %v570
    %v581 = vpop.f32.mrf.mxu0
    %v582 = vadd.f32 %v553, %v581
    %v583 = vpop.f32.mrf.mxu0
    %v584 = vadd.f32 %v555, %v583
    %585 = vdwg.mxu0
    %586 = vrot.lane.b32.xlu0 %v375, 64
    %v587 = vpop.permute.xlu0 %586
    %588 = vrot.lane.b32.xlu0 %v378, 64
    %v589 = vpop.permute.xlu0 %588
    %v591 = vsel %vm379, %v587, 0
    %v594 = vsel %vm379, %v589, 0
    %596 = vmatpush.bf16.xpose.msra.mxu0 0
    %597 = vmatpush.bf16.xpose.msra.mxu0 0
    %598 = vmatpush.bf16.xpose.msra.mxu0 0
    %599 = vmatpush.bf16.xpose.msra.mxu0 0
    %600 = vmatpush.bf16.xpose.msra.mxu0 0
    %601 = vmatpush.bf16.xpose.msra.mxu0 0
    %602 = vmatpush.bf16.xpose.msra.mxu0 0
    %603 = vmatpush.bf16.xpose.msra.mxu0 %v594
    %604 = vmatmul.bf16.gmra.mxu0 %v591
    %v605 = vpop.f32.mrf.mxu0
    %v606 = vadd.f32 0.0, %v605
    %v607 = vpop.f32.mrf.mxu0
    %v608 = vadd.f32 0.0, %v607
    %609 = vdwg.mxu0
    %v610 = vmul.f32 %v606, 0.17677669
    %v611 = vmul.f32 %v608, 0.17677669
    %v612 = vsel %vm402, %v610, -inf
    %613 = vmax.xlane.f32.xlu0 %v612
    %v614 = vpop.xlane.xlu0 %613
    %v615 = vsel %vm402, %v611, -inf
    %616 = vmax.xlane.f32.xlu0 %v615
    %v617 = vpop.xlane.xlu0 %616
    %v618 = vsub.f32 %v610, %v614
    %v619 = vsub.f32 %v611, %v617
    %v620 = vmul.f32 %v618, 1.442695
    %v621 = vpow.pop %v620
    %v622 = vmul.f32 %v619, 1.442695
    %v623 = vpow.pop %v622
    %v624 = vsel %vm402, %v621, 0.0
    %625 = vadd.xlane.f32.xlu0 %v624
    %v626 = vpop.xlane.xlu0 %625
    %v627 = vsel %vm402, %v623, 0.0
    %628 = vadd.xlane.f32.xlu0 %v627
    %v629 = vpop.xlane.xlu0 %628
    %v630 = vrcp.pop %v626
    %v631 = vrcp.pop %v629
    %v632 = vmul.f32 %v621, %v630
    %v633 = vmul.f32 %v623, %v631
    %v634 = vpack.c.bf16 %v633, %v632
    %635 = vrot.lane.b32.xlu0 %v430, 64
    %v636 = vpop.permute.xlu0 %635
    %v639 = vsel %vm402, %v634, 0
    %641 = vmatpush.bf16.msra.mxu0 0
    %642 = vmatpush.bf16.msra.mxu0 0
    %643 = vmatpush.bf16.msra.mxu0 0
    %644 = vmatpush.bf16.msra.mxu0 0
    %645 = vmatpush.bf16.msra.mxu0 0
    %646 = vmatpush.bf16.msra.mxu0 0
    %647 = vmatpush.bf16.msra.mxu0 0
    %648 = vmatpush.bf16.msra.mxu0 %v636
    %649 = vmatmul.bf16.gmra.mxu0 %v639
    %v650 = vpop.f32.mrf.mxu0
    %v651 = vadd.f32 0.0, %v650
    %v652 = vpop.f32.mrf.mxu0
    %v653 = vadd.f32 0.0, %v652
    %654 = vdwg.mxu0
    %v655 = vpack.c.bf16 %v653, %v651
    %v656 = vld [vmem:[#allocation8 + $0x20] sm:$0xf]
    %v657 = vld [vmem:[#allocation8 + $0x24] sm:$0xf]
    %v658 = vld [vmem:[#allocation8 + $0x28] sm:$0xf]
    %v659 = vld [vmem:[#allocation8 + $0x2c] sm:$0xf]
    %v664 = vunpack.c.l.b16 %v656
    %v665 = vunpack.c.l.b16 %v657
    %v666 = vunpack.c.l.b16 %v658
    %v667 = vunpack.c.l.b16 %v659
    %v668 = vpack.c.b16 %v665, %v664
    %v669 = vpack.c.b16 %v667, %v666
    %v673 = vsel %vm379, %v655, 0
    %675 = vmatpush.bf16.msra.mxu0 0
    %676 = vmatpush.bf16.msra.mxu0 0
    %677 = vmatpush.bf16.msra.mxu0 0
    %678 = vmatpush.bf16.msra.mxu0 0
    %679 = vmatpush.bf16.msra.mxu0 0
    %680 = vmatpush.bf16.msra.mxu0 0
    %681 = vmatpush.bf16.msra.mxu0 %v669
    %682 = vmatpush.bf16.msra.mxu0 %v668
    %683 = vmatmul.bf16.gmra.mxu0 %v673
    %v684 = vpop.f32.mrf.mxu0
    %v685 = vadd.f32 0.0, %v684
    %v686 = vpop.f32.mrf.mxu0
    %v687 = vadd.f32 0.0, %v686
    %688 = vdwg.mxu0
    %v689 = vadd.f32 %v582, %v685
    %v690 = vadd.f32 %v584, %v687
    %691 = vrot.lane.b32.xlu0 %v375, 32
    %v692 = vpop.permute.xlu0 %691
    %693 = vrot.lane.b32.xlu0 %v378, 32
    %v694 = vpop.permute.xlu0 %693
    %v696 = vsel %vm379, %v692, 0
    %v699 = vsel %vm379, %v694, 0
    %701 = vmatpush.bf16.xpose.msra.mxu0 0
    %702 = vmatpush.bf16.xpose.msra.mxu0 0
    %703 = vmatpush.bf16.xpose.msra.mxu0 0
    %704 = vmatpush.bf16.xpose.msra.mxu0 0
    %705 = vmatpush.bf16.xpose.msra.mxu0 0
    %706 = vmatpush.bf16.xpose.msra.mxu0 0
    %707 = vmatpush.bf16.xpose.msra.mxu0 0
    %708 = vmatpush.bf16.xpose.msra.mxu0 %v699
    %709 = vmatmul.bf16.gmra.mxu0 %v696
    %v710 = vpop.f32.mrf.mxu0
    %v711 = vadd.f32 0.0, %v710
    %v712 = vpop.f32.mrf.mxu0
    %v713 = vadd.f32 0.0, %v712
    %714 = vdwg.mxu0
    %v715 = vmul.f32 %v711, 0.17677669
    %v716 = vmul.f32 %v713, 0.17677669
    %v717 = vsel %vm402, %v715, -inf
    %718 = vmax.xlane.f32.xlu0 %v717
    %v719 = vpop.xlane.xlu0 %718
    %v720 = vsel %vm402, %v716, -inf
    %721 = vmax.xlane.f32.xlu0 %v720
    %v722 = vpop.xlane.xlu0 %721
    %v723 = vsub.f32 %v715, %v719
    %v724 = vsub.f32 %v716, %v722
    %v725 = vmul.f32 %v723, 1.442695
    %v726 = vpow.pop %v725
    %v727 = vmul.f32 %v724, 1.442695
    %v728 = vpow.pop %v727
    %v729 = vsel %vm402, %v726, 0.0
    %730 = vadd.xlane.f32.xlu0 %v729
    %v731 = vpop.xlane.xlu0 %730
    %v732 = vsel %vm402, %v728, 0.0
    %733 = vadd.xlane.f32.xlu0 %v732
    %v734 = vpop.xlane.xlu0 %733
    %v735 = vrcp.pop %v731
    %v736 = vrcp.pop %v734
    %v737 = vmul.f32 %v726, %v735
    %v738 = vmul.f32 %v728, %v736
    %v739 = vpack.c.bf16 %v738, %v737
    %740 = vrot.lane.b32.xlu0 %v430, 32
    %v741 = vpop.permute.xlu0 %740
    %v744 = vsel %vm402, %v739, 0
    %746 = vmatpush.bf16.msra.mxu0 0
    %747 = vmatpush.bf16.msra.mxu0 0
    %748 = vmatpush.bf16.msra.mxu0 0
    %749 = vmatpush.bf16.msra.mxu0 0
    %750 = vmatpush.bf16.msra.mxu0 0
    %751 = vmatpush.bf16.msra.mxu0 0
    %752 = vmatpush.bf16.msra.mxu0 0
    %753 = vmatpush.bf16.msra.mxu0 %v741
    %754 = vmatmul.bf16.gmra.mxu0 %v744
    %v755 = vpop.f32.mrf.mxu0
    %v756 = vadd.f32 0.0, %v755
    %v757 = vpop.f32.mrf.mxu0
    %v758 = vadd.f32 0.0, %v757
    %759 = vdwg.mxu0
    %v760 = vpack.c.bf16 %v758, %v756
    %v761 = vld [vmem:[#allocation8 + $0x30] sm:$0xf]
    %v762 = vld [vmem:[#allocation8 + $0x34] sm:$0xf]
    %v763 = vld [vmem:[#allocation8 + $0x38] sm:$0xf]
    %v764 = vld [vmem:[#allocation8 + $0x3c] sm:$0xf]
    %v769 = vunpack.c.l.b16 %v761
    %v770 = vunpack.c.l.b16 %v762
    %v771 = vunpack.c.l.b16 %v763
    %v772 = vunpack.c.l.b16 %v764
    %v773 = vpack.c.b16 %v770, %v769
    %v774 = vpack.c.b16 %v772, %v771
    %v778 = vsel %vm379, %v760, 0
    %780 = vmatpush.bf16.msra.mxu0 0
    %781 = vmatpush.bf16.msra.mxu0 0
    %782 = vmatpush.bf16.msra.mxu0 0
    %783 = vmatpush.bf16.msra.mxu0 0
    %784 = vmatpush.bf16.msra.mxu0 0
    %785 = vmatpush.bf16.msra.mxu0 0
    %786 = vmatpush.bf16.msra.mxu0 %v774
    %787 = vmatpush.bf16.msra.mxu0 %v773
    %788 = vmatmul.bf16.gmra.mxu0 %v778
    %v789 = vpop.f32.mrf.mxu0
    %v790 = vadd.f32 0.0, %v789
    %v791 = vpop.f32.mrf.mxu0
    %v792 = vadd.f32 0.0, %v791
    %793 = vdwg.mxu0
    %v794 = vadd.f32 %v689, %v790
    %v795 = vadd.f32 %v690, %v792
    %v798 = vunpack.c.l.b16 %v367
    %v799 = vunpack.c.l.b16 %v369
    %v800 = vpack.c.b16 %v799, %v798
    %v801 = vunpack.c.h.b16 %v367
    %v802 = vunpack.c.h.b16 %v369
    %v803 = vpack.c.b16 %v802, %v801
    %v805 = vsel %vm379, %v800, 0
    %v808 = vsel %vm379, %v803, 0
    %810 = vmatpush.bf16.xpose.msra.mxu0 0
    %811 = vmatpush.bf16.xpose.msra.mxu0 0
    %812 = vmatpush.bf16.xpose.msra.mxu0 0
    %813 = vmatpush.bf16.xpose.msra.mxu0 0
    %814 = vmatpush.bf16.xpose.msra.mxu0 0
    %815 = vmatpush.bf16.xpose.msra.mxu0 0
    %816 = vmatpush.bf16.xpose.msra.mxu0 0
    %817 = vmatpush.bf16.xpose.msra.mxu0 %v808
    %818 = vmatmul.bf16.gmra.mxu0 %v805
    %v819 = vpop.f32.mrf.mxu0
    %v820 = vadd.f32 0.0, %v819
    %v821 = vpop.f32.mrf.mxu0
    %v822 = vadd.f32 0.0, %v821
    %823 = vdwg.mxu0
    %v824 = vmul.f32 %v820, 0.17677669
    %v825 = vmul.f32 %v822, 0.17677669
    %v826 = vsel %vm402, %v824, -inf
    %827 = vmax.xlane.f32.xlu0 %v826
    %v828 = vpop.xlane.xlu0 %827
    %v829 = vsel %vm402, %v825, -inf
    %830 = vmax.xlane.f32.xlu0 %v829
    %v831 = vpop.xlane.xlu0 %830
    %v832 = vsub.f32 %v824, %v828
    %v833 = vsub.f32 %v825, %v831
    %v834 = vmul.f32 %v832, 1.442695
    %v835 = vpow.pop %v834
    %v836 = vmul.f32 %v833, 1.442695
    %v837 = vpow.pop %v836
    %v838 = vsel %vm402, %v835, 0.0
    %839 = vadd.xlane.f32.xlu0 %v838
    %v840 = vpop.xlane.xlu0 %839
    %v841 = vsel %vm402, %v837, 0.0
    %842 = vadd.xlane.f32.xlu0 %v841
    %v843 = vpop.xlane.xlu0 %842
    %v844 = vrcp.pop %v840
    %v845 = vrcp.pop %v843
    %v846 = vmul.f32 %v835, %v844
    %v847 = vmul.f32 %v837, %v845
    %v848 = vpack.c.bf16 %v847, %v846
    %v851 = vunpack.c.l.b16 %v368
    %v852 = vunpack.c.l.b16 %v370
    %v853 = vpack.c.b16 %v852, %v851
    %v856 = vsel %vm402, %v848, 0
    %858 = vmatpush.bf16.msra.mxu0 0
    %859 = vmatpush.bf16.msra.mxu0 0
    %860 = vmatpush.bf16.msra.mxu0 0
    %861 = vmatpush.bf16.msra.mxu0 0
    %862 = vmatpush.bf16.msra.mxu0 0
    %863 = vmatpush.bf16.msra.mxu0 0
    %864 = vmatpush.bf16.msra.mxu0 0
    %865 = vmatpush.bf16.msra.mxu0 %v853
    %866 = vmatmul.bf16.gmra.mxu0 %v856
    %v867 = vpop.f32.mrf.mxu0
    %v868 = vadd.f32 0.0, %v867
    %v869 = vpop.f32.mrf.mxu0
    %v870 = vadd.f32 0.0, %v869
    %871 = vdwg.mxu0
    %v872 = vpack.c.bf16 %v870, %v868
    %873 = vrot.lane.b32.xlu0 %v800, 96
    %v874 = vpop.permute.xlu0 %873
    %875 = vrot.lane.b32.xlu0 %v803, 96
    %v876 = vpop.permute.xlu0 %875
    %v878 = vsel %vm379, %v874, 0
    %v881 = vsel %vm379, %v876, 0
    %883 = vmatpush.bf16.xpose.msra.mxu0 0
    %884 = vmatpush.bf16.xpose.msra.mxu0 0
    %885 = vmatpush.bf16.xpose.msra.mxu0 0
    %886 = vmatpush.bf16.xpose.msra.mxu0 0
    %887 = vmatpush.bf16.xpose.msra.mxu0 0
    %888 = vmatpush.bf16.xpose.msra.mxu0 0
    %889 = vmatpush.bf16.xpose.msra.mxu0 0
    %890 = vmatpush.bf16.xpose.msra.mxu0 %v881
    %891 = vmatmul.bf16.gmra.mxu0 %v878
    %v892 = vpop.f32.mrf.mxu0
    %v893 = vadd.f32 0.0, %v892
    %v894 = vpop.f32.mrf.mxu0
    %v895 = vadd.f32 0.0, %v894
    %896 = vdwg.mxu0
    %v897 = vmul.f32 %v893, 0.17677669
    %v898 = vmul.f32 %v895, 0.17677669
    %v899 = vsel %vm402, %v897, -inf
    %900 = vmax.xlane.f32.xlu0 %v899
    %v901 = vpop.xlane.xlu0 %900
    %v902 = vsel %vm402, %v898, -inf
    %903 = vmax.xlane.f32.xlu0 %v902
    %v904 = vpop.xlane.xlu0 %903
    %v905 = vsub.f32 %v897, %v901
    %v906 = vsub.f32 %v898, %v904
    %v907 = vmul.f32 %v905, 1.442695
    %v908 = vpow.pop %v907
    %v909 = vmul.f32 %v906, 1.442695
    %v910 = vpow.pop %v909
    %v911 = vsel %vm402, %v908, 0.0
    %912 = vadd.xlane.f32.xlu0 %v911
    %v913 = vpop.xlane.xlu0 %912
    %v914 = vsel %vm402, %v910, 0.0
    %915 = vadd.xlane.f32.xlu0 %v914
    %v916 = vpop.xlane.xlu0 %915
    %v917 = vrcp.pop %v913
    %v918 = vrcp.pop %v916
    %v919 = vmul.f32 %v908, %v917
    %v920 = vmul.f32 %v910, %v918
    %v921 = vpack.c.bf16 %v920, %v919
    %922 = vrot.lane.b32.xlu0 %v853, 96
    %v923 = vpop.permute.xlu0 %922
    %v926 = vsel %vm402, %v921, 0
    %928 = vmatpush.bf16.msra.mxu0 0
    %929 = vmatpush.bf16.msra.mxu0 0
    %930 = vmatpush.bf16.msra.mxu0 0
    %931 = vmatpush.bf16.msra.mxu0 0
    %932 = vmatpush.bf16.msra.mxu0 0
    %933 = vmatpush.bf16.msra.mxu0 0
    %934 = vmatpush.bf16.msra.mxu0 0
    %935 = vmatpush.bf16.msra.mxu0 %v923
    %936 = vmatmul.bf16.gmra.mxu0 %v926
    %v937 = vpop.f32.mrf.mxu0
    %v938 = vadd.f32 0.0, %v937
    %v939 = vpop.f32.mrf.mxu0
    %v940 = vadd.f32 0.0, %v939
    %941 = vdwg.mxu0
    %v942 = vpack.c.bf16 %v940, %v938
    %v944 = vsel %vm379, %v942, 0
    %946 = vmatpush.bf16.msra.mxu0 0
    %947 = vmatpush.bf16.msra.mxu0 0
    %948 = vmatpush.bf16.msra.mxu0 0
    %949 = vmatpush.bf16.msra.mxu0 0
    %950 = vmatpush.bf16.msra.mxu0 0
    %951 = vmatpush.bf16.msra.mxu0 0
    %952 = vmatpush.bf16.msra.mxu0 %v537
    %953 = vmatpush.bf16.msra.mxu0 %v536
    %954 = vmatmul.bf16.gmra.mxu0 %v944
    %v955 = vpop.f32.mrf.mxu0
    %v956 = vadd.f32 0.0, %v955
    %v957 = vpop.f32.mrf.mxu0
    %v958 = vadd.f32 0.0, %v957
    %959 = vdwg.mxu0
    %v961 = vsel %vm379, %v872, 0
    %963 = vmatpush.bf16.msra.mxu0 0
    %964 = vmatpush.bf16.msra.mxu0 0
    %965 = vmatpush.bf16.msra.mxu0 0
    %966 = vmatpush.bf16.msra.mxu0 0
    %967 = vmatpush.bf16.msra.mxu0 0
    %968 = vmatpush.bf16.msra.mxu0 0
    %969 = vmatpush.bf16.msra.mxu0 %v566
    %970 = vmatpush.bf16.msra.mxu0 %v565
    %971 = vmatmul.bf16.gmra.mxu0 %v961
    %v972 = vpop.f32.mrf.mxu0
    %v973 = vadd.f32 %v956, %v972
    %v974 = vpop.f32.mrf.mxu0
    %v975 = vadd.f32 %v958, %v974
    %976 = vdwg.mxu0
    %977 = vrot.lane.b32.xlu0 %v800, 64
    %v978 = vpop.permute.xlu0 %977
    %979 = vrot.lane.b32.xlu0 %v803, 64
    %v980 = vpop.permute.xlu0 %979
    %v982 = vsel %vm379, %v978, 0
    %v985 = vsel %vm379, %v980, 0
    %987 = vmatpush.bf16.xpose.msra.mxu0 0
    %988 = vmatpush.bf16.xpose.msra.mxu0 0
    %989 = vmatpush.bf16.xpose.msra.mxu0 0
    %990 = vmatpush.bf16.xpose.msra.mxu0 0
    %991 = vmatpush.bf16.xpose.msra.mxu0 0
    %992 = vmatpush.bf16.xpose.msra.mxu0 0
    %993 = vmatpush.bf16.xpose.msra.mxu0 0
    %994 = vmatpush.bf16.xpose.msra.mxu0 %v985
    %995 = vmatmul.bf16.gmra.mxu0 %v982
    %v996 = vpop.f32.mrf.mxu0
    %v997 = vadd.f32 0.0, %v996
    %v998 = vpop.f32.mrf.mxu0
    %v999 = vadd.f32 0.0, %v998
    %1000 = vdwg.mxu0
    %v1001 = vmul.f32 %v997, 0.17677669
    %v1002 = vmul.f32 %v999, 0.17677669
    %v1003 = vsel %vm402, %v1001, -inf
    %1004 = vmax.xlane.f32.xlu0 %v1003
    %v1005 = vpop.xlane.xlu0 %1004
    %v1006 = vsel %vm402, %v1002, -inf
    %1007 = vmax.xlane.f32.xlu0 %v1006
    %v1008 = vpop.xlane.xlu0 %1007
    %v1009 = vsub.f32 %v1001, %v1005
    %v1010 = vsub.f32 %v1002, %v1008
    %v1011 = vmul.f32 %v1009, 1.442695
    %v1012 = vpow.pop %v1011
    %v1013 = vmul.f32 %v1010, 1.442695
    %v1014 = vpow.pop %v1013
    %v1015 = vsel %vm402, %v1012, 0.0
    %1016 = vadd.xlane.f32.xlu0 %v1015
    %v1017 = vpop.xlane.xlu0 %1016
    %v1018 = vsel %vm402, %v1014, 0.0
    %1019 = vadd.xlane.f32.xlu0 %v1018
    %v1020 = vpop.xlane.xlu0 %1019
    %v1021 = vrcp.pop %v1017
    %v1022 = vrcp.pop %v1020
    %v1023 = vmul.f32 %v1012, %v1021
    %v1024 = vmul.f32 %v1014, %v1022
    %v1025 = vpack.c.bf16 %v1024, %v1023
    %1026 = vrot.lane.b32.xlu0 %v853, 64
    %v1027 = vpop.permute.xlu0 %1026
    %v1030 = vsel %vm402, %v1025, 0
    %1032 = vmatpush.bf16.msra.mxu0 0
    %1033 = vmatpush.bf16.msra.mxu0 0
    %1034 = vmatpush.bf16.msra.mxu0 0
    %1035 = vmatpush.bf16.msra.mxu0 0
    %1036 = vmatpush.bf16.msra.mxu0 0
    %1037 = vmatpush.bf16.msra.mxu0 0
    %1038 = vmatpush.bf16.msra.mxu0 0
    %1039 = vmatpush.bf16.msra.mxu0 %v1027
    %1040 = vmatmul.bf16.gmra.mxu0 %v1030
    %v1041 = vpop.f32.mrf.mxu0
    %v1042 = vadd.f32 0.0, %v1041
    %v1043 = vpop.f32.mrf.mxu0
    %v1044 = vadd.f32 0.0, %v1043
    %1045 = vdwg.mxu0
    %v1046 = vpack.c.bf16 %v1044, %v1042
    %v1048 = vsel %vm379, %v1046, 0
    %1050 = vmatpush.bf16.msra.mxu0 0
    %1051 = vmatpush.bf16.msra.mxu0 0
    %1052 = vmatpush.bf16.msra.mxu0 0
    %1053 = vmatpush.bf16.msra.mxu0 0
    %1054 = vmatpush.bf16.msra.mxu0 0
    %1055 = vmatpush.bf16.msra.mxu0 0
    %1056 = vmatpush.bf16.msra.mxu0 %v669
    %1057 = vmatpush.bf16.msra.mxu0 %v668
    %1058 = vmatmul.bf16.gmra.mxu0 %v1048
    %v1059 = vpop.f32.mrf.mxu0
    %v1060 = vadd.f32 0.0, %v1059
    %v1061 = vpop.f32.mrf.mxu0
    %v1062 = vadd.f32 0.0, %v1061
    %1063 = vdwg.mxu0
    %v1064 = vadd.f32 %v973, %v1060
    %v1065 = vadd.f32 %v975, %v1062
    %1066 = vrot.lane.b32.xlu0 %v800, 32
    %v1067 = vpop.permute.xlu0 %1066
    %1068 = vrot.lane.b32.xlu0 %v803, 32
    %v1069 = vpop.permute.xlu0 %1068
    %v1071 = vsel %vm379, %v1067, 0
    %v1074 = vsel %vm379, %v1069, 0
    %1076 = vmatpush.bf16.xpose.msra.mxu0 0
    %1077 = vmatpush.bf16.xpose.msra.mxu0 0
    %1078 = vmatpush.bf16.xpose.msra.mxu0 0
    %1079 = vmatpush.bf16.xpose.msra.mxu0 0
    %1080 = vmatpush.bf16.xpose.msra.mxu0 0
    %1081 = vmatpush.bf16.xpose.msra.mxu0 0
    %1082 = vmatpush.bf16.xpose.msra.mxu0 0
    %1083 = vmatpush.bf16.xpose.msra.mxu0 %v1074
    %1084 = vmatmul.bf16.gmra.mxu0 %v1071
    %v1085 = vpop.f32.mrf.mxu0
    %v1086 = vadd.f32 0.0, %v1085
    %v1087 = vpop.f32.mrf.mxu0
    %v1088 = vadd.f32 0.0, %v1087
    %1089 = vdwg.mxu0
    %v1090 = vmul.f32 %v1086, 0.17677669
    %v1091 = vmul.f32 %v1088, 0.17677669
    %v1092 = vsel %vm402, %v1090, -inf
    %1093 = vmax.xlane.f32.xlu0 %v1092
    %v1094 = vpop.xlane.xlu0 %1093
    %v1095 = vsel %vm402, %v1091, -inf
    %1096 = vmax.xlane.f32.xlu0 %v1095
    %v1097 = vpop.xlane.xlu0 %1096
    %v1098 = vsub.f32 %v1090, %v1094
    %v1099 = vsub.f32 %v1091, %v1097
    %v1100 = vmul.f32 %v1098, 1.442695
    %v1101 = vpow.pop %v1100
    %v1102 = vmul.f32 %v1099, 1.442695
    %v1103 = vpow.pop %v1102
    %v1104 = vsel %vm402, %v1101, 0.0
    %1105 = vadd.xlane.f32.xlu0 %v1104
    %v1106 = vpop.xlane.xlu0 %1105
    %v1107 = vsel %vm402, %v1103, 0.0
    %1108 = vadd.xlane.f32.xlu0 %v1107
    %v1109 = vpop.xlane.xlu0 %1108
    %v1110 = vrcp.pop %v1106
    %v1111 = vrcp.pop %v1109
    %v1112 = vmul.f32 %v1101, %v1110
    %v1113 = vmul.f32 %v1103, %v1111
    %v1114 = vpack.c.bf16 %v1113, %v1112
    %1115 = vrot.lane.b32.xlu0 %v853, 32
    %v1116 = vpop.permute.xlu0 %1115
    %v1119 = vsel %vm402, %v1114, 0
    %1121 = vmatpush.bf16.msra.mxu0 0
    %1122 = vmatpush.bf16.msra.mxu0 0
    %1123 = vmatpush.bf16.msra.mxu0 0
    %1124 = vmatpush.bf16.msra.mxu0 0
    %1125 = vmatpush.bf16.msra.mxu0 0
    %1126 = vmatpush.bf16.msra.mxu0 0
    %1127 = vmatpush.bf16.msra.mxu0 0
    %1128 = vmatpush.bf16.msra.mxu0 %v1116
    %1129 = vmatmul.bf16.gmra.mxu0 %v1119
    %v1130 = vpop.f32.mrf.mxu0
    %v1131 = vadd.f32 0.0, %v1130
    %v1132 = vpop.f32.mrf.mxu0
    %v1133 = vadd.f32 0.0, %v1132
    %1134 = vdwg.mxu0
    %v1135 = vpack.c.bf16 %v1133, %v1131
    %v1137 = vsel %vm379, %v1135, 0
    %1139 = vmatpush.bf16.msra.mxu0 0
    %1140 = vmatpush.bf16.msra.mxu0 0
    %1141 = vmatpush.bf16.msra.mxu0 0
    %1142 = vmatpush.bf16.msra.mxu0 0
    %1143 = vmatpush.bf16.msra.mxu0 0
    %1144 = vmatpush.bf16.msra.mxu0 0
    %1145 = vmatpush.bf16.msra.mxu0 %v774
    %1146 = vmatpush.bf16.msra.mxu0 %v773
    %1147 = vmatmul.bf16.gmra.mxu0 %v1137
    %v1148 = vpop.f32.mrf.mxu0
    %v1149 = vadd.f32 0.0, %v1148
    %v1150 = vpop.f32.mrf.mxu0
    %v1151 = vadd.f32 0.0, %v1150
    %1152 = vdwg.mxu0
    %v1153 = vadd.f32 %v1064, %v1149
    %v1154 = vadd.f32 %v1065, %v1151
    %v1155 = vld [vmem:[%s4] sm:$0x1]
    %v1157 = vperm.slane %v1155, 0
    %v1159 = vadd.f32 %v794, %v1157
    %v1160 = vadd.f32 %v795, %v1157
    %v1161 = vadd.f32 %v1153, %v1157
    %v1162 = vadd.f32 %v1154, %v1157
    %v1163 = vld [vmem:[%s5] sm:$0x1]
    %v1164 = vld [vmem:[%s6] sm:$0x1]
    %v1165 = vadd.f32 %v1159, %v132
    %v1166 = vadd.f32 %v1160, %v133
    %v1167 = vadd.f32 %v1161, %v134
    %v1168 = vadd.f32 %v1162, %v135
    %1169 = vadd.xlane.f32.xlu0 %v1165
    %v1170 = vpop.xlane.xlu0 %1169
    %1171 = vadd.xlane.f32.xlu0 %v1166
    %v1172 = vpop.xlane.xlu0 %1171
    %1173 = vadd.xlane.f32.xlu0 %v1167
    %v1174 = vpop.xlane.xlu0 %1173
    %1175 = vadd.xlane.f32.xlu0 %v1168
    %v1176 = vpop.xlane.xlu0 %1175
    %v1177 = vrcp.pop 128.0
    %v1178 = vmul.f32 128.0, %v1177
    %v1179 = vsub.f32 1.0, %v1178
    %v1180 = vmul.f32 %v1177, %v1179
    %v1181 = vadd.f32 %v1177, %v1180
    %vm1182 = vweird.f32 %v1177
    %v1183 = vsel %vm1182, %v1177, %v1181
    %v1184 = vmul.f32 %v1170, %v1183
    %v1185 = vmul.f32 %v1172, %v1183
    %v1186 = vmul.f32 %v1174, %v1183
    %v1187 = vmul.f32 %v1176, %v1183
    %v1188 = vsub.f32 %v1165, %v1184
    %v1189 = vsub.f32 %v1166, %v1185
    %v1190 = vsub.f32 %v1167, %v1186
    %v1191 = vsub.f32 %v1168, %v1187
    %v1192 = vmul.f32 %v1188, %v1188
    %v1193 = vmul.f32 %v1189, %v1189
    %v1194 = vmul.f32 %v1190, %v1190
    %v1195 = vmul.f32 %v1191, %v1191
    %1196 = vadd.xlane.f32.xlu0 %v1192
    %v1197 = vpop.xlane.xlu0 %1196
    %1198 = vadd.xlane.f32.xlu0 %v1193
    %v1199 = vpop.xlane.xlu0 %1198
    %1200 = vadd.xlane.f32.xlu0 %v1194
    %v1201 = vpop.xlane.xlu0 %1200
    %1202 = vadd.xlane.f32.xlu0 %v1195
    %v1203 = vpop.xlane.xlu0 %1202
    %v1204 = vmul.f32 %v1197, %v1183
    %v1205 = vmul.f32 %v1199, %v1183
    %v1206 = vmul.f32 %v1201, %v1183
    %v1207 = vmul.f32 %v1203, %v1183
    %v1208 = vadd.f32 %v1204, 1e-05
    %v1209 = vadd.f32 %v1205, 1e-05
    %v1210 = vadd.f32 %v1206, 1e-05
    %v1211 = vadd.f32 %v1207, 1e-05
    %v1212 = vrsqrt.pop %v1208
    %v1213 = vmul.f32 %v1212, %v1208
    %v1214 = vmul.f32 %v1213, %v1212
    %v1215 = vmul.f32 0.5, %v1214
    %v1216 = vsub.f32 1.5, %v1215
    %v1217 = vmul.f32 %v1212, %v1216
    %vm1218 = vweird.f32 %v1208
    %vm1219 = vweird.f32 %v1212
    %vm1220 = vmor %vm1218, %vm1219
    %v1221 = vsel %vm1220, %v1212, %v1217
    %v1222 = vrsqrt.pop %v1209
    %v1223 = vmul.f32 %v1222, %v1209
    %v1224 = vmul.f32 %v1223, %v1222
    %v1225 = vmul.f32 0.5, %v1224
    %v1226 = vsub.f32 1.5, %v1225
    %v1227 = vmul.f32 %v1222, %v1226
    %vm1228 = vweird.f32 %v1209
    %vm1229 = vweird.f32 %v1222
    %vm1230 = vmor %vm1228, %vm1229
    %v1231 = vsel %vm1230, %v1222, %v1227
    %v1232 = vrsqrt.pop %v1210
    %v1233 = vmul.f32 %v1232, %v1210
    %v1234 = vmul.f32 %v1233, %v1232
    %v1235 = vmul.f32 0.5, %v1234
    %v1236 = vsub.f32 1.5, %v1235
    %v1237 = vmul.f32 %v1232, %v1236
    %vm1238 = vweird.f32 %v1210
    %vm1239 = vweird.f32 %v1232
    %vm1240 = vmor %vm1238, %vm1239
    %v1241 = vsel %vm1240, %v1232, %v1237
    %v1242 = vrsqrt.pop %v1211
    %v1243 = vmul.f32 %v1242, %v1211
    %v1244 = vmul.f32 %v1243, %v1242
    %v1245 = vmul.f32 0.5, %v1244
    %v1246 = vsub.f32 1.5, %v1245
    %v1247 = vmul.f32 %v1242, %v1246
    %vm1248 = vweird.f32 %v1211
    %vm1249 = vweird.f32 %v1242
    %vm1250 = vmor %vm1248, %vm1249
    %v1251 = vsel %vm1250, %v1242, %v1247
    %v1252 = vmul.f32 %v1188, %v1221
    %v1253 = vmul.f32 %v1189, %v1231
    %v1254 = vmul.f32 %v1190, %v1241
    %v1255 = vmul.f32 %v1191, %v1251
    %v1257 = vperm.slane %v1163, 0
    %v1259 = vmul.f32 %v1252, %v1257
    %v1260 = vmul.f32 %v1253, %v1257
    %v1261 = vmul.f32 %v1254, %v1257
    %v1262 = vmul.f32 %v1255, %v1257
    %v1264 = vperm.slane %v1164, 0
    %v1266 = vadd.f32 %v1259, %v1264
    %v1267 = vadd.f32 %v1260, %v1264
    %v1268 = vadd.f32 %v1261, %v1264
    %v1269 = vadd.f32 %v1262, %v1264
    %v1270 = vpack.c.bf16 %v1267, %v1266
    %v1271 = vpack.c.bf16 %v1269, %v1268
    %v1272 = vld [vmem:[#allocation10] sm:$0xff]
    %v1273 = vld [vmem:[#allocation10 + $0x8] sm:$0xff]
    %v1274 = vld [vmem:[#allocation10 + $0x10] sm:$0xff]
    %v1275 = vld [vmem:[#allocation10 + $0x18] sm:$0xff]
    %v1276 = vld [vmem:[#allocation10 + $0x20] sm:$0xff]
    %v1277 = vld [vmem:[#allocation10 + $0x28] sm:$0xff]
    %v1278 = vld [vmem:[#allocation10 + $0x30] sm:$0xff]
    %v1279 = vld [vmem:[#allocation10 + $0x38] sm:$0xff]
    %v1280 = vld [vmem:[#allocation10 + $0x40] sm:$0xff]
    %v1281 = vld [vmem:[#allocation10 + $0x48] sm:$0xff]
    %v1282 = vld [vmem:[#allocation10 + $0x50] sm:$0xff]
    %v1283 = vld [vmem:[#allocation10 + $0x58] sm:$0xff]
    %v1284 = vld [vmem:[#allocation10 + $0x60] sm:$0xff]
    %v1285 = vld [vmem:[#allocation10 + $0x68] sm:$0xff]
    %v1286 = vld [vmem:[#allocation10 + $0x70] sm:$0xff]
    %v1287 = vld [vmem:[#allocation10 + $0x78] sm:$0xff]
    %v1288 = vld [vmem:[#allocation10 + $0x80] sm:$0xff]
    %v1289 = vld [vmem:[#allocation10 + $0x88] sm:$0xff]
    %v1290 = vld [vmem:[#allocation10 + $0x90] sm:$0xff]
    %v1291 = vld [vmem:[#allocation10 + $0x98] sm:$0xff]
    %v1292 = vld [vmem:[#allocation10 + $0xa0] sm:$0xff]
    %v1293 = vld [vmem:[#allocation10 + $0xa8] sm:$0xff]
    %v1294 = vld [vmem:[#allocation10 + $0xb0] sm:$0xff]
    %v1295 = vld [vmem:[#allocation10 + $0xb8] sm:$0xff]
    %v1296 = vld [vmem:[#allocation10 + $0xc0] sm:$0xff]
    %v1297 = vld [vmem:[#allocation10 + $0xc8] sm:$0xff]
    %v1298 = vld [vmem:[#allocation10 + $0xd0] sm:$0xff]
    %v1299 = vld [vmem:[#allocation10 + $0xd8] sm:$0xff]
    %v1300 = vld [vmem:[#allocation10 + $0xe0] sm:$0xff]
    %v1301 = vld [vmem:[#allocation10 + $0xe8] sm:$0xff]
    %v1302 = vld [vmem:[#allocation10 + $0xf0] sm:$0xff]
    %v1303 = vld [vmem:[#allocation10 + $0xf8] sm:$0xff]
    %v1304 = vld [vmem:[%s8] sm:$0xf]
    %v1306 = vperm.slane %v1304, 0
    %v1307 = vperm.slane %v1304, 1
    %v1308 = vperm.slane %v1304, 2
    %v1309 = vperm.slane %v1304, 3
    %v1346 = vunpack.c.l.b16 %v1272
    %v1347 = vunpack.c.h.b16 %v1272
    %v1348 = vunpack.c.l.b16 %v1273
    %v1349 = vunpack.c.h.b16 %v1273
    %v1350 = vunpack.c.l.b16 %v1274
    %v1351 = vunpack.c.h.b16 %v1274
    %v1352 = vunpack.c.l.b16 %v1275
    %v1353 = vunpack.c.h.b16 %v1275
    %v1354 = vunpack.c.l.b16 %v1276
    %v1355 = vunpack.c.h.b16 %v1276
    %v1356 = vunpack.c.l.b16 %v1277
    %v1357 = vunpack.c.h.b16 %v1277
    %v1358 = vunpack.c.l.b16 %v1278
    %v1359 = vunpack.c.h.b16 %v1278
    %v1360 = vunpack.c.l.b16 %v1279
    %v1361 = vunpack.c.h.b16 %v1279
    %v1362 = vunpack.c.l.b16 %v1280
    %v1363 = vunpack.c.h.b16 %v1280
    %v1364 = vunpack.c.l.b16 %v1281
    %v1365 = vunpack.c.h.b16 %v1281
    %v1366 = vunpack.c.l.b16 %v1282
    %v1367 = vunpack.c.h.b16 %v1282
    %v1368 = vunpack.c.l.b16 %v1283
    %v1369 = vunpack.c.h.b16 %v1283
    %v1370 = vunpack.c.l.b16 %v1284
    %v1371 = vunpack.c.h.b16 %v1284
    %v1372 = vunpack.c.l.b16 %v1285
    %v1373 = vunpack.c.h.b16 %v1285
    %v1374 = vunpack.c.l.b16 %v1286
    %v1375 = vunpack.c.h.b16 %v1286
    %v1376 = vunpack.c.l.b16 %v1287
    %v1377 = vunpack.c.h.b16 %v1287
    %v1378 = vunpack.c.l.b16 %v1288
    %v1379 = vunpack.c.h.b16 %v1288
    %v1380 = vunpack.c.l.b16 %v1289
    %v1381 = vunpack.c.h.b16 %v1289
    %v1382 = vunpack.c.l.b16 %v1290
    %v1383 = vunpack.c.h.b16 %v1290
    %v1384 = vunpack.c.l.b16 %v1291
    %v1385 = vunpack.c.h.b16 %v1291
    %v1386 = vunpack.c.l.b16 %v1292
    %v1387 = vunpack.c.h.b16 %v1292
    %v1388 = vunpack.c.l.b16 %v1293
    %v1389 = vunpack.c.h.b16 %v1293
    %v1390 = vunpack.c.l.b16 %v1294
    %v1391 = vunpack.c.h.b16 %v1294
    %v1392 = vunpack.c.l.b16 %v1295
    %v1393 = vunpack.c.h.b16 %v1295
    %v1394 = vunpack.c.l.b16 %v1296
    %v1395 = vunpack.c.h.b16 %v1296
    %v1396 = vunpack.c.l.b16 %v1297
    %v1397 = vunpack.c.h.b16 %v1297
    %v1398 = vunpack.c.l.b16 %v1298
    %v1399 = vunpack.c.h.b16 %v1298
    %v1400 = vunpack.c.l.b16 %v1299
    %v1401 = vunpack.c.h.b16 %v1299
    %v1402 = vunpack.c.l.b16 %v1300
    %v1403 = vunpack.c.h.b16 %v1300
    %v1404 = vunpack.c.l.b16 %v1301
    %v1405 = vunpack.c.h.b16 %v1301
    %v1406 = vunpack.c.l.b16 %v1302
    %v1407 = vunpack.c.h.b16 %v1302
    %v1408 = vunpack.c.l.b16 %v1303
    %v1409 = vunpack.c.h.b16 %v1303
    %v1410 = vpack.c.b16 %v1350, %v1346
    %v1411 = vpack.c.b16 %v1351, %v1347
    %v1412 = vpack.c.b16 %v1352, %v1348
    %v1413 = vpack.c.b16 %v1353, %v1349
    %v1414 = vpack.c.b16 %v1358, %v1354
    %v1415 = vpack.c.b16 %v1359, %v1355
    %v1416 = vpack.c.b16 %v1360, %v1356
    %v1417 = vpack.c.b16 %v1361, %v1357
    %v1418 = vpack.c.b16 %v1366, %v1362
    %v1419 = vpack.c.b16 %v1367, %v1363
    %v1420 = vpack.c.b16 %v1368, %v1364
    %v1421 = vpack.c.b16 %v1369, %v1365
    %v1422 = vpack.c.b16 %v1374, %v1370
    %v1423 = vpack.c.b16 %v1375, %v1371
    %v1424 = vpack.c.b16 %v1376, %v1372
    %v1425 = vpack.c.b16 %v1377, %v1373
    %v1426 = vpack.c.b16 %v1382, %v1378
    %v1427 = vpack.c.b16 %v1383, %v1379
    %v1428 = vpack.c.b16 %v1384, %v1380
    %v1429 = vpack.c.b16 %v1385, %v1381
    %v1430 = vpack.c.b16 %v1390, %v1386
    %v1431 = vpack.c.b16 %v1391, %v1387
    %v1432 = vpack.c.b16 %v1392, %v1388
    %v1433 = vpack.c.b16 %v1393, %v1389
    %v1434 = vpack.c.b16 %v1398, %v1394
    %v1435 = vpack.c.b16 %v1399, %v1395
    %v1436 = vpack.c.b16 %v1400, %v1396
    %v1437 = vpack.c.b16 %v1401, %v1397
    %v1438 = vpack.c.b16 %v1406, %v1402
    %v1439 = vpack.c.b16 %v1407, %v1403
    %v1440 = vpack.c.b16 %v1408, %v1404
    %v1441 = vpack.c.b16 %v1409, %v1405
    %1474 = vmatpush.bf16.msra.mxu0 %v1438
    %1475 = vmatpush.bf16.msra.mxu0 %v1434
    %1476 = vmatpush.bf16.msra.mxu0 %v1430
    %1477 = vmatpush.bf16.msra.mxu0 %v1426
    %1478 = vmatpush.bf16.msra.mxu0 %v1422
    %1479 = vmatpush.bf16.msra.mxu0 %v1418
    %1480 = vmatpush.bf16.msra.mxu0 %v1414
    %1481 = vmatpush.bf16.msra.mxu0 %v1410
    %1482 = vmatmul.bf16.gmra.mxu0 %v1270
    %v1483 = vpop.f32.mrf.mxu0
    %v1484 = vadd.f32 %v1306, %v1483
    %v1485 = vpop.f32.mrf.mxu0
    %v1486 = vadd.f32 %v1306, %v1485
    %1487 = vmatmul.bf16.gmra.mxu0 %v1271
    %v1488 = vpop.f32.mrf.mxu0
    %v1489 = vadd.f32 %v1306, %v1488
    %v1490 = vpop.f32.mrf.mxu0
    %v1491 = vadd.f32 %v1306, %v1490
    %1492 = vdwg.mxu0
    %1493 = vmatpush.bf16.msra.mxu0 %v1439
    %1494 = vmatpush.bf16.msra.mxu0 %v1435
    %1495 = vmatpush.bf16.msra.mxu0 %v1431
    %1496 = vmatpush.bf16.msra.mxu0 %v1427
    %1497 = vmatpush.bf16.msra.mxu0 %v1423
    %1498 = vmatpush.bf16.msra.mxu0 %v1419
    %1499 = vmatpush.bf16.msra.mxu0 %v1415
    %1500 = vmatpush.bf16.msra.mxu0 %v1411
    %1501 = vmatmul.bf16.gmra.mxu0 %v1270
    %v1502 = vpop.f32.mrf.mxu0
    %v1503 = vadd.f32 %v1307, %v1502
    %v1504 = vpop.f32.mrf.mxu0
    %v1505 = vadd.f32 %v1307, %v1504
    %1506 = vmatmul.bf16.gmra.mxu0 %v1271
    %v1507 = vpop.f32.mrf.mxu0
    %v1508 = vadd.f32 %v1307, %v1507
    %v1509 = vpop.f32.mrf.mxu0
    %v1510 = vadd.f32 %v1307, %v1509
    %1511 = vdwg.mxu0
    %1512 = vmatpush.bf16.msra.mxu0 %v1440
    %1513 = vmatpush.bf16.msra.mxu0 %v1436
    %1514 = vmatpush.bf16.msra.mxu0 %v1432
    %1515 = vmatpush.bf16.msra.mxu0 %v1428
    %1516 = vmatpush.bf16.msra.mxu0 %v1424
    %1517 = vmatpush.bf16.msra.mxu0 %v1420
    %1518 = vmatpush.bf16.msra.mxu0 %v1416
    %1519 = vmatpush.bf16.msra.mxu0 %v1412
    %1520 = vmatmul.bf16.gmra.mxu0 %v1270
    %v1521 = vpop.f32.mrf.mxu0
    %v1522 = vadd.f32 %v1308, %v1521
    %v1523 = vpop.f32.mrf.mxu0
    %v1524 = vadd.f32 %v1308, %v1523
    %1525 = vmatmul.bf16.gmra.mxu0 %v1271
    %v1526 = vpop.f32.mrf.mxu0
    %v1527 = vadd.f32 %v1308, %v1526
    %v1528 = vpop.f32.mrf.mxu0
    %v1529 = vadd.f32 %v1308, %v1528
    %1530 = vdwg.mxu0
    %1531 = vmatpush.bf16.msra.mxu0 %v1441
    %1532 = vmatpush.bf16.msra.mxu0 %v1437
    %1533 = vmatpush.bf16.msra.mxu0 %v1433
    %1534 = vmatpush.bf16.msra.mxu0 %v1429
    %1535 = vmatpush.bf16.msra.mxu0 %v1425
    %1536 = vmatpush.bf16.msra.mxu0 %v1421
    %1537 = vmatpush.bf16.msra.mxu0 %v1417
    %1538 = vmatpush.bf16.msra.mxu0 %v1413
    %1539 = vmatmul.bf16.gmra.mxu0 %v1270
    %v1540 = vpop.f32.mrf.mxu0
    %v1541 = vadd.f32 %v1309, %v1540
    %v1542 = vpop.f32.mrf.mxu0
    %v1543 = vadd.f32 %v1309, %v1542
    %1544 = vmatmul.bf16.gmra.mxu0 %v1271
    %v1545 = vpop.f32.mrf.mxu0
    %v1546 = vadd.f32 %v1309, %v1545
    %v1547 = vpop.f32.mrf.mxu0
    %v1548 = vadd.f32 %v1309, %v1547
    %1549 = vdwg.mxu0
    %v1550 = vmul.f32 %v1484, 0.5
    %v1551 = vmul.f32 %v1503, 0.5
    %v1552 = vmul.f32 %v1522, 0.5
    %v1553 = vmul.f32 %v1541, 0.5
    %v1554 = vmul.f32 %v1486, 0.5
    %v1555 = vmul.f32 %v1505, 0.5
    %v1556 = vmul.f32 %v1524, 0.5
    %v1557 = vmul.f32 %v1543, 0.5
    %v1558 = vmul.f32 %v1489, 0.5
    %v1559 = vmul.f32 %v1508, 0.5
    %v1560 = vmul.f32 %v1527, 0.5
    %v1561 = vmul.f32 %v1546, 0.5
    %v1562 = vmul.f32 %v1491, 0.5
    %v1563 = vmul.f32 %v1510, 0.5
    %v1564 = vmul.f32 %v1529, 0.5
    %v1565 = vmul.f32 %v1548, 0.5
    %v1566 = vmul.f32 %v1484, 0.70710677
    %v1567 = vmul.f32 %v1503, 0.70710677
    %v1568 = vmul.f32 %v1522, 0.70710677
    %v1569 = vmul.f32 %v1541, 0.70710677
    %v1570 = vmul.f32 %v1486, 0.70710677
    %v1571 = vmul.f32 %v1505, 0.70710677
    %v1572 = vmul.f32 %v1524, 0.70710677
    %v1573 = vmul.f32 %v1543, 0.70710677
    %v1574 = vmul.f32 %v1489, 0.70710677
    %v1575 = vmul.f32 %v1508, 0.70710677
    %v1576 = vmul.f32 %v1527, 0.70710677
    %v1577 = vmul.f32 %v1546, 0.70710677
    %v1578 = vmul.f32 %v1491, 0.70710677
    %v1579 = vmul.f32 %v1510, 0.70710677
    %v1580 = vmul.f32 %v1529, 0.70710677
    %v1581 = vmul.f32 %v1548, 0.70710677
    %v1582 = vmul.f32 %v1566, %v1566
    %v1583 = vmin.f32 16.0, %v1582
    %v1584 = vmul.f32 %v1583, 2.1237322e-06
    %v1585 = vadd.f32 %v1584, 0.00028619796
    %v1586 = vmul.f32 %v1583, %v1585
    %v1587 = vadd.f32 %v1586, 0.0036580483
    %v1588 = vmul.f32 %v1583, %v1587
    %v1589 = vadd.f32 %v1588, 0.05243302
    %v1590 = vmul.f32 %v1583, %v1589
    %v1591 = vadd.f32 %v1590, 0.18741608
    %v1592 = vmul.f32 %v1583, %v1591
    %v1593 = vadd.f32 %v1592, 1.1283791
    %v1594 = vmul.f32 %v1566, %v1593
    %v1595 = vmul.f32 %v1583, 3.8918573e-05
    %v1596 = vadd.f32 %v1595, 0.001143296
    %v1597 = vmul.f32 %v1583, %v1596
    %v1598 = vadd.f32 %v1597, 0.014752088
    %v1599 = vmul.f32 %v1583, %v1598
    %v1600 = vadd.f32 %v1599, 0.112945676
    %v1601 = vmul.f32 %v1583, %v1600
    %v1602 = vadd.f32 %v1601, 0.4994258
    %v1603 = vmul.f32 %v1583, %v1602
    %v1604 = vadd.f32 %v1603, 1.0
    %v1605 = vrcp.pop %v1604
    %v1606 = vmul.f32 %v1604, %v1605
    %v1607 = vsub.f32 1.0, %v1606
    %v1608 = vmul.f32 %v1605, %v1607
    %v1609 = vadd.f32 %v1605, %v1608
    %vm1610 = vweird.f32 %v1604
    %vm1611 = vweird.f32 %v1605
    %vm1612 = vmor %vm1610, %vm1611
    %v1613 = vsel %vm1612, %v1605, %v1609
    %v1614 = vand.u32 2147483647, %v1604
    %vm1615 = vcmp.eq.f32.partialorder %v1614, 8.507059e+37
    %v1616 = vand.u32 %v1604, 2147483648
    %v1617 = vor.u32 1.1754944e-38, %v1616
    %v1618 = vsel %vm1615, %v1617, %v1613
    %v1619 = vmul.f32 %v1594, %v1618
    %v1620 = vmin.f32 %v1619, 1.0
    %v1621 = vmax.f32 %v1620, -1.0
    %v1622 = vmul.f32 %v1567, %v1567
    %v1623 = vmin.f32 16.0, %v1622
    %v1624 = vmul.f32 %v1623, 2.1237322e-06
    %v1625 = vadd.f32 %v1624, 0.00028619796
    %v1626 = vmul.f32 %v1623, %v1625
    %v1627 = vadd.f32 %v1626, 0.0036580483
    %v1628 = vmul.f32 %v1623, %v1627
    %v1629 = vadd.f32 %v1628, 0.05243302
    %v1630 = vmul.f32 %v1623, %v1629
    %v1631 = vadd.f32 %v1630, 0.18741608
    %v1632 = vmul.f32 %v1623, %v1631
    %v1633 = vadd.f32 %v1632, 1.1283791
    %v1634 = vmul.f32 %v1567, %v1633
    %v1635 = vmul.f32 %v1623, 3.8918573e-05
    %v1636 = vadd.f32 %v1635, 0.001143296
    %v1637 = vmul.f32 %v1623, %v1636
    %v1638 = vadd.f32 %v1637, 0.014752088
    %v1639 = vmul.f32 %v1623, %v1638
    %v1640 = vadd.f32 %v1639, 0.112945676
    %v1641 = vmul.f32 %v1623, %v1640
    %v1642 = vadd.f32 %v1641, 0.4994258
    %v1643 = vmul.f32 %v1623, %v1642
    %v1644 = vadd.f32 %v1643, 1.0
    %v1645 = vrcp.pop %v1644
    %v1646 = vmul.f32 %v1644, %v1645
    %v1647 = vsub.f32 1.0, %v1646
    %v1648 = vmul.f32 %v1645, %v1647
    %v1649 = vadd.f32 %v1645, %v1648
    %vm1650 = vweird.f32 %v1644
    %vm1651 = vweird.f32 %v1645
    %vm1652 = vmor %vm1650, %vm1651
    %v1653 = vsel %vm1652, %v1645, %v1649
    %v1654 = vand.u32 2147483647, %v1644
    %vm1655 = vcmp.eq.f32.partialorder %v1654, 8.507059e+37
    %v1656 = vand.u32 %v1644, 2147483648
    %v1657 = vor.u32 1.1754944e-38, %v1656
    %v1658 = vsel %vm1655, %v1657, %v1653
    %v1659 = vmul.f32 %v1634, %v1658
    %v1660 = vmin.f32 %v1659, 1.0
    %v1661 = vmax.f32 %v1660, -1.0
    %v1662 = vmul.f32 %v1568, %v1568
    %v1663 = vmin.f32 16.0, %v1662
    %v1664 = vmul.f32 %v1663, 2.1237322e-06
    %v1665 = vadd.f32 %v1664, 0.00028619796
    %v1666 = vmul.f32 %v1663, %v1665
    %v1667 = vadd.f32 %v1666, 0.0036580483
    %v1668 = vmul.f32 %v1663, %v1667
    %v1669 = vadd.f32 %v1668, 0.05243302
    %v1670 = vmul.f32 %v1663, %v1669
    %v1671 = vadd.f32 %v1670, 0.18741608
    %v1672 = vmul.f32 %v1663, %v1671
    %v1673 = vadd.f32 %v1672, 1.1283791
    %v1674 = vmul.f32 %v1568, %v1673
    %v1675 = vmul.f32 %v1663, 3.8918573e-05
    %v1676 = vadd.f32 %v1675, 0.001143296
    %v1677 = vmul.f32 %v1663, %v1676
    %v1678 = vadd.f32 %v1677, 0.014752088
    %v1679 = vmul.f32 %v1663, %v1678
    %v1680 = vadd.f32 %v1679, 0.112945676
    %v1681 = vmul.f32 %v1663, %v1680
    %v1682 = vadd.f32 %v1681, 0.4994258
    %v1683 = vmul.f32 %v1663, %v1682
    %v1684 = vadd.f32 %v1683, 1.0
    %v1685 = vrcp.pop %v1684
    %v1686 = vmul.f32 %v1684, %v1685
    %v1687 = vsub.f32 1.0, %v1686
    %v1688 = vmul.f32 %v1685, %v1687
    %v1689 = vadd.f32 %v1685, %v1688
    %vm1690 = vweird.f32 %v1684
    %vm1691 = vweird.f32 %v1685
    %vm1692 = vmor %vm1690, %vm1691
    %v1693 = vsel %vm1692, %v1685, %v1689
    %v1694 = vand.u32 2147483647, %v1684
    %vm1695 = vcmp.eq.f32.partialorder %v1694, 8.507059e+37
    %v1696 = vand.u32 %v1684, 2147483648
    %v1697 = vor.u32 1.1754944e-38, %v1696
    %v1698 = vsel %vm1695, %v1697, %v1693
    %v1699 = vmul.f32 %v1674, %v1698
    %v1700 = vmin.f32 %v1699, 1.0
    %v1701 = vmax.f32 %v1700, -1.0
    %v1702 = vmul.f32 %v1569, %v1569
    %v1703 = vmin.f32 16.0, %v1702
    %v1704 = vmul.f32 %v1703, 2.1237322e-06
    %v1705 = vadd.f32 %v1704, 0.00028619796
    %v1706 = vmul.f32 %v1703, %v1705
    %v1707 = vadd.f32 %v1706, 0.0036580483
    %v1708 = vmul.f32 %v1703, %v1707
    %v1709 = vadd.f32 %v1708, 0.05243302
    %v1710 = vmul.f32 %v1703, %v1709
    %v1711 = vadd.f32 %v1710, 0.18741608
    %v1712 = vmul.f32 %v1703, %v1711
    %v1713 = vadd.f32 %v1712, 1.1283791
    %v1714 = vmul.f32 %v1569, %v1713
    %v1715 = vmul.f32 %v1703, 3.8918573e-05
    %v1716 = vadd.f32 %v1715, 0.001143296
    %v1717 = vmul.f32 %v1703, %v1716
    %v1718 = vadd.f32 %v1717, 0.014752088
    %v1719 = vmul.f32 %v1703, %v1718
    %v1720 = vadd.f32 %v1719, 0.112945676
    %v1721 = vmul.f32 %v1703, %v1720
    %v1722 = vadd.f32 %v1721, 0.4994258
    %v1723 = vmul.f32 %v1703, %v1722
    %v1724 = vadd.f32 %v1723, 1.0
    %v1725 = vrcp.pop %v1724
    %v1726 = vmul.f32 %v1724, %v1725
    %v1727 = vsub.f32 1.0, %v1726
    %v1728 = vmul.f32 %v1725, %v1727
    %v1729 = vadd.f32 %v1725, %v1728
    %vm1730 = vweird.f32 %v1724
    %vm1731 = vweird.f32 %v1725
    %vm1732 = vmor %vm1730, %vm1731
    %v1733 = vsel %vm1732, %v1725, %v1729
    %v1734 = vand.u32 2147483647, %v1724
    %vm1735 = vcmp.eq.f32.partialorder %v1734, 8.507059e+37
    %v1736 = vand.u32 %v1724, 2147483648
    %v1737 = vor.u32 1.1754944e-38, %v1736
    %v1738 = vsel %vm1735, %v1737, %v1733
    %v1739 = vmul.f32 %v1714, %v1738
    %v1740 = vmin.f32 %v1739, 1.0
    %v1741 = vmax.f32 %v1740, -1.0
    %v1742 = vmul.f32 %v1570, %v1570
    %v1743 = vmin.f32 16.0, %v1742
    %v1744 = vmul.f32 %v1743, 2.1237322e-06
    %v1745 = vadd.f32 %v1744, 0.00028619796
    %v1746 = vmul.f32 %v1743, %v1745
    %v1747 = vadd.f32 %v1746, 0.0036580483
    %v1748 = vmul.f32 %v1743, %v1747
    %v1749 = vadd.f32 %v1748, 0.05243302
    %v1750 = vmul.f32 %v1743, %v1749
    %v1751 = vadd.f32 %v1750, 0.18741608
    %v1752 = vmul.f32 %v1743, %v1751
    %v1753 = vadd.f32 %v1752, 1.1283791
    %v1754 = vmul.f32 %v1570, %v1753
    %v1755 = vmul.f32 %v1743, 3.8918573e-05
    %v1756 = vadd.f32 %v1755, 0.001143296
    %v1757 = vmul.f32 %v1743, %v1756
    %v1758 = vadd.f32 %v1757, 0.014752088
    %v1759 = vmul.f32 %v1743, %v1758
    %v1760 = vadd.f32 %v1759, 0.112945676
    %v1761 = vmul.f32 %v1743, %v1760
    %v1762 = vadd.f32 %v1761, 0.4994258
    %v1763 = vmul.f32 %v1743, %v1762
    %v1764 = vadd.f32 %v1763, 1.0
    %v1765 = vrcp.pop %v1764
    %v1766 = vmul.f32 %v1764, %v1765
    %v1767 = vsub.f32 1.0, %v1766
    %v1768 = vmul.f32 %v1765, %v1767
    %v1769 = vadd.f32 %v1765, %v1768
    %vm1770 = vweird.f32 %v1764
    %vm1771 = vweird.f32 %v1765
    %vm1772 = vmor %vm1770, %vm1771
    %v1773 = vsel %vm1772, %v1765, %v1769
    %v1774 = vand.u32 2147483647, %v1764
    %vm1775 = vcmp.eq.f32.partialorder %v1774, 8.507059e+37
    %v1776 = vand.u32 %v1764, 2147483648
    %v1777 = vor.u32 1.1754944e-38, %v1776
    %v1778 = vsel %vm1775, %v1777, %v1773
    %v1779 = vmul.f32 %v1754, %v1778
    %v1780 = vmin.f32 %v1779, 1.0
    %v1781 = vmax.f32 %v1780, -1.0
    %v1782 = vmul.f32 %v1571, %v1571
    %v1783 = vmin.f32 16.0, %v1782
    %v1784 = vmul.f32 %v1783, 2.1237322e-06
    %v1785 = vadd.f32 %v1784, 0.00028619796
    %v1786 = vmul.f32 %v1783, %v1785
    %v1787 = vadd.f32 %v1786, 0.0036580483
    %v1788 = vmul.f32 %v1783, %v1787
    %v1789 = vadd.f32 %v1788, 0.05243302
    %v1790 = vmul.f32 %v1783, %v1789
    %v1791 = vadd.f32 %v1790, 0.18741608
    %v1792 = vmul.f32 %v1783, %v1791
    %v1793 = vadd.f32 %v1792, 1.1283791
    %v1794 = vmul.f32 %v1571, %v1793
    %v1795 = vmul.f32 %v1783, 3.8918573e-05
    %v1796 = vadd.f32 %v1795, 0.001143296
    %v1797 = vmul.f32 %v1783, %v1796
    %v1798 = vadd.f32 %v1797, 0.014752088
    %v1799 = vmul.f32 %v1783, %v1798
    %v1800 = vadd.f32 %v1799, 0.112945676
    %v1801 = vmul.f32 %v1783, %v1800
    %v1802 = vadd.f32 %v1801, 0.4994258
    %v1803 = vmul.f32 %v1783, %v1802
    %v1804 = vadd.f32 %v1803, 1.0
    %v1805 = vrcp.pop %v1804
    %v1806 = vmul.f32 %v1804, %v1805
    %v1807 = vsub.f32 1.0, %v1806
    %v1808 = vmul.f32 %v1805, %v1807
    %v1809 = vadd.f32 %v1805, %v1808
    %vm1810 = vweird.f32 %v1804
    %vm1811 = vweird.f32 %v1805
    %vm1812 = vmor %vm1810, %vm1811
    %v1813 = vsel %vm1812, %v1805, %v1809
    %v1814 = vand.u32 2147483647, %v1804
    %vm1815 = vcmp.eq.f32.partialorder %v1814, 8.507059e+37
    %v1816 = vand.u32 %v1804, 2147483648
    %v1817 = vor.u32 1.1754944e-38, %v1816
    %v1818 = vsel %vm1815, %v1817, %v1813
    %v1819 = vmul.f32 %v1794, %v1818
    %v1820 = vmin.f32 %v1819, 1.0
    %v1821 = vmax.f32 %v1820, -1.0
    %v1822 = vmul.f32 %v1572, %v1572
    %v1823 = vmin.f32 16.0, %v1822
    %v1824 = vmul.f32 %v1823, 2.1237322e-06
    %v1825 = vadd.f32 %v1824, 0.00028619796
    %v1826 = vmul.f32 %v1823, %v1825
    %v1827 = vadd.f32 %v1826, 0.0036580483
    %v1828 = vmul.f32 %v1823, %v1827
    %v1829 = vadd.f32 %v1828, 0.05243302
    %v1830 = vmul.f32 %v1823, %v1829
    %v1831 = vadd.f32 %v1830, 0.18741608
    %v1832 = vmul.f32 %v1823, %v1831
    %v1833 = vadd.f32 %v1832, 1.1283791
    %v1834 = vmul.f32 %v1572, %v1833
    %v1835 = vmul.f32 %v1823, 3.8918573e-05
    %v1836 = vadd.f32 %v1835, 0.001143296
    %v1837 = vmul.f32 %v1823, %v1836
    %v1838 = vadd.f32 %v1837, 0.014752088
    %v1839 = vmul.f32 %v1823, %v1838
    %v1840 = vadd.f32 %v1839, 0.112945676
    %v1841 = vmul.f32 %v1823, %v1840
    %v1842 = vadd.f32 %v1841, 0.4994258
    %v1843 = vmul.f32 %v1823, %v1842
    %v1844 = vadd.f32 %v1843, 1.0
    %v1845 = vrcp.pop %v1844
    %v1846 = vmul.f32 %v1844, %v1845
    %v1847 = vsub.f32 1.0, %v1846
    %v1848 = vmul.f32 %v1845, %v1847
    %v1849 = vadd.f32 %v1845, %v1848
    %vm1850 = vweird.f32 %v1844
    %vm1851 = vweird.f32 %v1845
    %vm1852 = vmor %vm1850, %vm1851
    %v1853 = vsel %vm1852, %v1845, %v1849
    %v1854 = vand.u32 2147483647, %v1844
    %vm1855 = vcmp.eq.f32.partialorder %v1854, 8.507059e+37
    %v1856 = vand.u32 %v1844, 2147483648
    %v1857 = vor.u32 1.1754944e-38, %v1856
    %v1858 = vsel %vm1855, %v1857, %v1853
    %v1859 = vmul.f32 %v1834, %v1858
    %v1860 = vmin.f32 %v1859, 1.0
    %v1861 = vmax.f32 %v1860, -1.0
    %v1862 = vmul.f32 %v1573, %v1573
    %v1863 = vmin.f32 16.0, %v1862
    %v1864 = vmul.f32 %v1863, 2.1237322e-06
    %v1865 = vadd.f32 %v1864, 0.00028619796
    %v1866 = vmul.f32 %v1863, %v1865
    %v1867 = vadd.f32 %v1866, 0.0036580483
    %v1868 = vmul.f32 %v1863, %v1867
    %v1869 = vadd.f32 %v1868, 0.05243302
    %v1870 = vmul.f32 %v1863, %v1869
    %v1871 = vadd.f32 %v1870, 0.18741608
    %v1872 = vmul.f32 %v1863, %v1871
    %v1873 = vadd.f32 %v1872, 1.1283791
    %v1874 = vmul.f32 %v1573, %v1873
    %v1875 = vmul.f32 %v1863, 3.8918573e-05
    %v1876 = vadd.f32 %v1875, 0.001143296
    %v1877 = vmul.f32 %v1863, %v1876
    %v1878 = vadd.f32 %v1877, 0.014752088
    %v1879 = vmul.f32 %v1863, %v1878
    %v1880 = vadd.f32 %v1879, 0.112945676
    %v1881 = vmul.f32 %v1863, %v1880
    %v1882 = vadd.f32 %v1881, 0.4994258
    %v1883 = vmul.f32 %v1863, %v1882
    %v1884 = vadd.f32 %v1883, 1.0
    %v1885 = vrcp.pop %v1884
    %v1886 = vmul.f32 %v1884, %v1885
    %v1887 = vsub.f32 1.0, %v1886
    %v1888 = vmul.f32 %v1885, %v1887
    %v1889 = vadd.f32 %v1885, %v1888
    %vm1890 = vweird.f32 %v1884
    %vm1891 = vweird.f32 %v1885
    %vm1892 = vmor %vm1890, %vm1891
    %v1893 = vsel %vm1892, %v1885, %v1889
    %v1894 = vand.u32 2147483647, %v1884
    %vm1895 = vcmp.eq.f32.partialorder %v1894, 8.507059e+37
    %v1896 = vand.u32 %v1884, 2147483648
    %v1897 = vor.u32 1.1754944e-38, %v1896
    %v1898 = vsel %vm1895, %v1897, %v1893
    %v1899 = vmul.f32 %v1874, %v1898
    %v1900 = vmin.f32 %v1899, 1.0
    %v1901 = vmax.f32 %v1900, -1.0
    %v1902 = vmul.f32 %v1574, %v1574
    %v1903 = vmin.f32 16.0, %v1902
    %v1904 = vmul.f32 %v1903, 2.1237322e-06
    %v1905 = vadd.f32 %v1904, 0.00028619796
    %v1906 = vmul.f32 %v1903, %v1905
    %v1907 = vadd.f32 %v1906, 0.0036580483
    %v1908 = vmul.f32 %v1903, %v1907
    %v1909 = vadd.f32 %v1908, 0.05243302
    %v1910 = vmul.f32 %v1903, %v1909
    %v1911 = vadd.f32 %v1910, 0.18741608
    %v1912 = vmul.f32 %v1903, %v1911
    %v1913 = vadd.f32 %v1912, 1.1283791
    %v1914 = vmul.f32 %v1574, %v1913
    %v1915 = vmul.f32 %v1903, 3.8918573e-05
    %v1916 = vadd.f32 %v1915, 0.001143296
    %v1917 = vmul.f32 %v1903, %v1916
    %v1918 = vadd.f32 %v1917, 0.014752088
    %v1919 = vmul.f32 %v1903, %v1918
    %v1920 = vadd.f32 %v1919, 0.112945676
    %v1921 = vmul.f32 %v1903, %v1920
    %v1922 = vadd.f32 %v1921, 0.4994258
    %v1923 = vmul.f32 %v1903, %v1922
    %v1924 = vadd.f32 %v1923, 1.0
    %v1925 = vrcp.pop %v1924
    %v1926 = vmul.f32 %v1924, %v1925
    %v1927 = vsub.f32 1.0, %v1926
    %v1928 = vmul.f32 %v1925, %v1927
    %v1929 = vadd.f32 %v1925, %v1928
    %vm1930 = vweird.f32 %v1924
    %vm1931 = vweird.f32 %v1925
    %vm1932 = vmor %vm1930, %vm1931
    %v1933 = vsel %vm1932, %v1925, %v1929
    %v1934 = vand.u32 2147483647, %v1924
    %vm1935 = vcmp.eq.f32.partialorder %v1934, 8.507059e+37
    %v1936 = vand.u32 %v1924, 2147483648
    %v1937 = vor.u32 1.1754944e-38, %v1936
    %v1938 = vsel %vm1935, %v1937, %v1933
    %v1939 = vmul.f32 %v1914, %v1938
    %v1940 = vmin.f32 %v1939, 1.0
    %v1941 = vmax.f32 %v1940, -1.0
    %v1942 = vmul.f32 %v1575, %v1575
    %v1943 = vmin.f32 16.0, %v1942
    %v1944 = vmul.f32 %v1943, 2.1237322e-06
    %v1945 = vadd.f32 %v1944, 0.00028619796
    %v1946 = vmul.f32 %v1943, %v1945
    %v1947 = vadd.f32 %v1946, 0.0036580483
    %v1948 = vmul.f32 %v1943, %v1947
    %v1949 = vadd.f32 %v1948, 0.05243302
    %v1950 = vmul.f32 %v1943, %v1949
    %v1951 = vadd.f32 %v1950, 0.18741608
    %v1952 = vmul.f32 %v1943, %v1951
    %v1953 = vadd.f32 %v1952, 1.1283791
    %v1954 = vmul.f32 %v1575, %v1953
    %v1955 = vmul.f32 %v1943, 3.8918573e-05
    %v1956 = vadd.f32 %v1955, 0.001143296
    %v1957 = vmul.f32 %v1943, %v1956
    %v1958 = vadd.f32 %v1957, 0.014752088
    %v1959 = vmul.f32 %v1943, %v1958
    %v1960 = vadd.f32 %v1959, 0.112945676
    %v1961 = vmul.f32 %v1943, %v1960
    %v1962 = vadd.f32 %v1961, 0.4994258
    %v1963 = vmul.f32 %v1943, %v1962
    %v1964 = vadd.f32 %v1963, 1.0
    %v1965 = vrcp.pop %v1964
    %v1966 = vmul.f32 %v1964, %v1965
    %v1967 = vsub.f32 1.0, %v1966
    %v1968 = vmul.f32 %v1965, %v1967
    %v1969 = vadd.f32 %v1965, %v1968
    %vm1970 = vweird.f32 %v1964
    %vm1971 = vweird.f32 %v1965
    %vm1972 = vmor %vm1970, %vm1971
    %v1973 = vsel %vm1972, %v1965, %v1969
    %v1974 = vand.u32 2147483647, %v1964
    %vm1975 = vcmp.eq.f32.partialorder %v1974, 8.507059e+37
    %v1976 = vand.u32 %v1964, 2147483648
    %v1977 = vor.u32 1.1754944e-38, %v1976
    %v1978 = vsel %vm1975, %v1977, %v1973
    %v1979 = vmul.f32 %v1954, %v1978
    %v1980 = vmin.f32 %v1979, 1.0
    %v1981 = vmax.f32 %v1980, -1.0
    %v1982 = vmul.f32 %v1576, %v1576
    %v1983 = vmin.f32 16.0, %v1982
    %v1984 = vmul.f32 %v1983, 2.1237322e-06
    %v1985 = vadd.f32 %v1984, 0.00028619796
    %v1986 = vmul.f32 %v1983, %v1985
    %v1987 = vadd.f32 %v1986, 0.0036580483
    %v1988 = vmul.f32 %v1983, %v1987
    %v1989 = vadd.f32 %v1988, 0.05243302
    %v1990 = vmul.f32 %v1983, %v1989
    %v1991 = vadd.f32 %v1990, 0.18741608
    %v1992 = vmul.f32 %v1983, %v1991
    %v1993 = vadd.f32 %v1992, 1.1283791
    %v1994 = vmul.f32 %v1576, %v1993
    %v1995 = vmul.f32 %v1983, 3.8918573e-05
    %v1996 = vadd.f32 %v1995, 0.001143296
    %v1997 = vmul.f32 %v1983, %v1996
    %v1998 = vadd.f32 %v1997, 0.014752088
    %v1999 = vmul.f32 %v1983, %v1998
    %v2000 = vadd.f32 %v1999, 0.112945676
    %v2001 = vmul.f32 %v1983, %v2000
    %v2002 = vadd.f32 %v2001, 0.4994258
    %v2003 = vmul.f32 %v1983, %v2002
    %v2004 = vadd.f32 %v2003, 1.0
    %v2005 = vrcp.pop %v2004
    %v2006 = vmul.f32 %v2004, %v2005
    %v2007 = vsub.f32 1.0, %v2006
    %v2008 = vmul.f32 %v2005, %v2007
    %v2009 = vadd.f32 %v2005, %v2008
    %vm2010 = vweird.f32 %v2004
    %vm2011 = vweird.f32 %v2005
    %vm2012 = vmor %vm2010, %vm2011
    %v2013 = vsel %vm2012, %v2005, %v2009
    %v2014 = vand.u32 2147483647, %v2004
    %vm2015 = vcmp.eq.f32.partialorder %v2014, 8.507059e+37
    %v2016 = vand.u32 %v2004, 2147483648
    %v2017 = vor.u32 1.1754944e-38, %v2016
    %v2018 = vsel %vm2015, %v2017, %v2013
    %v2019 = vmul.f32 %v1994, %v2018
    %v2020 = vmin.f32 %v2019, 1.0
    %v2021 = vmax.f32 %v2020, -1.0
    %v2022 = vmul.f32 %v1577, %v1577
    %v2023 = vmin.f32 16.0, %v2022
    %v2024 = vmul.f32 %v2023, 2.1237322e-06
    %v2025 = vadd.f32 %v2024, 0.00028619796
    %v2026 = vmul.f32 %v2023, %v2025
    %v2027 = vadd.f32 %v2026, 0.0036580483
    %v2028 = vmul.f32 %v2023, %v2027
    %v2029 = vadd.f32 %v2028, 0.05243302
    %v2030 = vmul.f32 %v2023, %v2029
    %v2031 = vadd.f32 %v2030, 0.18741608
    %v2032 = vmul.f32 %v2023, %v2031
    %v2033 = vadd.f32 %v2032, 1.1283791
    %v2034 = vmul.f32 %v1577, %v2033
    %v2035 = vmul.f32 %v2023, 3.8918573e-05
    %v2036 = vadd.f32 %v2035, 0.001143296
    %v2037 = vmul.f32 %v2023, %v2036
    %v2038 = vadd.f32 %v2037, 0.014752088
    %v2039 = vmul.f32 %v2023, %v2038
    %v2040 = vadd.f32 %v2039, 0.112945676
    %v2041 = vmul.f32 %v2023, %v2040
    %v2042 = vadd.f32 %v2041, 0.4994258
    %v2043 = vmul.f32 %v2023, %v2042
    %v2044 = vadd.f32 %v2043, 1.0
    %v2045 = vrcp.pop %v2044
    %v2046 = vmul.f32 %v2044, %v2045
    %v2047 = vsub.f32 1.0, %v2046
    %v2048 = vmul.f32 %v2045, %v2047
    %v2049 = vadd.f32 %v2045, %v2048
    %vm2050 = vweird.f32 %v2044
    %vm2051 = vweird.f32 %v2045
    %vm2052 = vmor %vm2050, %vm2051
    %v2053 = vsel %vm2052, %v2045, %v2049
    %v2054 = vand.u32 2147483647, %v2044
    %vm2055 = vcmp.eq.f32.partialorder %v2054, 8.507059e+37
    %v2056 = vand.u32 %v2044, 2147483648
    %v2057 = vor.u32 1.1754944e-38, %v2056
    %v2058 = vsel %vm2055, %v2057, %v2053
    %v2059 = vmul.f32 %v2034, %v2058
    %v2060 = vmin.f32 %v2059, 1.0
    %v2061 = vmax.f32 %v2060, -1.0
    %v2062 = vmul.f32 %v1578, %v1578
    %v2063 = vmin.f32 16.0, %v2062
    %v2064 = vmul.f32 %v2063, 2.1237322e-06
    %v2065 = vadd.f32 %v2064, 0.00028619796
    %v2066 = vmul.f32 %v2063, %v2065
    %v2067 = vadd.f32 %v2066, 0.0036580483
    %v2068 = vmul.f32 %v2063, %v2067
    %v2069 = vadd.f32 %v2068, 0.05243302
    %v2070 = vmul.f32 %v2063, %v2069
    %v2071 = vadd.f32 %v2070, 0.18741608
    %v2072 = vmul.f32 %v2063, %v2071
    %v2073 = vadd.f32 %v2072, 1.1283791
    %v2074 = vmul.f32 %v1578, %v2073
    %v2075 = vmul.f32 %v2063, 3.8918573e-05
    %v2076 = vadd.f32 %v2075, 0.001143296
    %v2077 = vmul.f32 %v2063, %v2076
    %v2078 = vadd.f32 %v2077, 0.014752088
    %v2079 = vmul.f32 %v2063, %v2078
    %v2080 = vadd.f32 %v2079, 0.112945676
    %v2081 = vmul.f32 %v2063, %v2080
    %v2082 = vadd.f32 %v2081, 0.4994258
    %v2083 = vmul.f32 %v2063, %v2082
    %v2084 = vadd.f32 %v2083, 1.0
    %v2085 = vrcp.pop %v2084
    %v2086 = vmul.f32 %v2084, %v2085
    %v2087 = vsub.f32 1.0, %v2086
    %v2088 = vmul.f32 %v2085, %v2087
    %v2089 = vadd.f32 %v2085, %v2088
    %vm2090 = vweird.f32 %v2084
    %vm2091 = vweird.f32 %v2085
    %vm2092 = vmor %vm2090, %vm2091
    %v2093 = vsel %vm2092, %v2085, %v2089
    %v2094 = vand.u32 2147483647, %v2084
    %vm2095 = vcmp.eq.f32.partialorder %v2094, 8.507059e+37
    %v2096 = vand.u32 %v2084, 2147483648
    %v2097 = vor.u32 1.1754944e-38, %v2096
    %v2098 = vsel %vm2095, %v2097, %v2093
    %v2099 = vmul.f32 %v2074, %v2098
    %v2100 = vmin.f32 %v2099, 1.0
    %v2101 = vmax.f32 %v2100, -1.0
    %v2102 = vmul.f32 %v1579, %v1579
    %v2103 = vmin.f32 16.0, %v2102
    %v2104 = vmul.f32 %v2103, 2.1237322e-06
    %v2105 = vadd.f32 %v2104, 0.00028619796
    %v2106 = vmul.f32 %v2103, %v2105
    %v2107 = vadd.f32 %v2106, 0.0036580483
    %v2108 = vmul.f32 %v2103, %v2107
    %v2109 = vadd.f32 %v2108, 0.05243302
    %v2110 = vmul.f32 %v2103, %v2109
    %v2111 = vadd.f32 %v2110, 0.18741608
    %v2112 = vmul.f32 %v2103, %v2111
    %v2113 = vadd.f32 %v2112, 1.1283791
    %v2114 = vmul.f32 %v1579, %v2113
    %v2115 = vmul.f32 %v2103, 3.8918573e-05
    %v2116 = vadd.f32 %v2115, 0.001143296
    %v2117 = vmul.f32 %v2103, %v2116
    %v2118 = vadd.f32 %v2117, 0.014752088
    %v2119 = vmul.f32 %v2103, %v2118
    %v2120 = vadd.f32 %v2119, 0.112945676
    %v2121 = vmul.f32 %v2103, %v2120
    %v2122 = vadd.f32 %v2121, 0.4994258
    %v2123 = vmul.f32 %v2103, %v2122
    %v2124 = vadd.f32 %v2123, 1.0
    %v2125 = vrcp.pop %v2124
    %v2126 = vmul.f32 %v2124, %v2125
    %v2127 = vsub.f32 1.0, %v2126
    %v2128 = vmul.f32 %v2125, %v2127
    %v2129 = vadd.f32 %v2125, %v2128
    %vm2130 = vweird.f32 %v2124
    %vm2131 = vweird.f32 %v2125
    %vm2132 = vmor %vm2130, %vm2131
    %v2133 = vsel %vm2132, %v2125, %v2129
    %v2134 = vand.u32 2147483647, %v2124
    %vm2135 = vcmp.eq.f32.partialorder %v2134, 8.507059e+37
    %v2136 = vand.u32 %v2124, 2147483648
    %v2137 = vor.u32 1.1754944e-38, %v2136
    %v2138 = vsel %vm2135, %v2137, %v2133
    %v2139 = vmul.f32 %v2114, %v2138
    %v2140 = vmin.f32 %v2139, 1.0
    %v2141 = vmax.f32 %v2140, -1.0
    %v2142 = vmul.f32 %v1580, %v1580
    %v2143 = vmin.f32 16.0, %v2142
    %v2144 = vmul.f32 %v2143, 2.1237322e-06
    %v2145 = vadd.f32 %v2144, 0.00028619796
    %v2146 = vmul.f32 %v2143, %v2145
    %v2147 = vadd.f32 %v2146, 0.0036580483
    %v2148 = vmul.f32 %v2143, %v2147
    %v2149 = vadd.f32 %v2148, 0.05243302
    %v2150 = vmul.f32 %v2143, %v2149
    %v2151 = vadd.f32 %v2150, 0.18741608
    %v2152 = vmul.f32 %v2143, %v2151
    %v2153 = vadd.f32 %v2152, 1.1283791
    %v2154 = vmul.f32 %v1580, %v2153
    %v2155 = vmul.f32 %v2143, 3.8918573e-05
    %v2156 = vadd.f32 %v2155, 0.001143296
    %v2157 = vmul.f32 %v2143, %v2156
    %v2158 = vadd.f32 %v2157, 0.014752088
    %v2159 = vmul.f32 %v2143, %v2158
    %v2160 = vadd.f32 %v2159, 0.112945676
    %v2161 = vmul.f32 %v2143, %v2160
    %v2162 = vadd.f32 %v2161, 0.4994258
    %v2163 = vmul.f32 %v2143, %v2162
    %v2164 = vadd.f32 %v2163, 1.0
    %v2165 = vrcp.pop %v2164
    %v2166 = vmul.f32 %v2164, %v2165
    %v2167 = vsub.f32 1.0, %v2166
    %v2168 = vmul.f32 %v2165, %v2167
    %v2169 = vadd.f32 %v2165, %v2168
    %vm2170 = vweird.f32 %v2164
    %vm2171 = vweird.f32 %v2165
    %vm2172 = vmor %vm2170, %vm2171
    %v2173 = vsel %vm2172, %v2165, %v2169
    %v2174 = vand.u32 2147483647, %v2164
    %vm2175 = vcmp.eq.f32.partialorder %v2174, 8.507059e+37
    %v2176 = vand.u32 %v2164, 2147483648
    %v2177 = vor.u32 1.1754944e-38, %v2176
    %v2178 = vsel %vm2175, %v2177, %v2173
    %v2179 = vmul.f32 %v2154, %v2178
    %v2180 = vmin.f32 %v2179, 1.0
    %v2181 = vmax.f32 %v2180, -1.0
    %v2182 = vmul.f32 %v1581, %v1581
    %v2183 = vmin.f32 16.0, %v2182
    %v2184 = vmul.f32 %v2183, 2.1237322e-06
    %v2185 = vadd.f32 %v2184, 0.00028619796
    %v2186 = vmul.f32 %v2183, %v2185
    %v2187 = vadd.f32 %v2186, 0.0036580483
    %v2188 = vmul.f32 %v2183, %v2187
    %v2189 = vadd.f32 %v2188, 0.05243302
    %v2190 = vmul.f32 %v2183, %v2189
    %v2191 = vadd.f32 %v2190, 0.18741608
    %v2192 = vmul.f32 %v2183, %v2191
    %v2193 = vadd.f32 %v2192, 1.1283791
    %v2194 = vmul.f32 %v1581, %v2193
    %v2195 = vmul.f32 %v2183, 3.8918573e-05
    %v2196 = vadd.f32 %v2195, 0.001143296
    %v2197 = vmul.f32 %v2183, %v2196
    %v2198 = vadd.f32 %v2197, 0.014752088
    %v2199 = vmul.f32 %v2183, %v2198
    %v2200 = vadd.f32 %v2199, 0.112945676
    %v2201 = vmul.f32 %v2183, %v2200
    %v2202 = vadd.f32 %v2201, 0.4994258
    %v2203 = vmul.f32 %v2183, %v2202
    %v2204 = vadd.f32 %v2203, 1.0
    %v2205 = vrcp.pop %v2204
    %v2206 = vmul.f32 %v2204, %v2205
    %v2207 = vsub.f32 1.0, %v2206
    %v2208 = vmul.f32 %v2205, %v2207
    %v2209 = vadd.f32 %v2205, %v2208
    %vm2210 = vweird.f32 %v2204
    %vm2211 = vweird.f32 %v2205
    %vm2212 = vmor %vm2210, %vm2211
    %v2213 = vsel %vm2212, %v2205, %v2209
    %v2214 = vand.u32 2147483647, %v2204
    %vm2215 = vcmp.eq.f32.partialorder %v2214, 8.507059e+37
    %v2216 = vand.u32 %v2204, 2147483648
    %v2217 = vor.u32 1.1754944e-38, %v2216
    %v2218 = vsel %vm2215, %v2217, %v2213
    %v2219 = vmul.f32 %v2194, %v2218
    %v2220 = vmin.f32 %v2219, 1.0
    %v2221 = vmax.f32 %v2220, -1.0
    %v2222 = vadd.f32 %v1621, 1.0
    %v2223 = vadd.f32 %v1661, 1.0
    %v2224 = vadd.f32 %v1701, 1.0
    %v2225 = vadd.f32 %v1741, 1.0
    %v2226 = vadd.f32 %v1781, 1.0
    %v2227 = vadd.f32 %v1821, 1.0
    %v2228 = vadd.f32 %v1861, 1.0
    %v2229 = vadd.f32 %v1901, 1.0
    %v2230 = vadd.f32 %v1941, 1.0
    %v2231 = vadd.f32 %v1981, 1.0
    %v2232 = vadd.f32 %v2021, 1.0
    %v2233 = vadd.f32 %v2061, 1.0
    %v2234 = vadd.f32 %v2101, 1.0
    %v2235 = vadd.f32 %v2141, 1.0
    %v2236 = vadd.f32 %v2181, 1.0
    %v2237 = vadd.f32 %v2221, 1.0
    %v2238 = vmul.f32 %v1550, %v2222
    %v2239 = vmul.f32 %v1551, %v2223
    %v2240 = vmul.f32 %v1552, %v2224
    %v2241 = vmul.f32 %v1553, %v2225
    %v2242 = vmul.f32 %v1554, %v2226
    %v2243 = vmul.f32 %v1555, %v2227
    %v2244 = vmul.f32 %v1556, %v2228
    %v2245 = vmul.f32 %v1557, %v2229
    %v2246 = vmul.f32 %v1558, %v2230
    %v2247 = vmul.f32 %v1559, %v2231
    %v2248 = vmul.f32 %v1560, %v2232
    %v2249 = vmul.f32 %v1561, %v2233
    %v2250 = vmul.f32 %v1562, %v2234
    %v2251 = vmul.f32 %v1563, %v2235
    %v2252 = vmul.f32 %v1564, %v2236
    %v2253 = vmul.f32 %v1565, %v2237
    %v2254 = vpack.c.bf16 %v2242, %v2238
    %v2255 = vpack.c.bf16 %v2243, %v2239
    %v2256 = vpack.c.bf16 %v2244, %v2240
    %v2257 = vpack.c.bf16 %v2245, %v2241
    %v2258 = vpack.c.bf16 %v2250, %v2246
    %v2259 = vpack.c.bf16 %v2251, %v2247
    %v2260 = vpack.c.bf16 %v2252, %v2248
    %v2261 = vpack.c.bf16 %v2253, %v2249
    %v2262 = vld [vmem:[#allocation11] sm:$0xf]
    %v2263 = vld [vmem:[#allocation11 + $0x4] sm:$0xf]
    %v2264 = vld [vmem:[#allocation11 + $0x8] sm:$0xf]
    %v2265 = vld [vmem:[#allocation11 + $0xc] sm:$0xf]
    %v2266 = vld [vmem:[#allocation11 + $0x10] sm:$0xf]
    %v2267 = vld [vmem:[#allocation11 + $0x14] sm:$0xf]
    %v2268 = vld [vmem:[#allocation11 + $0x18] sm:$0xf]
    %v2269 = vld [vmem:[#allocation11 + $0x1c] sm:$0xf]
    %v2270 = vld [vmem:[#allocation11 + $0x20] sm:$0xf]
    %v2271 = vld [vmem:[#allocation11 + $0x24] sm:$0xf]
    %v2272 = vld [vmem:[#allocation11 + $0x28] sm:$0xf]
    %v2273 = vld [vmem:[#allocation11 + $0x2c] sm:$0xf]
    %v2274 = vld [vmem:[#allocation11 + $0x30] sm:$0xf]
    %v2275 = vld [vmem:[#allocation11 + $0x34] sm:$0xf]
    %v2276 = vld [vmem:[#allocation11 + $0x38] sm:$0xf]
    %v2277 = vld [vmem:[#allocation11 + $0x3c] sm:$0xf]
    %v2278 = vld [vmem:[#allocation11 + $0x40] sm:$0xf]
    %v2279 = vld [vmem:[#allocation11 + $0x44] sm:$0xf]
    %v2280 = vld [vmem:[#allocation11 + $0x48] sm:$0xf]
    %v2281 = vld [vmem:[#allocation11 + $0x4c] sm:$0xf]
    %v2282 = vld [vmem:[#allocation11 + $0x50] sm:$0xf]
    %v2283 = vld [vmem:[#allocation11 + $0x54] sm:$0xf]
    %v2284 = vld [vmem:[#allocation11 + $0x58] sm:$0xf]
    %v2285 = vld [vmem:[#allocation11 + $0x5c] sm:$0xf]
    %v2286 = vld [vmem:[#allocation11 + $0x60] sm:$0xf]
    %v2287 = vld [vmem:[#allocation11 + $0x64] sm:$0xf]
    %v2288 = vld [vmem:[#allocation11 + $0x68] sm:$0xf]
    %v2289 = vld [vmem:[#allocation11 + $0x6c] sm:$0xf]
    %v2290 = vld [vmem:[#allocation11 + $0x70] sm:$0xf]
    %v2291 = vld [vmem:[#allocation11 + $0x74] sm:$0xf]
    %v2292 = vld [vmem:[#allocation11 + $0x78] sm:$0xf]
    %v2293 = vld [vmem:[#allocation11 + $0x7c] sm:$0xf]
    %v2294 = vld [vmem:[#allocation11 + $0x80] sm:$0xf]
    %v2295 = vld [vmem:[#allocation11 + $0x84] sm:$0xf]
    %v2296 = vld [vmem:[#allocation11 + $0x88] sm:$0xf]
    %v2297 = vld [vmem:[#allocation11 + $0x8c] sm:$0xf]
    %v2298 = vld [vmem:[#allocation11 + $0x90] sm:$0xf]
    %v2299 = vld [vmem:[#allocation11 + $0x94] sm:$0xf]
    %v2300 = vld [vmem:[#allocation11 + $0x98] sm:$0xf]
    %v2301 = vld [vmem:[#allocation11 + $0x9c] sm:$0xf]
    %v2302 = vld [vmem:[#allocation11 + $0xa0] sm:$0xf]
    %v2303 = vld [vmem:[#allocation11 + $0xa4] sm:$0xf]
    %v2304 = vld [vmem:[#allocation11 + $0xa8] sm:$0xf]
    %v2305 = vld [vmem:[#allocation11 + $0xac] sm:$0xf]
    %v2306 = vld [vmem:[#allocation11 + $0xb0] sm:$0xf]
    %v2307 = vld [vmem:[#allocation11 + $0xb4] sm:$0xf]
    %v2308 = vld [vmem:[#allocation11 + $0xb8] sm:$0xf]
    %v2309 = vld [vmem:[#allocation11 + $0xbc] sm:$0xf]
    %v2310 = vld [vmem:[#allocation11 + $0xc0] sm:$0xf]
    %v2311 = vld [vmem:[#allocation11 + $0xc4] sm:$0xf]
    %v2312 = vld [vmem:[#allocation11 + $0xc8] sm:$0xf]
    %v2313 = vld [vmem:[#allocation11 + $0xcc] sm:$0xf]
    %v2314 = vld [vmem:[#allocation11 + $0xd0] sm:$0xf]
    %v2315 = vld [vmem:[#allocation11 + $0xd4] sm:$0xf]
    %v2316 = vld [vmem:[#allocation11 + $0xd8] sm:$0xf]
    %v2317 = vld [vmem:[#allocation11 + $0xdc] sm:$0xf]
    %v2318 = vld [vmem:[#allocation11 + $0xe0] sm:$0xf]
    %v2319 = vld [vmem:[#allocation11 + $0xe4] sm:$0xf]
    %v2320 = vld [vmem:[#allocation11 + $0xe8] sm:$0xf]
    %v2321 = vld [vmem:[#allocation11 + $0xec] sm:$0xf]
    %v2322 = vld [vmem:[#allocation11 + $0xf0] sm:$0xf]
    %v2323 = vld [vmem:[#allocation11 + $0xf4] sm:$0xf]
    %v2324 = vld [vmem:[#allocation11 + $0xf8] sm:$0xf]
    %v2325 = vld [vmem:[#allocation11 + $0xfc] sm:$0xf]
    %v2326 = vld [vmem:[%s10] sm:$0x1]
    %v2328 = vperm.slane %v2326, 0
    %v2394 = vunpack.c.l.b16 %v2262
    %v2395 = vunpack.c.l.b16 %v2263
    %v2396 = vunpack.c.l.b16 %v2264
    %v2397 = vunpack.c.l.b16 %v2265
    %v2398 = vunpack.c.l.b16 %v2266
    %v2399 = vunpack.c.l.b16 %v2267
    %v2400 = vunpack.c.l.b16 %v2268
    %v2401 = vunpack.c.l.b16 %v2269
    %v2402 = vunpack.c.l.b16 %v2270
    %v2403 = vunpack.c.l.b16 %v2271
    %v2404 = vunpack.c.l.b16 %v2272
    %v2405 = vunpack.c.l.b16 %v2273
    %v2406 = vunpack.c.l.b16 %v2274
    %v2407 = vunpack.c.l.b16 %v2275
    %v2408 = vunpack.c.l.b16 %v2276
    %v2409 = vunpack.c.l.b16 %v2277
    %v2410 = vunpack.c.l.b16 %v2278
    %v2411 = vunpack.c.l.b16 %v2279
    %v2412 = vunpack.c.l.b16 %v2280
    %v2413 = vunpack.c.l.b16 %v2281
    %v2414 = vunpack.c.l.b16 %v2282
    %v2415 = vunpack.c.l.b16 %v2283
    %v2416 = vunpack.c.l.b16 %v2284
    %v2417 = vunpack.c.l.b16 %v2285
    %v2418 = vunpack.c.l.b16 %v2286
    %v2419 = vunpack.c.l.b16 %v2287
    %v2420 = vunpack.c.l.b16 %v2288
    %v2421 = vunpack.c.l.b16 %v2289
    %v2422 = vunpack.c.l.b16 %v2290
    %v2423 = vunpack.c.l.b16 %v2291
    %v2424 = vunpack.c.l.b16 %v2292
    %v2425 = vunpack.c.l.b16 %v2293
    %v2426 = vunpack.c.l.b16 %v2294
    %v2427 = vunpack.c.l.b16 %v2295
    %v2428 = vunpack.c.l.b16 %v2296
    %v2429 = vunpack.c.l.b16 %v2297
    %v2430 = vunpack.c.l.b16 %v2298
    %v2431 = vunpack.c.l.b16 %v2299
    %v2432 = vunpack.c.l.b16 %v2300
    %v2433 = vunpack.c.l.b16 %v2301
    %v2434 = vunpack.c.l.b16 %v2302
    %v2435 = vunpack.c.l.b16 %v2303
    %v2436 = vunpack.c.l.b16 %v2304
    %v2437 = vunpack.c.l.b16 %v2305
    %v2438 = vunpack.c.l.b16 %v2306
    %v2439 = vunpack.c.l.b16 %v2307
    %v2440 = vunpack.c.l.b16 %v2308
    %v2441 = vunpack.c.l.b16 %v2309
    %v2442 = vunpack.c.l.b16 %v2310
    %v2443 = vunpack.c.l.b16 %v2311
    %v2444 = vunpack.c.l.b16 %v2312
    %v2445 = vunpack.c.l.b16 %v2313
    %v2446 = vunpack.c.l.b16 %v2314
    %v2447 = vunpack.c.l.b16 %v2315
    %v2448 = vunpack.c.l.b16 %v2316
    %v2449 = vunpack.c.l.b16 %v2317
    %v2450 = vunpack.c.l.b16 %v2318
    %v2451 = vunpack.c.l.b16 %v2319
    %v2452 = vunpack.c.l.b16 %v2320
    %v2453 = vunpack.c.l.b16 %v2321
    %v2454 = vunpack.c.l.b16 %v2322
    %v2455 = vunpack.c.l.b16 %v2323
    %v2456 = vunpack.c.l.b16 %v2324
    %v2457 = vunpack.c.l.b16 %v2325
    %v2458 = vpack.c.b16 %v2395, %v2394
    %v2459 = vpack.c.b16 %v2397, %v2396
    %v2460 = vpack.c.b16 %v2399, %v2398
    %v2461 = vpack.c.b16 %v2401, %v2400
    %v2462 = vpack.c.b16 %v2403, %v2402
    %v2463 = vpack.c.b16 %v2405, %v2404
    %v2464 = vpack.c.b16 %v2407, %v2406
    %v2465 = vpack.c.b16 %v2409, %v2408
    %v2466 = vpack.c.b16 %v2411, %v2410
    %v2467 = vpack.c.b16 %v2413, %v2412
    %v2468 = vpack.c.b16 %v2415, %v2414
    %v2469 = vpack.c.b16 %v2417, %v2416
    %v2470 = vpack.c.b16 %v2419, %v2418
    %v2471 = vpack.c.b16 %v2421, %v2420
    %v2472 = vpack.c.b16 %v2423, %v2422
    %v2473 = vpack.c.b16 %v2425, %v2424
    %v2474 = vpack.c.b16 %v2427, %v2426
    %v2475 = vpack.c.b16 %v2429, %v2428
    %v2476 = vpack.c.b16 %v2431, %v2430
    %v2477 = vpack.c.b16 %v2433, %v2432
    %v2478 = vpack.c.b16 %v2435, %v2434
    %v2479 = vpack.c.b16 %v2437, %v2436
    %v2480 = vpack.c.b16 %v2439, %v2438
    %v2481 = vpack.c.b16 %v2441, %v2440
    %v2482 = vpack.c.b16 %v2443, %v2442
    %v2483 = vpack.c.b16 %v2445, %v2444
    %v2484 = vpack.c.b16 %v2447, %v2446
    %v2485 = vpack.c.b16 %v2449, %v2448
    %v2486 = vpack.c.b16 %v2451, %v2450
    %v2487 = vpack.c.b16 %v2453, %v2452
    %v2488 = vpack.c.b16 %v2455, %v2454
    %v2489 = vpack.c.b16 %v2457, %v2456
    %2522 = vmatpush.bf16.msra.mxu0 %v2465
    %2523 = vmatpush.bf16.msra.mxu0 %v2464
    %2524 = vmatpush.bf16.msra.mxu0 %v2463
    %2525 = vmatpush.bf16.msra.mxu0 %v2462
    %2526 = vmatpush.bf16.msra.mxu0 %v2461
    %2527 = vmatpush.bf16.msra.mxu0 %v2460
    %2528 = vmatpush.bf16.msra.mxu0 %v2459
    %2529 = vmatpush.bf16.msra.mxu0 %v2458
    %2530 = vmatmul.bf16.gmra.mxu0 %v2254
    %v2531 = vpop.f32.mrf.mxu0
    %v2532 = vadd.f32 %v2328, %v2531
    %v2533 = vpop.f32.mrf.mxu0
    %v2534 = vadd.f32 %v2328, %v2533
    %2535 = vmatmul.bf16.gmra.mxu0 %v2258
    %v2536 = vpop.f32.mrf.mxu0
    %v2537 = vadd.f32 %v2328, %v2536
    %v2538 = vpop.f32.mrf.mxu0
    %v2539 = vadd.f32 %v2328, %v2538
    %2540 = vdwg.mxu0
    %2541 = vmatpush.bf16.msra.mxu0 %v2473
    %2542 = vmatpush.bf16.msra.mxu0 %v2472
    %2543 = vmatpush.bf16.msra.mxu0 %v2471
    %2544 = vmatpush.bf16.msra.mxu0 %v2470
    %2545 = vmatpush.bf16.msra.mxu0 %v2469
    %2546 = vmatpush.bf16.msra.mxu0 %v2468
    %2547 = vmatpush.bf16.msra.mxu0 %v2467
    %2548 = vmatpush.bf16.msra.mxu0 %v2466
    %2549 = vmatmul.bf16.gmra.mxu0 %v2255
    %v2550 = vpop.f32.mrf.mxu0
    %v2551 = vadd.f32 %v2532, %v2550
    %v2552 = vpop.f32.mrf.mxu0
    %v2553 = vadd.f32 %v2534, %v2552
    %2554 = vmatmul.bf16.gmra.mxu0 %v2259
    %v2555 = vpop.f32.mrf.mxu0
    %v2556 = vadd.f32 %v2537, %v2555
    %v2557 = vpop.f32.mrf.mxu0
    %v2558 = vadd.f32 %v2539, %v2557
    %2559 = vdwg.mxu0
    %2560 = vmatpush.bf16.msra.mxu0 %v2481
    %2561 = vmatpush.bf16.msra.mxu0 %v2480
    %2562 = vmatpush.bf16.msra.mxu0 %v2479
    %2563 = vmatpush.bf16.msra.mxu0 %v2478
    %2564 = vmatpush.bf16.msra.mxu0 %v2477
    %2565 = vmatpush.bf16.msra.mxu0 %v2476
    %2566 = vmatpush.bf16.msra.mxu0 %v2475
    %2567 = vmatpush.bf16.msra.mxu0 %v2474
    %2568 = vmatmul.bf16.gmra.mxu0 %v2256
    %v2569 = vpop.f32.mrf.mxu0
    %v2570 = vadd.f32 %v2551, %v2569
    %v2571 = vpop.f32.mrf.mxu0
    %v2572 = vadd.f32 %v2553, %v2571
    %2573 = vmatmul.bf16.gmra.mxu0 %v2260
    %v2574 = vpop.f32.mrf.mxu0
    %v2575 = vadd.f32 %v2556, %v2574
    %v2576 = vpop.f32.mrf.mxu0
    %v2577 = vadd.f32 %v2558, %v2576
    %2578 = vdwg.mxu0
    %2579 = vmatpush.bf16.msra.mxu0 %v2489
    %2580 = vmatpush.bf16.msra.mxu0 %v2488
    %2581 = vmatpush.bf16.msra.mxu0 %v2487
    %2582 = vmatpush.bf16.msra.mxu0 %v2486
    %2583 = vmatpush.bf16.msra.mxu0 %v2485
    %2584 = vmatpush.bf16.msra.mxu0 %v2484
    %2585 = vmatpush.bf16.msra.mxu0 %v2483
    %2586 = vmatpush.bf16.msra.mxu0 %v2482
    %2587 = vmatmul.bf16.gmra.mxu0 %v2257
    %v2588 = vpop.f32.mrf.mxu0
    %v2589 = vadd.f32 %v2570, %v2588
    %v2590 = vpop.f32.mrf.mxu0
    %v2591 = vadd.f32 %v2572, %v2590
    %2592 = vmatmul.bf16.gmra.mxu0 %v2261
    %v2593 = vpop.f32.mrf.mxu0
    %v2594 = vadd.f32 %v2575, %v2593
    %v2595 = vpop.f32.mrf.mxu0
    %v2596 = vadd.f32 %v2577, %v2595
    %2597 = vdwg.mxu0
    %v2598 = vadd.f32 %v1266, %v2589
    %v2599 = vadd.f32 %v1267, %v2591
    %v2600 = vadd.f32 %v1268, %v2594
    %v2601 = vadd.f32 %v1269, %v2596
    %2602 = vadd.xlane.f32.xlu0 %v2598
    %v2603 = vpop.xlane.xlu0 %2602
    %2604 = vadd.xlane.f32.xlu0 %v2599
    %v2605 = vpop.xlane.xlu0 %2604
    %2606 = vadd.xlane.f32.xlu0 %v2600
    %v2607 = vpop.xlane.xlu0 %2606
    %2608 = vadd.xlane.f32.xlu0 %v2601
    %v2609 = vpop.xlane.xlu0 %2608
    %v2610 = vmul.f32 %v2603, %v1183
    %v2611 = vmul.f32 %v2605, %v1183
    %v2612 = vmul.f32 %v2607, %v1183
    %v2613 = vmul.f32 %v2609, %v1183
    %v2614 = vsub.f32 %v2598, %v2610
    %v2615 = vsub.f32 %v2599, %v2611
    %v2616 = vsub.f32 %v2600, %v2612
    %v2617 = vsub.f32 %v2601, %v2613
    %v2618 = vmul.f32 %v2614, %v2614
    %v2619 = vmul.f32 %v2615, %v2615
    %v2620 = vmul.f32 %v2616, %v2616
    %v2621 = vmul.f32 %v2617, %v2617
    %2622 = vadd.xlane.f32.xlu0 %v2618
    %v2623 = vpop.xlane.xlu0 %2622
    %2624 = vadd.xlane.f32.xlu0 %v2619
    %v2625 = vpop.xlane.xlu0 %2624
    %2626 = vadd.xlane.f32.xlu0 %v2620
    %v2627 = vpop.xlane.xlu0 %2626
    %2628 = vadd.xlane.f32.xlu0 %v2621
    %v2629 = vpop.xlane.xlu0 %2628
    %v2630 = vmul.f32 %v2623, %v1183
    %v2631 = vmul.f32 %v2625, %v1183
    %v2632 = vmul.f32 %v2627, %v1183
    %v2633 = vmul.f32 %v2629, %v1183
    %v2634 = vadd.f32 %v2630, 1e-05
    %v2635 = vadd.f32 %v2631, 1e-05
    %v2636 = vadd.f32 %v2632, 1e-05
    %v2637 = vadd.f32 %v2633, 1e-05
    %v2638 = vrsqrt.pop %v2634
    %v2639 = vmul.f32 %v2638, %v2634
    %v2640 = vmul.f32 %v2639, %v2638
    %v2641 = vmul.f32 0.5, %v2640
    %v2642 = vsub.f32 1.5, %v2641
    %v2643 = vmul.f32 %v2638, %v2642
    %vm2644 = vweird.f32 %v2634
    %vm2645 = vweird.f32 %v2638
    %vm2646 = vmor %vm2644, %vm2645
    %v2647 = vsel %vm2646, %v2638, %v2643
    %v2648 = vrsqrt.pop %v2635
    %v2649 = vmul.f32 %v2648, %v2635
    %v2650 = vmul.f32 %v2649, %v2648
    %v2651 = vmul.f32 0.5, %v2650
    %v2652 = vsub.f32 1.5, %v2651
    %v2653 = vmul.f32 %v2648, %v2652
    %vm2654 = vweird.f32 %v2635
    %vm2655 = vweird.f32 %v2648
    %vm2656 = vmor %vm2654, %vm2655
    %v2657 = vsel %vm2656, %v2648, %v2653
    %v2658 = vrsqrt.pop %v2636
    %v2659 = vmul.f32 %v2658, %v2636
    %v2660 = vmul.f32 %v2659, %v2658
    %v2661 = vmul.f32 0.5, %v2660
    %v2662 = vsub.f32 1.5, %v2661
    %v2663 = vmul.f32 %v2658, %v2662
    %vm2664 = vweird.f32 %v2636
    %vm2665 = vweird.f32 %v2658
    %vm2666 = vmor %vm2664, %vm2665
    %v2667 = vsel %vm2666, %v2658, %v2663
    %v2668 = vrsqrt.pop %v2637
    %v2669 = vmul.f32 %v2668, %v2637
    %v2670 = vmul.f32 %v2669, %v2668
    %v2671 = vmul.f32 0.5, %v2670
    %v2672 = vsub.f32 1.5, %v2671
    %v2673 = vmul.f32 %v2668, %v2672
    %vm2674 = vweird.f32 %v2637
    %vm2675 = vweird.f32 %v2668
    %vm2676 = vmor %vm2674, %vm2675
    %v2677 = vsel %vm2676, %v2668, %v2673
    %v2678 = vmul.f32 %v2614, %v2647
    %v2679 = vmul.f32 %v2615, %v2657
    %v2680 = vmul.f32 %v2616, %v2667
    %v2681 = vmul.f32 %v2617, %v2677
    %v2682 = vmul.f32 %v2678, %v1257
    %v2683 = vmul.f32 %v2679, %v1257
    %v2684 = vmul.f32 %v2680, %v1257
    %v2685 = vmul.f32 %v2681, %v1257
    %v2686 = vadd.f32 %v2682, %v1264
    %v2687 = vadd.f32 %v2683, %v1264
    %v2688 = vadd.f32 %v2684, %v1264
    %v2689 = vadd.f32 %v2685, %v1264
    %2690 = vst [vmem:[#allocation13] sm:$0xff] %v2686
    %2691 = vst [vmem:[#allocation13 + $0x8] sm:$0xff] %v2687
    %2692 = vst [vmem:[#allocation13 + $0x10] sm:$0xff] %v2688
    %2693 = vst [vmem:[#allocation13 + $0x18] sm:$0xff] %v2689
    // Predicated region
    $region70: #{tpu_custom_call.1} parent=1 // pred_check
      _
    $region71: #{tpu_custom_call.1} parent=1 // pred_check_branch
      %2695 = sbr.rel (0) target = $region73
    $region72: #{tpu_custom_call.1} parent=1 // pred_region
      %2697 = vsyncadd [#allocation4], 0
      %s2698 = sshll.u32 [#allocation13], 4
      %s2699 = int_to_ptr.vmem [resolvable:$true] %s2698
      %s2700 = sshll.u32 %s11, 4
      %s2701 = int_to_ptr.hbm [resolvable:$true] %s2700
      %2706 = dma.vmem_to_hbm [thread:$0]  %s2699, 512, %s2701, [#allocation4], 128, 128, 8
    $region73: #{tpu_custom_call.1} parent=1 // pred_fallthru
      _
    // Predicated region
    $region74: #{tpu_custom_call.1} parent=1 // pred_check
      _
    $region75: #{tpu_custom_call.1} parent=1 // pred_check_branch
      %2708 = sbr.rel (0) target = $region77
    $region76: #{tpu_custom_call.1} parent=1 // pred_region
      %2710 = dma.done [#allocation4], 512
    $region77: #{tpu_custom_call.1} parent=1 // pred_fallthru
      _
    %2711 = vsyncpa [#allocation3], 1
    %2712 = vsyncpa [#allocation6], 1
    %2713 = vsyncpa [#allocation9], 1
    %2714 = vsyncpa [#allocation12], 1
    %2715 = vsyncpa [#allocation4], 1

</llo_original>
